<compile_context>
chip_gen: v5e
topology: v5e:2x2
jax: 0.10.0
libtpu: 0.0.40
codegen_flags: <defaults>
</compile_context>

<pallas_src>
import numpy as np
import jax
import jax.numpy as jnp
from jax.experimental import pallas as pl
from jax.experimental.pallas import tpu as pltpu


# ----------------------------------------------------------------------------
# Fused kernel: [conv(1->3,3x3,VALID) + stride-3 window selection] as one MXU
# matmul, then max over the 9 window offsets, +bias, ReLU, FC(192->10),
# log_softmax.
# ----------------------------------------------------------------------------
def convnet_fused_kernel(x_ref, wbig_ref, cbias_ref, w_ref, b_ref, o_ref):
    # x_ref    : (nb, 784)    f32  flattened 28x28 images (C_in == 1 squeezed)
    # wbig_ref : (784, 1728)  f32  folded conv taps: column
    #            (pi*3+pj)*192 + co*64 + i*8 + j maps input pixel (a, b) onto
    #            conv output (co, 3i+pi, 3j+pj).
    # cbias_ref: (1, 192)     f32  conv bias in torch .view feature order
    # w_ref    : (192, 10)    f32  fc weight, transposed
    # b_ref    : (1, 10)      f32  fc bias
    # o_ref    : (nb, 10)     f32  log-probabilities (output block)

    # One dense MXU matmul produces every conv activation the 3x3/stride-3
    # max-pool can ever look at.
    y = jnp.dot(x_ref[...], wbig_ref[...], preferred_element_type=jnp.float32)

    # max_pool2d(3, stride 3): elementwise max over the nine (pi, pj) slabs.
    m = y[:, 0:192]
    for s in range(1, 9):
        m = jnp.maximum(m, y[:, s * 192:(s + 1) * 192])

    # Bias after pooling (commutes with max), then ReLU -> (nb, 192) features
    # already in the torch .view(-1, 192) order.
    h = jnp.maximum(m + cbias_ref[...], 0.0)

    # Linear(192 -> 10) + log_softmax(dim=1), all in VMEM.
    logits = jnp.dot(h, w_ref[...], preferred_element_type=jnp.float32) + b_ref[...]
    z = logits - jnp.max(logits, axis=-1, keepdims=True)
    o_ref[...] = z - jnp.log(jnp.sum(jnp.exp(z), axis=-1, keepdims=True))


# ----------------------------------------------------------------------------
# Wrapper
# ----------------------------------------------------------------------------
def _round_up(a, m):
    return (a + m - 1) // m * m


@jax.jit
def convnet_forward(x, conv_w, conv_b, fc_w, fc_b):
    """x: (N, 1, 28, 28) f32 NCHW.  Returns (N, 10) log-probabilities."""
    n = x.shape[0]

    # Batch block: multiple of 8 sublanes, capped at 128, and sized so there
    # are always >= 2 grid steps (lets the "parallel" axis use both TCs on
    # v7x; also keeps the pipeline's double buffering active).
    nb = min(128, max(8, _round_up((n + 1) // 2, 8)))
    n_pad = max(_round_up(n, nb), 2 * nb)

    x2d = x.reshape(n, 28 * 28).astype(jnp.float32)       # lane-dense input
    if n_pad != n:
        x2d = jnp.pad(x2d, ((0, n_pad - n), (0, 0)))

    # Fold conv weights + stride-3 pooling-window selection into one
    # (784, 1728) matrix:
    #   wbig[a*28+b, (pi*3+pj)*192 + co*64 + i*8 + j]
    #       = conv_w[co, 0, a-(3i+pi), b-(3j+pj)]   (0 where taps out of range)
    # Built from the separable indicator R[a, p, i, d] = [a == 3i + p + d].
    a_ids = jnp.arange(28)[:, None, None, None]
    p_ids = jnp.arange(3)[None, :, None, None]
    i_ids = jnp.arange(8)[None, None, :, None]
    d_ids = jnp.arange(3)[None, None, None, :]
    R = (a_ids == 3 * i_ids + p_ids + d_ids).astype(jnp.float32)   # (28,3,8,3)
    cw = conv_w.reshape(3, 3, 3).astype(jnp.float32)               # (co,di,dj)
    wbig = jnp.einsum('apid,bqje,ode->abpqoij', R, R, cw).reshape(784, 1728)

    cbias = jnp.repeat(conv_b.astype(jnp.float32), 64).reshape(1, 192)
    wt = fc_w.T.astype(jnp.float32)                                # (192, 10)
    bt = fc_b.reshape(1, 10).astype(jnp.float32)                   # (1, 10)

    grid = (n_pad // nb,)
    flops = n_pad * (2 * 784 * 1728 + 2 * 192 * 10)
    bytes_accessed = (n_pad * (784 + 10) * 4
                      + (784 * 1728 + 192 + 192 * 10 + 10) * 4)

    out = pl.pallas_call(
        convnet_fused_kernel,
        out_shape=jax.ShapeDtypeStruct((n_pad, 10), jnp.float32),
        grid=grid,
        in_specs=[
            pl.BlockSpec((nb, 784), lambda i: (i, 0)),       # x block
            pl.BlockSpec((784, 1728), lambda i: (0, 0)),     # folded conv wts
            pl.BlockSpec((1, 192), lambda i: (0, 0)),        # conv bias
            pl.BlockSpec((192, 10), lambda i: (0, 0)),       # fc W^T
            pl.BlockSpec((1, 10), lambda i: (0, 0)),         # fc bias
        ],
        out_specs=pl.BlockSpec((nb, 10), lambda i: (i, 0)),
        compiler_params=pltpu.CompilerParams(
            dimension_semantics=("parallel",),
            vmem_limit_bytes=32 * 1024 * 1024),
        cost_estimate=pl.CostEstimate(
            flops=flops, transcendentals=n_pad * 11,
            bytes_accessed=bytes_accessed),
    )(x2d, wbig, cbias, wt, bt)
    return out[:n]


# Pure-JAX reference for correctness checking.
def reference_forward(x, conv_w, conv_b, fc_w, fc_b):
    conv = jax.lax.conv_general_dilated(
        x, conv_w, window_strides=(1, 1), padding='VALID',
        dimension_numbers=('NCHW', 'OIHW', 'NCHW'))
    conv = conv + conv_b.reshape(1, 3, 1, 1)
    pooled = jax.lax.reduce_window(conv, -jnp.inf, jax.lax.max,
                                   (1, 1, 3, 3), (1, 1, 3, 3), 'VALID')
    h = jnp.maximum(pooled, 0.0).reshape(x.shape[0], 192)
    logits = h @ fc_w.T + fc_b
    return jax.nn.log_softmax(logits, axis=1)


if __name__ == "__main__":
    key = jax.random.PRNGKey(0)
    k1, k2, k3, k4, k5 = jax.random.split(key, 5)

    # Deterministic parameter init mirroring PyTorch's default U(-1/sqrt(fan), .)
    kc = 1.0 / np.sqrt(1 * 3 * 3)
    kf = 1.0 / np.sqrt(192.0)
    conv_w = jax.random.uniform(k1, (3, 1, 3, 3), jnp.float32, -kc, kc)
    conv_b = jax.random.uniform(k2, (3,), jnp.float32, -kc, kc)
    fc_w = jax.random.uniform(k3, (10, 192), jnp.float32, -kf, kf)
    fc_b = jax.random.uniform(k4, (10,), jnp.float32, -kf, kf)

    # MNIST-like input: batch=2, 1 channel, 28x28 (so that 3*8*8 == 192).
    x = jax.random.normal(k5, (2, 1, 28, 28), jnp.float32)

    out = convnet_forward(x, conv_w, conv_b, fc_w, fc_b)
    out = jax.block_until_ready(out)

    ref = reference_forward(x, conv_w, conv_b, fc_w, fc_b)
    assert out.shape == (2, 10), out.shape
    np.testing.assert_allclose(np.asarray(out), np.asarray(ref),
                               rtol=1e-4, atol=1e-4)
    print("KERNEL_OK")
</pallas_src>

<mosaic_0001>
module attributes {stable_mosaic.version = 11 : i64} {
  func.func @convnet_fused_kernel(%arg0: i32, %arg1: memref<8x784xf32, #tpu.memory_space<vmem>>, %arg2: memref<784x1728xf32, #tpu.memory_space<vmem>>, %arg3: memref<1x192xf32, #tpu.memory_space<vmem>>, %arg4: memref<192x10xf32, #tpu.memory_space<vmem>>, %arg5: memref<1x10xf32, #tpu.memory_space<vmem>>, %arg6: memref<8x10xf32, #tpu.memory_space<vmem>>) attributes {dimension_semantics = [#tpu.dimension_semantics<parallel>], iteration_bounds = array<i64: 2>, scalar_prefetch = 0 : i64, scratch_operands = 0 : i64, tpu.core_type = #tpu.core_type<tc>, window_params = [{transform_indices = @transform_0, window_bounds = array<i64: 8, 784>}, {pipeline_mode = #tpu.pipeline_mode<synchronous>, transform_indices = @transform_1, window_bounds = array<i64: 784, 1728>}, {pipeline_mode = #tpu.pipeline_mode<synchronous>, transform_indices = @transform_2, window_bounds = array<i64: 1, 192>}, {pipeline_mode = #tpu.pipeline_mode<synchronous>, transform_indices = @transform_3, window_bounds = array<i64: 192, 10>}, {pipeline_mode = #tpu.pipeline_mode<synchronous>, transform_indices = @transform_4, window_bounds = array<i64: 1, 10>}, {transform_indices = @transform_5, window_bounds = array<i64: 8, 10>}]} {
    %c0 = arith.constant 0 : index
    %c0_0 = arith.constant 0 : index
    %0 = vector.load %arg1[%c0, %c0_0] : memref<8x784xf32, #tpu.memory_space<vmem>>, vector<8x784xf32>
    %c0_1 = arith.constant 0 : index
    %c0_2 = arith.constant 0 : index
    %1 = vector.load %arg2[%c0_1, %c0_2] : memref<784x1728xf32, #tpu.memory_space<vmem>>, vector<784x1728xf32>
    %cst = arith.constant dense<0.000000e+00> : vector<8x1728xf32>
    %2 = tpu.matmul %0, %1, %cst {dimension_numbers = #tpu.dot_dimension_numbers<[1], [0], [0], [1], [0, 0, 1, 1], [], []>} : vector<8x784xf32>, vector<784x1728xf32>, vector<8x1728xf32> -> vector<8x1728xf32>
    %3 = vector.extract_strided_slice %2 {offsets = [0, 0], sizes = [8, 192], strides = [1, 1]} : vector<8x1728xf32> to vector<8x192xf32>
    %4 = vector.extract_strided_slice %2 {offsets = [0, 192], sizes = [8, 192], strides = [1, 1]} : vector<8x1728xf32> to vector<8x192xf32>
    %5 = arith.maximumf %3, %4 : vector<8x192xf32>
    %6 = vector.extract_strided_slice %2 {offsets = [0, 384], sizes = [8, 192], strides = [1, 1]} : vector<8x1728xf32> to vector<8x192xf32>
    %7 = arith.maximumf %5, %6 : vector<8x192xf32>
    %8 = vector.extract_strided_slice %2 {offsets = [0, 576], sizes = [8, 192], strides = [1, 1]} : vector<8x1728xf32> to vector<8x192xf32>
    %9 = arith.maximumf %7, %8 : vector<8x192xf32>
    %10 = vector.extract_strided_slice %2 {offsets = [0, 768], sizes = [8, 192], strides = [1, 1]} : vector<8x1728xf32> to vector<8x192xf32>
    %11 = arith.maximumf %9, %10 : vector<8x192xf32>
    %12 = vector.extract_strided_slice %2 {offsets = [0, 960], sizes = [8, 192], strides = [1, 1]} : vector<8x1728xf32> to vector<8x192xf32>
    %13 = arith.maximumf %11, %12 : vector<8x192xf32>
    %14 = vector.extract_strided_slice %2 {offsets = [0, 1152], sizes = [8, 192], strides = [1, 1]} : vector<8x1728xf32> to vector<8x192xf32>
    %15 = arith.maximumf %13, %14 : vector<8x192xf32>
    %16 = vector.extract_strided_slice %2 {offsets = [0, 1344], sizes = [8, 192], strides = [1, 1]} : vector<8x1728xf32> to vector<8x192xf32>
    %17 = arith.maximumf %15, %16 : vector<8x192xf32>
    %18 = vector.extract_strided_slice %2 {offsets = [0, 1536], sizes = [8, 192], strides = [1, 1]} : vector<8x1728xf32> to vector<8x192xf32>
    %19 = arith.maximumf %17, %18 : vector<8x192xf32>
    %c0_3 = arith.constant 0 : index
    %c0_4 = arith.constant 0 : index
    %20 = vector.load %arg3[%c0_3, %c0_4] : memref<1x192xf32, #tpu.memory_space<vmem>>, vector<1x192xf32>
    %21 = vector.broadcast %20 : vector<1x192xf32> to vector<8x192xf32>
    %22 = arith.addf %19, %21 : vector<8x192xf32>
    %cst_5 = arith.constant 0.000000e+00 : f32
    %23 = vector.broadcast %cst_5 : f32 to vector<8x192xf32>
    %24 = arith.maximumf %22, %23 : vector<8x192xf32>
    %c0_6 = arith.constant 0 : index
    %c0_7 = arith.constant 0 : index
    %25 = vector.load %arg4[%c0_6, %c0_7] : memref<192x10xf32, #tpu.memory_space<vmem>>, vector<192x10xf32>
    %cst_8 = arith.constant dense<0.000000e+00> : vector<8x10xf32>
    %26 = tpu.matmul %24, %25, %cst_8 {dimension_numbers = #tpu.dot_dimension_numbers<[1], [0], [0], [1], [0, 0, 1, 1], [], []>} : vector<8x192xf32>, vector<192x10xf32>, vector<8x10xf32> -> vector<8x10xf32>
    %c0_9 = arith.constant 0 : index
    %c0_10 = arith.constant 0 : index
    %27 = vector.load %arg5[%c0_9, %c0_10] : memref<1x10xf32, #tpu.memory_space<vmem>>, vector<1x10xf32>
    %28 = vector.broadcast %27 : vector<1x10xf32> to vector<8x10xf32>
    %29 = arith.addf %26, %28 : vector<8x10xf32>
    %cst_11 = arith.constant dense<0xFF800000> : vector<8xf32>
    %30 = vector.multi_reduction <maximumf>, %29, %cst_11 [1] : vector<8x10xf32> to vector<8xf32>
    %31 = vector.shape_cast %30 : vector<8xf32> to vector<8x1xf32>
    %32 = vector.broadcast %31 : vector<8x1xf32> to vector<8x10xf32>
    %33 = arith.subf %29, %32 : vector<8x10xf32>
    %34 = math.exp %33 : vector<8x10xf32>
    %cst_12 = arith.constant dense<0.000000e+00> : vector<8xf32>
    %35 = vector.multi_reduction <add>, %34, %cst_12 [1] : vector<8x10xf32> to vector<8xf32>
    %36 = vector.shape_cast %35 : vector<8xf32> to vector<8x1xf32>
    %37 = math.log %36 : vector<8x1xf32>
    %38 = vector.broadcast %37 : vector<8x1xf32> to vector<8x10xf32>
    %39 = arith.subf %33, %38 : vector<8x10xf32>
    %c0_13 = arith.constant 0 : index
    %c0_14 = arith.constant 0 : index
    %40 = vector.load %arg6[%c0_13, %c0_14] : memref<8x10xf32, #tpu.memory_space<vmem>>, vector<8x10xf32>
    tpu.vector_store %arg6[%c0_13, %c0_14], %39 {strides = array<i32>} : memref<8x10xf32, #tpu.memory_space<vmem>>, vector<8x10xf32>,
    return
  }
  func.func @transform_0(%arg0: i32) -> (i32, i32) {
    %c0_i32 = arith.constant 0 : i32
    %c0_i32_0 = arith.constant 0 : i32
    return %arg0, %c0_i32 : i32, i32
  }
  func.func @transform_1(%arg0: i32) -> (i32, i32) {
    %c0_i32 = arith.constant 0 : i32
    %c0_i32_0 = arith.constant 0 : i32
    %c0_i32_1 = arith.constant 0 : i32
    return %c0_i32, %c0_i32_0 : i32, i32
  }
  func.func @transform_2(%arg0: i32) -> (i32, i32) {
    %c0_i32 = arith.constant 0 : i32
    %c0_i32_0 = arith.constant 0 : i32
    %c0_i32_1 = arith.constant 0 : i32
    return %c0_i32, %c0_i32_0 : i32, i32
  }
  func.func @transform_3(%arg0: i32) -> (i32, i32) {
    %c0_i32 = arith.constant 0 : i32
    %c0_i32_0 = arith.constant 0 : i32
    %c0_i32_1 = arith.constant 0 : i32
    return %c0_i32, %c0_i32_0 : i32, i32
  }
  func.func @transform_4(%arg0: i32) -> (i32, i32) {
    %c0_i32 = arith.constant 0 : i32
    %c0_i32_0 = arith.constant 0 : i32
    %c0_i32_1 = arith.constant 0 : i32
    return %c0_i32, %c0_i32_0 : i32, i32
  }
  func.func @transform_5(%arg0: i32) -> (i32, i32) {
    %c0_i32 = arith.constant 0 : i32
    %c0_i32_0 = arith.constant 0 : i32
    return %arg0, %c0_i32 : i32, i32
  }
}

</mosaic_0001>

<llo_original>
// kernel: convnet_forward.1
$region0: #{convnet_forward.1}
  #allocation0 [shape = 'u32[]', space=smem, size = 0x4, offset = 0x4, fixed_abs, tag = 'smem constant byte address 0x4 - core index']
  #allocation1 [shape = 'u32[72,128]{1,0:T(1,128)}', space=vmem, size = 0x9000, scoped, tag = 'internal scratch']
  %s0 = inlined_call_operand.vmem [shape: f32[16,784], index: 0, kind: input, shape index: {}]
  %s1 = inlined_call_operand.vmem [shape: f32[784,1728], index: 1, kind: input, shape index: {}]
  %s2 = inlined_call_operand.vmem [shape: f32[1,192], index: 2, kind: input, shape index: {}]
  %s3 = inlined_call_operand.vmem [shape: f32[192,10], index: 3, kind: input, shape index: {}]
  %s4 = inlined_call_operand.vmem [shape: f32[1,10], index: 4, kind: input, shape index: {}]
  %s5 = inlined_call_operand.vmem [shape: f32[16,10], index: 5, kind: output, shape index: {}]
  %s6 = sld [smem:[#allocation0]]
  $region53: #{convnet_forward.1} parent=0
    _
  %s8 = ssub.s32 1, %s6
  %s9 = scalar_select 0, %s8, %s6
  loop: start=0, step=1, limit=4
  $region2: #{convnet_forward.1} parent=0 // loop_pre_header
    _
  $region3: #{convnet_forward.1} parent=0 // loop_header
    %s11 = sphi 0, %s15
    %p12 = scmp.ge.s32.totalorder %s11, 4
    %s21 = sphi 0, %s23
    %s24 = sphi 0, %s21
    %s25 = sphi 0, %s24
    %s41 = sphi 0, %s25
    %s45 = sphi 0, %s45
    %s47 = sphi 0, %s45
    %s48 = sphi 0, %s47
    %s62 = sphi 0, %s48
    %s66 = sphi 0, %s66
    %s68 = sphi 0, %s66
    %s69 = sphi 0, %s68
    %s83 = sphi 0, %s69
    %s87 = sphi 0, %s87
    %s89 = sphi 0, %s87
    %s90 = sphi 0, %s89
    %s104 = sphi 0, %s90
    %s108 = sphi 0, %s108
    %s110 = sphi 0, %s108
    %s111 = sphi 0, %s110
    %s125 = sphi 0, %s111
    %s131 = sphi 0, %s133
    %s134 = sphi 0, %s131
    %s135 = sphi 0, %s134
    %s151 = sphi 0, %s135
  $region4: #{convnet_forward.1} parent=0 // loop_header_branch
    %14 = sbr.rel (%p12) target = $region8
  $region5: #{convnet_forward.1} parent=0 // loop_body
    %s16 = ssub.s32 %s11, 1
    %s17 = ssub.s32 %s11, 2
    %s18 = sadd.s32 %s11, 1
    %s19 = ssub.s32 %s11, %s18
    %p20 = scmp.eq.s32.totalorder %s19, 0
    %s22 = sadd.s32 %s21, 1
    %s23 = scalar_select %p20, %s21, %s22
    %p26 = pneg %p20
    %p27 = scmp.eq.s32.totalorder %s11, 1
    %p28 = por %p26, %p27
    %p29 = scmp.ne.s32.totalorder %s21, %s24
    %p30 = scmp.eq.s32.totalorder %s11, 0
    %p31 = por %p29, %p30
    %p32 = scmp.ne.s32.totalorder %s21, %s24
    %p33 = scmp.eq.s32.totalorder %s16, 1
    %p34 = por %p32, %p33
    %p35 = scmp.ne.s32.totalorder %s24, %s25
    %p36 = scmp.eq.s32.totalorder %s16, 0
    %p37 = por %p35, %p36
    %p38 = scmp.ne.s32.totalorder %s24, %s25
    %p39 = scmp.eq.s32.totalorder %s17, 1
    %p40 = por %p38, %p39
    %p42 = scmp.ne.s32.totalorder %s25, %s41
    %p43 = scmp.eq.s32.totalorder %s17, 0
    %p44 = por %p42, %p43
    %s46 = sadd.s32 %s45, 1
    %p49 = scmp.eq.s32.totalorder %s11, 1
    %p50 = scmp.ne.s32.totalorder %s45, %s47
    %p51 = scmp.eq.s32.totalorder %s11, 0
    %p52 = por %p50, %p51
    %p53 = scmp.ne.s32.totalorder %s45, %s47
    %p54 = scmp.eq.s32.totalorder %s16, 1
    %p55 = por %p53, %p54
    %p56 = scmp.ne.s32.totalorder %s47, %s48
    %p57 = scmp.eq.s32.totalorder %s16, 0
    %p58 = por %p56, %p57
    %p59 = scmp.ne.s32.totalorder %s47, %s48
    %p60 = scmp.eq.s32.totalorder %s17, 1
    %p61 = por %p59, %p60
    %p63 = scmp.ne.s32.totalorder %s48, %s62
    %p64 = scmp.eq.s32.totalorder %s17, 0
    %p65 = por %p63, %p64
    %s67 = sadd.s32 %s66, 1
    %p70 = scmp.eq.s32.totalorder %s11, 1
    %p71 = scmp.ne.s32.totalorder %s66, %s68
    %p72 = scmp.eq.s32.totalorder %s11, 0
    %p73 = por %p71, %p72
    %p74 = scmp.ne.s32.totalorder %s66, %s68
    %p75 = scmp.eq.s32.totalorder %s16, 1
    %p76 = por %p74, %p75
    %p77 = scmp.ne.s32.totalorder %s68, %s69
    %p78 = scmp.eq.s32.totalorder %s16, 0
    %p79 = por %p77, %p78
    %p80 = scmp.ne.s32.totalorder %s68, %s69
    %p81 = scmp.eq.s32.totalorder %s17, 1
    %p82 = por %p80, %p81
    %p84 = scmp.ne.s32.totalorder %s69, %s83
    %p85 = scmp.eq.s32.totalorder %s17, 0
    %p86 = por %p84, %p85
    %s88 = sadd.s32 %s87, 1
    %p91 = scmp.eq.s32.totalorder %s11, 1
    %p92 = scmp.ne.s32.totalorder %s87, %s89
    %p93 = scmp.eq.s32.totalorder %s11, 0
    %p94 = por %p92, %p93
    %p95 = scmp.ne.s32.totalorder %s87, %s89
    %p96 = scmp.eq.s32.totalorder %s16, 1
    %p97 = por %p95, %p96
    %p98 = scmp.ne.s32.totalorder %s89, %s90
    %p99 = scmp.eq.s32.totalorder %s16, 0
    %p100 = por %p98, %p99
    %p101 = scmp.ne.s32.totalorder %s89, %s90
    %p102 = scmp.eq.s32.totalorder %s17, 1
    %p103 = por %p101, %p102
    %p105 = scmp.ne.s32.totalorder %s90, %s104
    %p106 = scmp.eq.s32.totalorder %s17, 0
    %p107 = por %p105, %p106
    %s109 = sadd.s32 %s108, 1
    %p112 = scmp.eq.s32.totalorder %s11, 1
    %p113 = scmp.ne.s32.totalorder %s108, %s110
    %p114 = scmp.eq.s32.totalorder %s11, 0
    %p115 = por %p113, %p114
    %p116 = scmp.ne.s32.totalorder %s108, %s110
    %p117 = scmp.eq.s32.totalorder %s16, 1
    %p118 = por %p116, %p117
    %p119 = scmp.ne.s32.totalorder %s110, %s111
    %p120 = scmp.eq.s32.totalorder %s16, 0
    %p121 = por %p119, %p120
    %p122 = scmp.ne.s32.totalorder %s110, %s111
    %p123 = scmp.eq.s32.totalorder %s17, 1
    %p124 = por %p122, %p123
    %p126 = scmp.ne.s32.totalorder %s111, %s125
    %p127 = scmp.eq.s32.totalorder %s17, 0
    %p128 = por %p126, %p127
    %s129 = ssub.s32 %s11, %s18
    %p130 = scmp.eq.s32.totalorder %s129, 0
    %s132 = sadd.s32 %s131, 1
    %s133 = scalar_select %p130, %s131, %s132
    %p136 = pneg %p130
    %p137 = scmp.eq.s32.totalorder %s11, 1
    %p138 = por %p136, %p137
    %p139 = scmp.ne.s32.totalorder %s131, %s134
    %p140 = scmp.eq.s32.totalorder %s11, 0
    %p141 = por %p139, %p140
    %p142 = scmp.ne.s32.totalorder %s131, %s134
    %p143 = scmp.eq.s32.totalorder %s16, 1
    %p144 = por %p142, %p143
    %p145 = scmp.ne.s32.totalorder %s134, %s135
    %p146 = scmp.eq.s32.totalorder %s16, 0
    %p147 = por %p145, %p146
    %p148 = scmp.ne.s32.totalorder %s134, %s135
    %p149 = scmp.eq.s32.totalorder %s17, 1
    %p150 = por %p148, %p149
    %p152 = scmp.ne.s32.totalorder %s135, %s151
    %p153 = scmp.eq.s32.totalorder %s17, 0
    %p154 = por %p152, %p153
    %p155 = scmp.le.s32.totalorder 1, %s11
    %p156 = scmp.lt.s32.totalorder %s11, 3
    %p157 = pnand %p155, %p156
    %p158 = pneg %p157
    // Predicated region
    $region9: #{convnet_forward.1} parent=5 // pred_check
      _
    $region10: #{convnet_forward.1} parent=5 // pred_check_branch
      %160 = sbr.rel (%p157) target = $region12
    $region11: #{convnet_forward.1} parent=5 // pred_region
      %s161 = ssub.s32 %s11, 1
      // Predicated region
      $region13: #{convnet_forward.1} parent=11 // pred_check
        %p162 = pneg %p58
      $region14: #{convnet_forward.1} parent=11 // pred_check_branch
        %164 = sbr.rel (%p162) target = $region16
      $region15: #{convnet_forward.1} parent=11 // pred_region
        _
      $region16: #{convnet_forward.1} parent=11 // pred_fallthru
        _
      // Predicated region
      $region17: #{convnet_forward.1} parent=11 // pred_check
        %p165 = pneg %p79
      $region18: #{convnet_forward.1} parent=11 // pred_check_branch
        %167 = sbr.rel (%p165) target = $region20
      $region19: #{convnet_forward.1} parent=11 // pred_region
        _
      $region20: #{convnet_forward.1} parent=11 // pred_fallthru
        _
      // Predicated region
      $region21: #{convnet_forward.1} parent=11 // pred_check
        %p168 = pneg %p100
      $region22: #{convnet_forward.1} parent=11 // pred_check_branch
        %170 = sbr.rel (%p168) target = $region24
      $region23: #{convnet_forward.1} parent=11 // pred_region
        _
      $region24: #{convnet_forward.1} parent=11 // pred_fallthru
        _
      // Predicated region
      $region25: #{convnet_forward.1} parent=11 // pred_check
        %p171 = pneg %p121
      $region26: #{convnet_forward.1} parent=11 // pred_check_branch
        %173 = sbr.rel (%p171) target = $region28
      $region27: #{convnet_forward.1} parent=11 // pred_region
        _
      $region28: #{convnet_forward.1} parent=11 // pred_fallthru
        _
    $region12: #{convnet_forward.1} parent=5 // pred_fallthru
      _
    %p174 = scmp.lt.s32.totalorder %s11, 2
    // Predicated region
    $region29: #{convnet_forward.1} parent=5 // pred_check
      %p175 = pneg %p174
    $region30: #{convnet_forward.1} parent=5 // pred_check_branch
      %177 = sbr.rel (%p175) target = $region32
    $region31: #{convnet_forward.1} parent=5 // pred_region
      // Predicated region
      $region33: #{convnet_forward.1} parent=31 // pred_check
        %p178 = pneg %p31
      $region34: #{convnet_forward.1} parent=31 // pred_check_branch
        %180 = sbr.rel (%p178) target = $region36
      $region35: #{convnet_forward.1} parent=31 // pred_region
        %p181 = scmp.lt.s32.totalorder %s11, 1
        %s182 = scalar_select %p181, %s11, 1
        %s183 = smul.addr %s182, 7
        %s184 = smul.addr %s183, 8
        %s185 = scalar_lea.vmem %s0, %s184
      $region36: #{convnet_forward.1} parent=31 // pred_fallthru
        _
    $region32: #{convnet_forward.1} parent=5 // pred_fallthru
      _
    %p186 = scmp.le.s32.totalorder 1, %s11
    %p187 = scmp.lt.s32.totalorder %s11, 3
    %p188 = pnand %p186, %p187
    %p189 = pneg %p188
    // Predicated region
    $region37: #{convnet_forward.1} parent=5 // pred_check
      _
    $region38: #{convnet_forward.1} parent=5 // pred_check_branch
      %191 = sbr.rel (%p188) target = $region40
    $region39: #{convnet_forward.1} parent=5 // pred_region
      %s192 = ssub.s32 %s11, 1
      %p193 = scmp.lt.s32.totalorder %s16, 1
      %s194 = scalar_select %p193, %s16, 1
      %s195 = smul.addr %s194, 7
      %s196 = smul.addr %s195, 8
      %s197 = scalar_lea.vmem %s0, %s196
      %p198 = pneg %p37
      %p199 = pneg %p34
      %p200 = pneg %p58
      %p201 = pneg %p55
      %p202 = pneg %p79
      %p203 = pneg %p76
      %p204 = pneg %p100
      %p205 = pneg %p97
      %p206 = pneg %p121
      %p207 = pneg %p118
      %p208 = pneg %p147
      %p209 = pneg %p144
      %p210 = scmp.lt.s32.totalorder %s16, 1
      %s211 = scalar_select %p210, %s16, 1
      %s212 = smul.addr %s211, 8
      %s213 = scalar_lea.vmem %s5, %s212
      %p214 = scmp.lt.s32.totalorder %s16, 1
      %s215 = scalar_select %p214, %s16, 1
      %s216 = smul.addr %s215, 7
      %s217 = smul.addr %s216, 8
      %s218 = scalar_lea.vmem %s0, %s217
      %p219 = scmp.lt.s32.totalorder %s16, 1
      %s220 = scalar_select %p219, %s16, 1
      %s221 = smul.addr %s220, 8
      %s222 = scalar_lea.vmem %s5, %s221
      %v223 = vld [vmem:[%s218] sm:$0xff]
      %v224 = vld [vmem:[%s218 + $0x8] sm:$0xff]
      %v225 = vld [vmem:[%s218 + $0x10] sm:$0xff]
      %v226 = vld [vmem:[%s218 + $0x18] sm:$0xff]
      %v227 = vld [vmem:[%s218 + $0x20] sm:$0xff]
      %v228 = vld [vmem:[%s218 + $0x28] sm:$0xff]
      %v229 = vld [vmem:[%s218 + $0x30] sm:$0xff]
      %v230 = vld [vmem:[%s1] sm:$0xff]
      %v231 = vld [vmem:[%s1 + $0x8] sm:$0xff]
      %v232 = vld [vmem:[%s1 + $0x10] sm:$0xff]
      %v233 = vld [vmem:[%s1 + $0x18] sm:$0xff]
      %v234 = vld [vmem:[%s1 + $0x20] sm:$0xff]
      %v235 = vld [vmem:[%s1 + $0x28] sm:$0xff]
      %v236 = vld [vmem:[%s1 + $0x30] sm:$0xff]
      %v237 = vld [vmem:[%s1 + $0x38] sm:$0xff]
      %v238 = vld [vmem:[%s1 + $0x40] sm:$0xff]
      %v239 = vld [vmem:[%s1 + $0x48] sm:$0xff]
      %v240 = vld [vmem:[%s1 + $0x50] sm:$0xff]
      %v241 = vld [vmem:[%s1 + $0x58] sm:$0xff]
      %v242 = vld [vmem:[%s1 + $0x60] sm:$0xff]
      %v243 = vld [vmem:[%s1 + $0x68] sm:$0xff]
      %v244 = vld [vmem:[%s1 + $0x70] sm:$0xff]
      %v245 = vld [vmem:[%s1 + $0x78] sm:$0xff]
      %v246 = vld [vmem:[%s1 + $0x80] sm:$0xff]
      %v247 = vld [vmem:[%s1 + $0x88] sm:$0xff]
      %v248 = vld [vmem:[%s1 + $0x90] sm:$0xff]
      %v249 = vld [vmem:[%s1 + $0x98] sm:$0xff]
      %v250 = vld [vmem:[%s1 + $0xa0] sm:$0xff]
      %v251 = vld [vmem:[%s1 + $0xa8] sm:$0xff]
      %v252 = vld [vmem:[%s1 + $0xb0] sm:$0xff]
      %v253 = vld [vmem:[%s1 + $0xb8] sm:$0xff]
      %v254 = vld [vmem:[%s1 + $0xc0] sm:$0xff]
      %v255 = vld [vmem:[%s1 + $0xc8] sm:$0xff]
      %v256 = vld [vmem:[%s1 + $0xd0] sm:$0xff]
      %v257 = vld [vmem:[%s1 + $0xd8] sm:$0xff]
      %v258 = vld [vmem:[%s1 + $0xe0] sm:$0xff]
      %v259 = vld [vmem:[%s1 + $0xe8] sm:$0xff]
      %v260 = vld [vmem:[%s1 + $0xf0] sm:$0xff]
      %v261 = vld [vmem:[%s1 + $0xf8] sm:$0xff]
      %v262 = vld [vmem:[%s1 + $0x100] sm:$0xff]
      %v263 = vld [vmem:[%s1 + $0x108] sm:$0xff]
      %v264 = vld [vmem:[%s1 + $0x110] sm:$0xff]
      %v265 = vld [vmem:[%s1 + $0x118] sm:$0xff]
      %v266 = vld [vmem:[%s1 + $0x120] sm:$0xff]
      %v267 = vld [vmem:[%s1 + $0x128] sm:$0xff]
      %v268 = vld [vmem:[%s1 + $0x130] sm:$0xff]
      %v269 = vld [vmem:[%s1 + $0x138] sm:$0xff]
      %v270 = vld [vmem:[%s1 + $0x140] sm:$0xff]
      %v271 = vld [vmem:[%s1 + $0x148] sm:$0xff]
      %v272 = vld [vmem:[%s1 + $0x150] sm:$0xff]
      %v273 = vld [vmem:[%s1 + $0x158] sm:$0xff]
      %v274 = vld [vmem:[%s1 + $0x160] sm:$0xff]
      %v275 = vld [vmem:[%s1 + $0x168] sm:$0xff]
      %v276 = vld [vmem:[%s1 + $0x170] sm:$0xff]
      %v277 = vld [vmem:[%s1 + $0x178] sm:$0xff]
      %v278 = vld [vmem:[%s1 + $0x180] sm:$0xff]
      %v279 = vld [vmem:[%s1 + $0x188] sm:$0xff]
      %v280 = vld [vmem:[%s1 + $0x190] sm:$0xff]
      %v281 = vld [vmem:[%s1 + $0x198] sm:$0xff]
      %v282 = vld [vmem:[%s1 + $0x1a0] sm:$0xff]
      %v283 = vld [vmem:[%s1 + $0x1a8] sm:$0xff]
      %v284 = vld [vmem:[%s1 + $0x1b0] sm:$0xff]
      %v285 = vld [vmem:[%s1 + $0x1b8] sm:$0xff]
      %v286 = vld [vmem:[%s1 + $0x1c0] sm:$0xff]
      %v287 = vld [vmem:[%s1 + $0x1c8] sm:$0xff]
      %v288 = vld [vmem:[%s1 + $0x1d0] sm:$0xff]
      %v289 = vld [vmem:[%s1 + $0x1d8] sm:$0xff]
      %v290 = vld [vmem:[%s1 + $0x1e0] sm:$0xff]
      %v291 = vld [vmem:[%s1 + $0x1e8] sm:$0xff]
      %v292 = vld [vmem:[%s1 + $0x1f0] sm:$0xff]
      %v293 = vld [vmem:[%s1 + $0x1f8] sm:$0xff]
      %v294 = vld [vmem:[%s1 + $0x200] sm:$0xff]
      %v295 = vld [vmem:[%s1 + $0x208] sm:$0xff]
      %v296 = vld [vmem:[%s1 + $0x210] sm:$0xff]
      %v297 = vld [vmem:[%s1 + $0x218] sm:$0xff]
      %v298 = vld [vmem:[%s1 + $0x220] sm:$0xff]
      %v299 = vld [vmem:[%s1 + $0x228] sm:$0xff]
      %v300 = vld [vmem:[%s1 + $0x230] sm:$0xff]
      %v301 = vld [vmem:[%s1 + $0x238] sm:$0xff]
      %v302 = vld [vmem:[%s1 + $0x240] sm:$0xff]
      %v303 = vld [vmem:[%s1 + $0x248] sm:$0xff]
      %v304 = vld [vmem:[%s1 + $0x250] sm:$0xff]
      %v305 = vld [vmem:[%s1 + $0x258] sm:$0xff]
      %v306 = vld [vmem:[%s1 + $0x260] sm:$0xff]
      %v307 = vld [vmem:[%s1 + $0x268] sm:$0xff]
      %v308 = vld [vmem:[%s1 + $0x270] sm:$0xff]
      %v309 = vld [vmem:[%s1 + $0x278] sm:$0xff]
      %v310 = vld [vmem:[%s1 + $0x280] sm:$0xff]
      %v311 = vld [vmem:[%s1 + $0x288] sm:$0xff]
      %v312 = vld [vmem:[%s1 + $0x290] sm:$0xff]
      %v313 = vld [vmem:[%s1 + $0x298] sm:$0xff]
      %v314 = vld [vmem:[%s1 + $0x2a0] sm:$0xff]
      %v315 = vld [vmem:[%s1 + $0x2a8] sm:$0xff]
      %v316 = vld [vmem:[%s1 + $0x2b0] sm:$0xff]
      %v317 = vld [vmem:[%s1 + $0x2b8] sm:$0xff]
      %v318 = vld [vmem:[%s1 + $0x2c0] sm:$0xff]
      %v319 = vld [vmem:[%s1 + $0x2c8] sm:$0xff]
      %v320 = vld [vmem:[%s1 + $0x2d0] sm:$0xff]
      %v321 = vld [vmem:[%s1 + $0x2d8] sm:$0xff]
      %v322 = vld [vmem:[%s1 + $0x2e0] sm:$0xff]
      %v323 = vld [vmem:[%s1 + $0x2e8] sm:$0xff]
      %v324 = vld [vmem:[%s1 + $0x2f0] sm:$0xff]
      %v325 = vld [vmem:[%s1 + $0x2f8] sm:$0xff]
      %v326 = vld [vmem:[%s1 + $0x300] sm:$0xff]
      %v327 = vld [vmem:[%s1 + $0x308] sm:$0xff]
      %v328 = vld [vmem:[%s1 + $0x310] sm:$0xff]
      %v329 = vld [vmem:[%s1 + $0x318] sm:$0xff]
      %v330 = vld [vmem:[%s1 + $0x320] sm:$0xff]
      %v331 = vld [vmem:[%s1 + $0x328] sm:$0xff]
      %v332 = vld [vmem:[%s1 + $0x330] sm:$0xff]
      %v333 = vld [vmem:[%s1 + $0x338] sm:$0xff]
      %v334 = vld [vmem:[%s1 + $0x340] sm:$0xff]
      %v335 = vld [vmem:[%s1 + $0x348] sm:$0xff]
      %v336 = vld [vmem:[%s1 + $0x350] sm:$0xff]
      %v337 = vld [vmem:[%s1 + $0x358] sm:$0xff]
      %v338 = vld [vmem:[%s1 + $0x360] sm:$0xff]
      %v339 = vld [vmem:[%s1 + $0x368] sm:$0xff]
      %v340 = vld [vmem:[%s1 + $0x370] sm:$0xff]
      %v341 = vld [vmem:[%s1 + $0x378] sm:$0xff]
      %v342 = vld [vmem:[%s1 + $0x380] sm:$0xff]
      %v343 = vld [vmem:[%s1 + $0x388] sm:$0xff]
      %v344 = vld [vmem:[%s1 + $0x390] sm:$0xff]
      %v345 = vld [vmem:[%s1 + $0x398] sm:$0xff]
      %v346 = vld [vmem:[%s1 + $0x3a0] sm:$0xff]
      %v347 = vld [vmem:[%s1 + $0x3a8] sm:$0xff]
      %v348 = vld [vmem:[%s1 + $0x3b0] sm:$0xff]
      %v349 = vld [vmem:[%s1 + $0x3b8] sm:$0xff]
      %v350 = vld [vmem:[%s1 + $0x3c0] sm:$0xff]
      %v351 = vld [vmem:[%s1 + $0x3c8] sm:$0xff]
      %v352 = vld [vmem:[%s1 + $0x3d0] sm:$0xff]
      %v353 = vld [vmem:[%s1 + $0x3d8] sm:$0xff]
      %v354 = vld [vmem:[%s1 + $0x3e0] sm:$0xff]
      %v355 = vld [vmem:[%s1 + $0x3e8] sm:$0xff]
      %v356 = vld [vmem:[%s1 + $0x3f0] sm:$0xff]
      %v357 = vld [vmem:[%s1 + $0x3f8] sm:$0xff]
      %v358 = vld [vmem:[%s1 + $0x400] sm:$0xff]
      %v359 = vld [vmem:[%s1 + $0x408] sm:$0xff]
      %v360 = vld [vmem:[%s1 + $0x410] sm:$0xff]
      %v361 = vld [vmem:[%s1 + $0x418] sm:$0xff]
      %v362 = vld [vmem:[%s1 + $0x420] sm:$0xff]
      %v363 = vld [vmem:[%s1 + $0x428] sm:$0xff]
      %v364 = vld [vmem:[%s1 + $0x430] sm:$0xff]
      %v365 = vld [vmem:[%s1 + $0x438] sm:$0xff]
      %v366 = vld [vmem:[%s1 + $0x440] sm:$0xff]
      %v367 = vld [vmem:[%s1 + $0x448] sm:$0xff]
      %v368 = vld [vmem:[%s1 + $0x450] sm:$0xff]
      %v369 = vld [vmem:[%s1 + $0x458] sm:$0xff]
      %v370 = vld [vmem:[%s1 + $0x460] sm:$0xff]
      %v371 = vld [vmem:[%s1 + $0x468] sm:$0xff]
      %v372 = vld [vmem:[%s1 + $0x470] sm:$0xff]
      %v373 = vld [vmem:[%s1 + $0x478] sm:$0xff]
      %v374 = vld [vmem:[%s1 + $0x480] sm:$0xff]
      %v375 = vld [vmem:[%s1 + $0x488] sm:$0xff]
      %v376 = vld [vmem:[%s1 + $0x490] sm:$0xff]
      %v377 = vld [vmem:[%s1 + $0x498] sm:$0xff]
      %v378 = vld [vmem:[%s1 + $0x4a0] sm:$0xff]
      %v379 = vld [vmem:[%s1 + $0x4a8] sm:$0xff]
      %v380 = vld [vmem:[%s1 + $0x4b0] sm:$0xff]
      %v381 = vld [vmem:[%s1 + $0x4b8] sm:$0xff]
      %v382 = vld [vmem:[%s1 + $0x4c0] sm:$0xff]
      %v383 = vld [vmem:[%s1 + $0x4c8] sm:$0xff]
      %v384 = vld [vmem:[%s1 + $0x4d0] sm:$0xff]
      %v385 = vld [vmem:[%s1 + $0x4d8] sm:$0xff]
      %v386 = vld [vmem:[%s1 + $0x4e0] sm:$0xff]
      %v387 = vld [vmem:[%s1 + $0x4e8] sm:$0xff]
      %v388 = vld [vmem:[%s1 + $0x4f0] sm:$0xff]
      %v389 = vld [vmem:[%s1 + $0x4f8] sm:$0xff]
      %v390 = vld [vmem:[%s1 + $0x500] sm:$0xff]
      %v391 = vld [vmem:[%s1 + $0x508] sm:$0xff]
      %v392 = vld [vmem:[%s1 + $0x510] sm:$0xff]
      %v393 = vld [vmem:[%s1 + $0x518] sm:$0xff]
      %v394 = vld [vmem:[%s1 + $0x520] sm:$0xff]
      %v395 = vld [vmem:[%s1 + $0x528] sm:$0xff]
      %v396 = vld [vmem:[%s1 + $0x530] sm:$0xff]
      %v397 = vld [vmem:[%s1 + $0x538] sm:$0xff]
      %v398 = vld [vmem:[%s1 + $0x540] sm:$0xff]
      %v399 = vld [vmem:[%s1 + $0x548] sm:$0xff]
      %v400 = vld [vmem:[%s1 + $0x550] sm:$0xff]
      %v401 = vld [vmem:[%s1 + $0x558] sm:$0xff]
      %v402 = vld [vmem:[%s1 + $0x560] sm:$0xff]
      %v403 = vld [vmem:[%s1 + $0x568] sm:$0xff]
      %v404 = vld [vmem:[%s1 + $0x570] sm:$0xff]
      %v405 = vld [vmem:[%s1 + $0x578] sm:$0xff]
      %v406 = vld [vmem:[%s1 + $0x580] sm:$0xff]
      %v407 = vld [vmem:[%s1 + $0x588] sm:$0xff]
      %v408 = vld [vmem:[%s1 + $0x590] sm:$0xff]
      %v409 = vld [vmem:[%s1 + $0x598] sm:$0xff]
      %v410 = vld [vmem:[%s1 + $0x5a0] sm:$0xff]
      %v411 = vld [vmem:[%s1 + $0x5a8] sm:$0xff]
      %v412 = vld [vmem:[%s1 + $0x5b0] sm:$0xff]
      %v413 = vld [vmem:[%s1 + $0x5b8] sm:$0xff]
      %v414 = vld [vmem:[%s1 + $0x5c0] sm:$0xff]
      %v415 = vld [vmem:[%s1 + $0x5c8] sm:$0xff]
      %v416 = vld [vmem:[%s1 + $0x5d0] sm:$0xff]
      %v417 = vld [vmem:[%s1 + $0x5d8] sm:$0xff]
      %v418 = vld [vmem:[%s1 + $0x5e0] sm:$0xff]
      %v419 = vld [vmem:[%s1 + $0x5e8] sm:$0xff]
      %v420 = vld [vmem:[%s1 + $0x5f0] sm:$0xff]
      %v421 = vld [vmem:[%s1 + $0x5f8] sm:$0xff]
      %v422 = vld [vmem:[%s1 + $0x600] sm:$0xff]
      %v423 = vld [vmem:[%s1 + $0x608] sm:$0xff]
      %v424 = vld [vmem:[%s1 + $0x610] sm:$0xff]
      %v425 = vld [vmem:[%s1 + $0x618] sm:$0xff]
      %v426 = vld [vmem:[%s1 + $0x620] sm:$0xff]
      %v427 = vld [vmem:[%s1 + $0x628] sm:$0xff]
      %v428 = vld [vmem:[%s1 + $0x630] sm:$0xff]
      %v429 = vld [vmem:[%s1 + $0x638] sm:$0xff]
      %v430 = vld [vmem:[%s1 + $0x640] sm:$0xff]
      %v431 = vld [vmem:[%s1 + $0x648] sm:$0xff]
      %v432 = vld [vmem:[%s1 + $0x650] sm:$0xff]
      %v433 = vld [vmem:[%s1 + $0x658] sm:$0xff]
      %v434 = vld [vmem:[%s1 + $0x660] sm:$0xff]
      %v435 = vld [vmem:[%s1 + $0x668] sm:$0xff]
      %v436 = vld [vmem:[%s1 + $0x670] sm:$0xff]
      %v437 = vld [vmem:[%s1 + $0x678] sm:$0xff]
      %v438 = vld [vmem:[%s1 + $0x680] sm:$0xff]
      %v439 = vld [vmem:[%s1 + $0x688] sm:$0xff]
      %v440 = vld [vmem:[%s1 + $0x690] sm:$0xff]
      %v441 = vld [vmem:[%s1 + $0x698] sm:$0xff]
      %v442 = vld [vmem:[%s1 + $0x6a0] sm:$0xff]
      %v443 = vld [vmem:[%s1 + $0x6a8] sm:$0xff]
      %v444 = vld [vmem:[%s1 + $0x6b0] sm:$0xff]
      %v445 = vld [vmem:[%s1 + $0x6b8] sm:$0xff]
      %v446 = vld [vmem:[%s1 + $0x6c0] sm:$0xff]
      %v447 = vld [vmem:[%s1 + $0x6c8] sm:$0xff]
      %v448 = vld [vmem:[%s1 + $0x6d0] sm:$0xff]
      %v449 = vld [vmem:[%s1 + $0x6d8] sm:$0xff]
      %v450 = vld [vmem:[%s1 + $0x6e0] sm:$0xff]
      %v451 = vld [vmem:[%s1 + $0x6e8] sm:$0xff]
      %v452 = vld [vmem:[%s1 + $0x6f0] sm:$0xff]
      %v453 = vld [vmem:[%s1 + $0x6f8] sm:$0xff]
      %v454 = vld [vmem:[%s1 + $0x700] sm:$0xff]
      %v455 = vld [vmem:[%s1 + $0x708] sm:$0xff]
      %v456 = vld [vmem:[%s1 + $0x710] sm:$0xff]
      %v457 = vld [vmem:[%s1 + $0x718] sm:$0xff]
      %v458 = vld [vmem:[%s1 + $0x720] sm:$0xff]
      %v459 = vld [vmem:[%s1 + $0x728] sm:$0xff]
      %v460 = vld [vmem:[%s1 + $0x730] sm:$0xff]
      %v461 = vld [vmem:[%s1 + $0x738] sm:$0xff]
      %v462 = vld [vmem:[%s1 + $0x740] sm:$0xff]
      %v463 = vld [vmem:[%s1 + $0x748] sm:$0xff]
      %v464 = vld [vmem:[%s1 + $0x750] sm:$0xff]
      %v465 = vld [vmem:[%s1 + $0x758] sm:$0xff]
      %v466 = vld [vmem:[%s1 + $0x760] sm:$0xff]
      %v467 = vld [vmem:[%s1 + $0x768] sm:$0xff]
      %v468 = vld [vmem:[%s1 + $0x770] sm:$0xff]
      %v469 = vld [vmem:[%s1 + $0x778] sm:$0xff]
      %v470 = vld [vmem:[%s1 + $0x780] sm:$0xff]
      %v471 = vld [vmem:[%s1 + $0x788] sm:$0xff]
      %v472 = vld [vmem:[%s1 + $0x790] sm:$0xff]
      %v473 = vld [vmem:[%s1 + $0x798] sm:$0xff]
      %v474 = vld [vmem:[%s1 + $0x7a0] sm:$0xff]
      %v475 = vld [vmem:[%s1 + $0x7a8] sm:$0xff]
      %v476 = vld [vmem:[%s1 + $0x7b0] sm:$0xff]
      %v477 = vld [vmem:[%s1 + $0x7b8] sm:$0xff]
      %v478 = vld [vmem:[%s1 + $0x7c0] sm:$0xff]
      %v479 = vld [vmem:[%s1 + $0x7c8] sm:$0xff]
      %v480 = vld [vmem:[%s1 + $0x7d0] sm:$0xff]
      %v481 = vld [vmem:[%s1 + $0x7d8] sm:$0xff]
      %v482 = vld [vmem:[%s1 + $0x7e0] sm:$0xff]
      %v483 = vld [vmem:[%s1 + $0x7e8] sm:$0xff]
      %v484 = vld [vmem:[%s1 + $0x7f0] sm:$0xff]
      %v485 = vld [vmem:[%s1 + $0x7f8] sm:$0xff]
      %v486 = vld [vmem:[%s1 + $0x800] sm:$0xff]
      %v487 = vld [vmem:[%s1 + $0x808] sm:$0xff]
      %v488 = vld [vmem:[%s1 + $0x810] sm:$0xff]
      %v489 = vld [vmem:[%s1 + $0x818] sm:$0xff]
      %v490 = vld [vmem:[%s1 + $0x820] sm:$0xff]
      %v491 = vld [vmem:[%s1 + $0x828] sm:$0xff]
      %v492 = vld [vmem:[%s1 + $0x830] sm:$0xff]
      %v493 = vld [vmem:[%s1 + $0x838] sm:$0xff]
      %v494 = vld [vmem:[%s1 + $0x840] sm:$0xff]
      %v495 = vld [vmem:[%s1 + $0x848] sm:$0xff]
      %v496 = vld [vmem:[%s1 + $0x850] sm:$0xff]
      %v497 = vld [vmem:[%s1 + $0x858] sm:$0xff]
      %v498 = vld [vmem:[%s1 + $0x860] sm:$0xff]
      %v499 = vld [vmem:[%s1 + $0x868] sm:$0xff]
      %v500 = vld [vmem:[%s1 + $0x870] sm:$0xff]
      %v501 = vld [vmem:[%s1 + $0x878] sm:$0xff]
      %v502 = vld [vmem:[%s1 + $0x880] sm:$0xff]
      %v503 = vld [vmem:[%s1 + $0x888] sm:$0xff]
      %v504 = vld [vmem:[%s1 + $0x890] sm:$0xff]
      %v505 = vld [vmem:[%s1 + $0x898] sm:$0xff]
      %v506 = vld [vmem:[%s1 + $0x8a0] sm:$0xff]
      %v507 = vld [vmem:[%s1 + $0x8a8] sm:$0xff]
      %v508 = vld [vmem:[%s1 + $0x8b0] sm:$0xff]
      %v509 = vld [vmem:[%s1 + $0x8b8] sm:$0xff]
      %v510 = vld [vmem:[%s1 + $0x8c0] sm:$0xff]
      %v511 = vld [vmem:[%s1 + $0x8c8] sm:$0xff]
      %v512 = vld [vmem:[%s1 + $0x8d0] sm:$0xff]
      %v513 = vld [vmem:[%s1 + $0x8d8] sm:$0xff]
      %v514 = vld [vmem:[%s1 + $0x8e0] sm:$0xff]
      %v515 = vld [vmem:[%s1 + $0x8e8] sm:$0xff]
      %v516 = vld [vmem:[%s1 + $0x8f0] sm:$0xff]
      %v517 = vld [vmem:[%s1 + $0x8f8] sm:$0xff]
      %v518 = vld [vmem:[%s1 + $0x900] sm:$0xff]
      %v519 = vld [vmem:[%s1 + $0x908] sm:$0xff]
      %v520 = vld [vmem:[%s1 + $0x910] sm:$0xff]
      %v521 = vld [vmem:[%s1 + $0x918] sm:$0xff]
      %v522 = vld [vmem:[%s1 + $0x920] sm:$0xff]
      %v523 = vld [vmem:[%s1 + $0x928] sm:$0xff]
      %v524 = vld [vmem:[%s1 + $0x930] sm:$0xff]
      %v525 = vld [vmem:[%s1 + $0x938] sm:$0xff]
      %v526 = vld [vmem:[%s1 + $0x940] sm:$0xff]
      %v527 = vld [vmem:[%s1 + $0x948] sm:$0xff]
      %v528 = vld [vmem:[%s1 + $0x950] sm:$0xff]
      %v529 = vld [vmem:[%s1 + $0x958] sm:$0xff]
      %v530 = vld [vmem:[%s1 + $0x960] sm:$0xff]
      %v531 = vld [vmem:[%s1 + $0x968] sm:$0xff]
      %v532 = vld [vmem:[%s1 + $0x970] sm:$0xff]
      %v533 = vld [vmem:[%s1 + $0x978] sm:$0xff]
      %v534 = vld [vmem:[%s1 + $0x980] sm:$0xff]
      %v535 = vld [vmem:[%s1 + $0x988] sm:$0xff]
      %v536 = vld [vmem:[%s1 + $0x990] sm:$0xff]
      %v537 = vld [vmem:[%s1 + $0x998] sm:$0xff]
      %v538 = vld [vmem:[%s1 + $0x9a0] sm:$0xff]
      %v539 = vld [vmem:[%s1 + $0x9a8] sm:$0xff]
      %v540 = vld [vmem:[%s1 + $0x9b0] sm:$0xff]
      %v541 = vld [vmem:[%s1 + $0x9b8] sm:$0xff]
      %v542 = vld [vmem:[%s1 + $0x9c0] sm:$0xff]
      %v543 = vld [vmem:[%s1 + $0x9c8] sm:$0xff]
      %v544 = vld [vmem:[%s1 + $0x9d0] sm:$0xff]
      %v545 = vld [vmem:[%s1 + $0x9d8] sm:$0xff]
      %v546 = vld [vmem:[%s1 + $0x9e0] sm:$0xff]
      %v547 = vld [vmem:[%s1 + $0x9e8] sm:$0xff]
      %v548 = vld [vmem:[%s1 + $0x9f0] sm:$0xff]
      %v549 = vld [vmem:[%s1 + $0x9f8] sm:$0xff]
      %v550 = vld [vmem:[%s1 + $0xa00] sm:$0xff]
      %v551 = vld [vmem:[%s1 + $0xa08] sm:$0xff]
      %v552 = vld [vmem:[%s1 + $0xa10] sm:$0xff]
      %v553 = vld [vmem:[%s1 + $0xa18] sm:$0xff]
      %v554 = vld [vmem:[%s1 + $0xa20] sm:$0xff]
      %v555 = vld [vmem:[%s1 + $0xa28] sm:$0xff]
      %v556 = vld [vmem:[%s1 + $0xa30] sm:$0xff]
      %v557 = vld [vmem:[%s1 + $0xa38] sm:$0xff]
      %v558 = vld [vmem:[%s1 + $0xa40] sm:$0xff]
      %v559 = vld [vmem:[%s1 + $0xa48] sm:$0xff]
      %v560 = vld [vmem:[%s1 + $0xa50] sm:$0xff]
      %v561 = vld [vmem:[%s1 + $0xa58] sm:$0xff]
      %v562 = vld [vmem:[%s1 + $0xa60] sm:$0xff]
      %v563 = vld [vmem:[%s1 + $0xa68] sm:$0xff]
      %v564 = vld [vmem:[%s1 + $0xa70] sm:$0xff]
      %v565 = vld [vmem:[%s1 + $0xa78] sm:$0xff]
      %v566 = vld [vmem:[%s1 + $0xa80] sm:$0xff]
      %v567 = vld [vmem:[%s1 + $0xa88] sm:$0xff]
      %v568 = vld [vmem:[%s1 + $0xa90] sm:$0xff]
      %v569 = vld [vmem:[%s1 + $0xa98] sm:$0xff]
      %v570 = vld [vmem:[%s1 + $0xaa0] sm:$0xff]
      %v571 = vld [vmem:[%s1 + $0xaa8] sm:$0xff]
      %v572 = vld [vmem:[%s1 + $0xab0] sm:$0xff]
      %v573 = vld [vmem:[%s1 + $0xab8] sm:$0xff]
      %v574 = vld [vmem:[%s1 + $0xac0] sm:$0xff]
      %v575 = vld [vmem:[%s1 + $0xac8] sm:$0xff]
      %v576 = vld [vmem:[%s1 + $0xad0] sm:$0xff]
      %v577 = vld [vmem:[%s1 + $0xad8] sm:$0xff]
      %v578 = vld [vmem:[%s1 + $0xae0] sm:$0xff]
      %v579 = vld [vmem:[%s1 + $0xae8] sm:$0xff]
      %v580 = vld [vmem:[%s1 + $0xaf0] sm:$0xff]
      %v581 = vld [vmem:[%s1 + $0xaf8] sm:$0xff]
      %v582 = vld [vmem:[%s1 + $0xb00] sm:$0xff]
      %v583 = vld [vmem:[%s1 + $0xb08] sm:$0xff]
      %v584 = vld [vmem:[%s1 + $0xb10] sm:$0xff]
      %v585 = vld [vmem:[%s1 + $0xb18] sm:$0xff]
      %v586 = vld [vmem:[%s1 + $0xb20] sm:$0xff]
      %v587 = vld [vmem:[%s1 + $0xb28] sm:$0xff]
      %v588 = vld [vmem:[%s1 + $0xb30] sm:$0xff]
      %v589 = vld [vmem:[%s1 + $0xb38] sm:$0xff]
      %v590 = vld [vmem:[%s1 + $0xb40] sm:$0xff]
      %v591 = vld [vmem:[%s1 + $0xb48] sm:$0xff]
      %v592 = vld [vmem:[%s1 + $0xb50] sm:$0xff]
      %v593 = vld [vmem:[%s1 + $0xb58] sm:$0xff]
      %v594 = vld [vmem:[%s1 + $0xb60] sm:$0xff]
      %v595 = vld [vmem:[%s1 + $0xb68] sm:$0xff]
      %v596 = vld [vmem:[%s1 + $0xb70] sm:$0xff]
      %v597 = vld [vmem:[%s1 + $0xb78] sm:$0xff]
      %v598 = vld [vmem:[%s1 + $0xb80] sm:$0xff]
      %v599 = vld [vmem:[%s1 + $0xb88] sm:$0xff]
      %v600 = vld [vmem:[%s1 + $0xb90] sm:$0xff]
      %v601 = vld [vmem:[%s1 + $0xb98] sm:$0xff]
      %v602 = vld [vmem:[%s1 + $0xba0] sm:$0xff]
      %v603 = vld [vmem:[%s1 + $0xba8] sm:$0xff]
      %v604 = vld [vmem:[%s1 + $0xbb0] sm:$0xff]
      %v605 = vld [vmem:[%s1 + $0xbb8] sm:$0xff]
      %v606 = vld [vmem:[%s1 + $0xbc0] sm:$0xff]
      %v607 = vld [vmem:[%s1 + $0xbc8] sm:$0xff]
      %v608 = vld [vmem:[%s1 + $0xbd0] sm:$0xff]
      %v609 = vld [vmem:[%s1 + $0xbd8] sm:$0xff]
      %v610 = vld [vmem:[%s1 + $0xbe0] sm:$0xff]
      %v611 = vld [vmem:[%s1 + $0xbe8] sm:$0xff]
      %v612 = vld [vmem:[%s1 + $0xbf0] sm:$0xff]
      %v613 = vld [vmem:[%s1 + $0xbf8] sm:$0xff]
      %v614 = vld [vmem:[%s1 + $0xc00] sm:$0xff]
      %v615 = vld [vmem:[%s1 + $0xc08] sm:$0xff]
      %v616 = vld [vmem:[%s1 + $0xc10] sm:$0xff]
      %v617 = vld [vmem:[%s1 + $0xc18] sm:$0xff]
      %v618 = vld [vmem:[%s1 + $0xc20] sm:$0xff]
      %v619 = vld [vmem:[%s1 + $0xc28] sm:$0xff]
      %v620 = vld [vmem:[%s1 + $0xc30] sm:$0xff]
      %v621 = vld [vmem:[%s1 + $0xc38] sm:$0xff]
      %v622 = vld [vmem:[%s1 + $0xc40] sm:$0xff]
      %v623 = vld [vmem:[%s1 + $0xc48] sm:$0xff]
      %v624 = vld [vmem:[%s1 + $0xc50] sm:$0xff]
      %v625 = vld [vmem:[%s1 + $0xc58] sm:$0xff]
      %v626 = vld [vmem:[%s1 + $0xc60] sm:$0xff]
      %v627 = vld [vmem:[%s1 + $0xc68] sm:$0xff]
      %v628 = vld [vmem:[%s1 + $0xc70] sm:$0xff]
      %v629 = vld [vmem:[%s1 + $0xc78] sm:$0xff]
      %v630 = vld [vmem:[%s1 + $0xc80] sm:$0xff]
      %v631 = vld [vmem:[%s1 + $0xc88] sm:$0xff]
      %v632 = vld [vmem:[%s1 + $0xc90] sm:$0xff]
      %v633 = vld [vmem:[%s1 + $0xc98] sm:$0xff]
      %v634 = vld [vmem:[%s1 + $0xca0] sm:$0xff]
      %v635 = vld [vmem:[%s1 + $0xca8] sm:$0xff]
      %v636 = vld [vmem:[%s1 + $0xcb0] sm:$0xff]
      %v637 = vld [vmem:[%s1 + $0xcb8] sm:$0xff]
      %v638 = vld [vmem:[%s1 + $0xcc0] sm:$0xff]
      %v639 = vld [vmem:[%s1 + $0xcc8] sm:$0xff]
      %v640 = vld [vmem:[%s1 + $0xcd0] sm:$0xff]
      %v641 = vld [vmem:[%s1 + $0xcd8] sm:$0xff]
      %v642 = vld [vmem:[%s1 + $0xce0] sm:$0xff]
      %v643 = vld [vmem:[%s1 + $0xce8] sm:$0xff]
      %v644 = vld [vmem:[%s1 + $0xcf0] sm:$0xff]
      %v645 = vld [vmem:[%s1 + $0xcf8] sm:$0xff]
      %v646 = vld [vmem:[%s1 + $0xd00] sm:$0xff]
      %v647 = vld [vmem:[%s1 + $0xd08] sm:$0xff]
      %v648 = vld [vmem:[%s1 + $0xd10] sm:$0xff]
      %v649 = vld [vmem:[%s1 + $0xd18] sm:$0xff]
      %v650 = vld [vmem:[%s1 + $0xd20] sm:$0xff]
      %v651 = vld [vmem:[%s1 + $0xd28] sm:$0xff]
      %v652 = vld [vmem:[%s1 + $0xd30] sm:$0xff]
      %v653 = vld [vmem:[%s1 + $0xd38] sm:$0xff]
      %v654 = vld [vmem:[%s1 + $0xd40] sm:$0xff]
      %v655 = vld [vmem:[%s1 + $0xd48] sm:$0xff]
      %v656 = vld [vmem:[%s1 + $0xd50] sm:$0xff]
      %v657 = vld [vmem:[%s1 + $0xd58] sm:$0xff]
      %v658 = vld [vmem:[%s1 + $0xd60] sm:$0xff]
      %v659 = vld [vmem:[%s1 + $0xd68] sm:$0xff]
      %v660 = vld [vmem:[%s1 + $0xd70] sm:$0xff]
      %v661 = vld [vmem:[%s1 + $0xd78] sm:$0xff]
      %v662 = vld [vmem:[%s1 + $0xd80] sm:$0xff]
      %v663 = vld [vmem:[%s1 + $0xd88] sm:$0xff]
      %v664 = vld [vmem:[%s1 + $0xd90] sm:$0xff]
      %v665 = vld [vmem:[%s1 + $0xd98] sm:$0xff]
      %v666 = vld [vmem:[%s1 + $0xda0] sm:$0xff]
      %v667 = vld [vmem:[%s1 + $0xda8] sm:$0xff]
      %v668 = vld [vmem:[%s1 + $0xdb0] sm:$0xff]
      %v669 = vld [vmem:[%s1 + $0xdb8] sm:$0xff]
      %v670 = vld [vmem:[%s1 + $0xdc0] sm:$0xff]
      %v671 = vld [vmem:[%s1 + $0xdc8] sm:$0xff]
      %v672 = vld [vmem:[%s1 + $0xdd0] sm:$0xff]
      %v673 = vld [vmem:[%s1 + $0xdd8] sm:$0xff]
      %v674 = vld [vmem:[%s1 + $0xde0] sm:$0xff]
      %v675 = vld [vmem:[%s1 + $0xde8] sm:$0xff]
      %v676 = vld [vmem:[%s1 + $0xdf0] sm:$0xff]
      %v677 = vld [vmem:[%s1 + $0xdf8] sm:$0xff]
      %v678 = vld [vmem:[%s1 + $0xe00] sm:$0xff]
      %v679 = vld [vmem:[%s1 + $0xe08] sm:$0xff]
      %v680 = vld [vmem:[%s1 + $0xe10] sm:$0xff]
      %v681 = vld [vmem:[%s1 + $0xe18] sm:$0xff]
      %v682 = vld [vmem:[%s1 + $0xe20] sm:$0xff]
      %v683 = vld [vmem:[%s1 + $0xe28] sm:$0xff]
      %v684 = vld [vmem:[%s1 + $0xe30] sm:$0xff]
      %v685 = vld [vmem:[%s1 + $0xe38] sm:$0xff]
      %v686 = vld [vmem:[%s1 + $0xe40] sm:$0xff]
      %v687 = vld [vmem:[%s1 + $0xe48] sm:$0xff]
      %v688 = vld [vmem:[%s1 + $0xe50] sm:$0xff]
      %v689 = vld [vmem:[%s1 + $0xe58] sm:$0xff]
      %v690 = vld [vmem:[%s1 + $0xe60] sm:$0xff]
      %v691 = vld [vmem:[%s1 + $0xe68] sm:$0xff]
      %v692 = vld [vmem:[%s1 + $0xe70] sm:$0xff]
      %v693 = vld [vmem:[%s1 + $0xe78] sm:$0xff]
      %v694 = vld [vmem:[%s1 + $0xe80] sm:$0xff]
      %v695 = vld [vmem:[%s1 + $0xe88] sm:$0xff]
      %v696 = vld [vmem:[%s1 + $0xe90] sm:$0xff]
      %v697 = vld [vmem:[%s1 + $0xe98] sm:$0xff]
      %v698 = vld [vmem:[%s1 + $0xea0] sm:$0xff]
      %v699 = vld [vmem:[%s1 + $0xea8] sm:$0xff]
      %v700 = vld [vmem:[%s1 + $0xeb0] sm:$0xff]
      %v701 = vld [vmem:[%s1 + $0xeb8] sm:$0xff]
      %v702 = vld [vmem:[%s1 + $0xec0] sm:$0xff]
      %v703 = vld [vmem:[%s1 + $0xec8] sm:$0xff]
      %v704 = vld [vmem:[%s1 + $0xed0] sm:$0xff]
      %v705 = vld [vmem:[%s1 + $0xed8] sm:$0xff]
      %v706 = vld [vmem:[%s1 + $0xee0] sm:$0xff]
      %v707 = vld [vmem:[%s1 + $0xee8] sm:$0xff]
      %v708 = vld [vmem:[%s1 + $0xef0] sm:$0xff]
      %v709 = vld [vmem:[%s1 + $0xef8] sm:$0xff]
      %v710 = vld [vmem:[%s1 + $0xf00] sm:$0xff]
      %v711 = vld [vmem:[%s1 + $0xf08] sm:$0xff]
      %v712 = vld [vmem:[%s1 + $0xf10] sm:$0xff]
      %v713 = vld [vmem:[%s1 + $0xf18] sm:$0xff]
      %v714 = vld [vmem:[%s1 + $0xf20] sm:$0xff]
      %v715 = vld [vmem:[%s1 + $0xf28] sm:$0xff]
      %v716 = vld [vmem:[%s1 + $0xf30] sm:$0xff]
      %v717 = vld [vmem:[%s1 + $0xf38] sm:$0xff]
      %v718 = vld [vmem:[%s1 + $0xf40] sm:$0xff]
      %v719 = vld [vmem:[%s1 + $0xf48] sm:$0xff]
      %v720 = vld [vmem:[%s1 + $0xf50] sm:$0xff]
      %v721 = vld [vmem:[%s1 + $0xf58] sm:$0xff]
      %v722 = vld [vmem:[%s1 + $0xf60] sm:$0xff]
      %v723 = vld [vmem:[%s1 + $0xf68] sm:$0xff]
      %v724 = vld [vmem:[%s1 + $0xf70] sm:$0xff]
      %v725 = vld [vmem:[%s1 + $0xf78] sm:$0xff]
      %v726 = vld [vmem:[%s1 + $0xf80] sm:$0xff]
      %v727 = vld [vmem:[%s1 + $0xf88] sm:$0xff]
      %v728 = vld [vmem:[%s1 + $0xf90] sm:$0xff]
      %v729 = vld [vmem:[%s1 + $0xf98] sm:$0xff]
      %v730 = vld [vmem:[%s1 + $0xfa0] sm:$0xff]
      %v731 = vld [vmem:[%s1 + $0xfa8] sm:$0xff]
      %v732 = vld [vmem:[%s1 + $0xfb0] sm:$0xff]
      %v733 = vld [vmem:[%s1 + $0xfb8] sm:$0xff]
      %v734 = vld [vmem:[%s1 + $0xfc0] sm:$0xff]
      %v735 = vld [vmem:[%s1 + $0xfc8] sm:$0xff]
      %v736 = vld [vmem:[%s1 + $0xfd0] sm:$0xff]
      %v737 = vld [vmem:[%s1 + $0xfd8] sm:$0xff]
      %v738 = vld [vmem:[%s1 + $0xfe0] sm:$0xff]
      %v739 = vld [vmem:[%s1 + $0xfe8] sm:$0xff]
      %v740 = vld [vmem:[%s1 + $0xff0] sm:$0xff]
      %v741 = vld [vmem:[%s1 + $0xff8] sm:$0xff]
      %v742 = vld [vmem:[%s1 + $0x1000] sm:$0xff]
      %v743 = vld [vmem:[%s1 + $0x1008] sm:$0xff]
      %v744 = vld [vmem:[%s1 + $0x1010] sm:$0xff]
      %v745 = vld [vmem:[%s1 + $0x1018] sm:$0xff]
      %v746 = vld [vmem:[%s1 + $0x1020] sm:$0xff]
      %v747 = vld [vmem:[%s1 + $0x1028] sm:$0xff]
      %v748 = vld [vmem:[%s1 + $0x1030] sm:$0xff]
      %v749 = vld [vmem:[%s1 + $0x1038] sm:$0xff]
      %v750 = vld [vmem:[%s1 + $0x1040] sm:$0xff]
      %v751 = vld [vmem:[%s1 + $0x1048] sm:$0xff]
      %v752 = vld [vmem:[%s1 + $0x1050] sm:$0xff]
      %v753 = vld [vmem:[%s1 + $0x1058] sm:$0xff]
      %v754 = vld [vmem:[%s1 + $0x1060] sm:$0xff]
      %v755 = vld [vmem:[%s1 + $0x1068] sm:$0xff]
      %v756 = vld [vmem:[%s1 + $0x1070] sm:$0xff]
      %v757 = vld [vmem:[%s1 + $0x1078] sm:$0xff]
      %v758 = vld [vmem:[%s1 + $0x1080] sm:$0xff]
      %v759 = vld [vmem:[%s1 + $0x1088] sm:$0xff]
      %v760 = vld [vmem:[%s1 + $0x1090] sm:$0xff]
      %v761 = vld [vmem:[%s1 + $0x1098] sm:$0xff]
      %v762 = vld [vmem:[%s1 + $0x10a0] sm:$0xff]
      %v763 = vld [vmem:[%s1 + $0x10a8] sm:$0xff]
      %v764 = vld [vmem:[%s1 + $0x10b0] sm:$0xff]
      %v765 = vld [vmem:[%s1 + $0x10b8] sm:$0xff]
      %v766 = vld [vmem:[%s1 + $0x10c0] sm:$0xff]
      %v767 = vld [vmem:[%s1 + $0x10c8] sm:$0xff]
      %v768 = vld [vmem:[%s1 + $0x10d0] sm:$0xff]
      %v769 = vld [vmem:[%s1 + $0x10d8] sm:$0xff]
      %v770 = vld [vmem:[%s1 + $0x10e0] sm:$0xff]
      %v771 = vld [vmem:[%s1 + $0x10e8] sm:$0xff]
      %v772 = vld [vmem:[%s1 + $0x10f0] sm:$0xff]
      %v773 = vld [vmem:[%s1 + $0x10f8] sm:$0xff]
      %v774 = vld [vmem:[%s1 + $0x1100] sm:$0xff]
      %v775 = vld [vmem:[%s1 + $0x1108] sm:$0xff]
      %v776 = vld [vmem:[%s1 + $0x1110] sm:$0xff]
      %v777 = vld [vmem:[%s1 + $0x1118] sm:$0xff]
      %v778 = vld [vmem:[%s1 + $0x1120] sm:$0xff]
      %v779 = vld [vmem:[%s1 + $0x1128] sm:$0xff]
      %v780 = vld [vmem:[%s1 + $0x1130] sm:$0xff]
      %v781 = vld [vmem:[%s1 + $0x1138] sm:$0xff]
      %v782 = vld [vmem:[%s1 + $0x1140] sm:$0xff]
      %v783 = vld [vmem:[%s1 + $0x1148] sm:$0xff]
      %v784 = vld [vmem:[%s1 + $0x1150] sm:$0xff]
      %v785 = vld [vmem:[%s1 + $0x1158] sm:$0xff]
      %v786 = vld [vmem:[%s1 + $0x1160] sm:$0xff]
      %v787 = vld [vmem:[%s1 + $0x1168] sm:$0xff]
      %v788 = vld [vmem:[%s1 + $0x1170] sm:$0xff]
      %v789 = vld [vmem:[%s1 + $0x1178] sm:$0xff]
      %v790 = vld [vmem:[%s1 + $0x1180] sm:$0xff]
      %v791 = vld [vmem:[%s1 + $0x1188] sm:$0xff]
      %v792 = vld [vmem:[%s1 + $0x1190] sm:$0xff]
      %v793 = vld [vmem:[%s1 + $0x1198] sm:$0xff]
      %v794 = vld [vmem:[%s1 + $0x11a0] sm:$0xff]
      %v795 = vld [vmem:[%s1 + $0x11a8] sm:$0xff]
      %v796 = vld [vmem:[%s1 + $0x11b0] sm:$0xff]
      %v797 = vld [vmem:[%s1 + $0x11b8] sm:$0xff]
      %v798 = vld [vmem:[%s1 + $0x11c0] sm:$0xff]
      %v799 = vld [vmem:[%s1 + $0x11c8] sm:$0xff]
      %v800 = vld [vmem:[%s1 + $0x11d0] sm:$0xff]
      %v801 = vld [vmem:[%s1 + $0x11d8] sm:$0xff]
      %v802 = vld [vmem:[%s1 + $0x11e0] sm:$0xff]
      %v803 = vld [vmem:[%s1 + $0x11e8] sm:$0xff]
      %v804 = vld [vmem:[%s1 + $0x11f0] sm:$0xff]
      %v805 = vld [vmem:[%s1 + $0x11f8] sm:$0xff]
      %v806 = vld [vmem:[%s1 + $0x1200] sm:$0xff]
      %v807 = vld [vmem:[%s1 + $0x1208] sm:$0xff]
      %v808 = vld [vmem:[%s1 + $0x1210] sm:$0xff]
      %v809 = vld [vmem:[%s1 + $0x1218] sm:$0xff]
      %v810 = vld [vmem:[%s1 + $0x1220] sm:$0xff]
      %v811 = vld [vmem:[%s1 + $0x1228] sm:$0xff]
      %v812 = vld [vmem:[%s1 + $0x1230] sm:$0xff]
      %v813 = vld [vmem:[%s1 + $0x1238] sm:$0xff]
      %v814 = vld [vmem:[%s1 + $0x1240] sm:$0xff]
      %v815 = vld [vmem:[%s1 + $0x1248] sm:$0xff]
      %v816 = vld [vmem:[%s1 + $0x1250] sm:$0xff]
      %v817 = vld [vmem:[%s1 + $0x1258] sm:$0xff]
      %v818 = vld [vmem:[%s1 + $0x1260] sm:$0xff]
      %v819 = vld [vmem:[%s1 + $0x1268] sm:$0xff]
      %v820 = vld [vmem:[%s1 + $0x1270] sm:$0xff]
      %v821 = vld [vmem:[%s1 + $0x1278] sm:$0xff]
      %v822 = vld [vmem:[%s1 + $0x1280] sm:$0xff]
      %v823 = vld [vmem:[%s1 + $0x1288] sm:$0xff]
      %v824 = vld [vmem:[%s1 + $0x1290] sm:$0xff]
      %v825 = vld [vmem:[%s1 + $0x1298] sm:$0xff]
      %v826 = vld [vmem:[%s1 + $0x12a0] sm:$0xff]
      %v827 = vld [vmem:[%s1 + $0x12a8] sm:$0xff]
      %v828 = vld [vmem:[%s1 + $0x12b0] sm:$0xff]
      %v829 = vld [vmem:[%s1 + $0x12b8] sm:$0xff]
      %v830 = vld [vmem:[%s1 + $0x12c0] sm:$0xff]
      %v831 = vld [vmem:[%s1 + $0x12c8] sm:$0xff]
      %v832 = vld [vmem:[%s1 + $0x12d0] sm:$0xff]
      %v833 = vld [vmem:[%s1 + $0x12d8] sm:$0xff]
      %v834 = vld [vmem:[%s1 + $0x12e0] sm:$0xff]
      %v835 = vld [vmem:[%s1 + $0x12e8] sm:$0xff]
      %v836 = vld [vmem:[%s1 + $0x12f0] sm:$0xff]
      %v837 = vld [vmem:[%s1 + $0x12f8] sm:$0xff]
      %v838 = vld [vmem:[%s1 + $0x1300] sm:$0xff]
      %v839 = vld [vmem:[%s1 + $0x1308] sm:$0xff]
      %v840 = vld [vmem:[%s1 + $0x1310] sm:$0xff]
      %v841 = vld [vmem:[%s1 + $0x1318] sm:$0xff]
      %v842 = vld [vmem:[%s1 + $0x1320] sm:$0xff]
      %v843 = vld [vmem:[%s1 + $0x1328] sm:$0xff]
      %v844 = vld [vmem:[%s1 + $0x1330] sm:$0xff]
      %v845 = vld [vmem:[%s1 + $0x1338] sm:$0xff]
      %v846 = vld [vmem:[%s1 + $0x1340] sm:$0xff]
      %v847 = vld [vmem:[%s1 + $0x1348] sm:$0xff]
      %v848 = vld [vmem:[%s1 + $0x1350] sm:$0xff]
      %v849 = vld [vmem:[%s1 + $0x1358] sm:$0xff]
      %v850 = vld [vmem:[%s1 + $0x1360] sm:$0xff]
      %v851 = vld [vmem:[%s1 + $0x1368] sm:$0xff]
      %v852 = vld [vmem:[%s1 + $0x1370] sm:$0xff]
      %v853 = vld [vmem:[%s1 + $0x1378] sm:$0xff]
      %v854 = vld [vmem:[%s1 + $0x1380] sm:$0xff]
      %v855 = vld [vmem:[%s1 + $0x1388] sm:$0xff]
      %v856 = vld [vmem:[%s1 + $0x1390] sm:$0xff]
      %v857 = vld [vmem:[%s1 + $0x1398] sm:$0xff]
      %v858 = vld [vmem:[%s1 + $0x13a0] sm:$0xff]
      %v859 = vld [vmem:[%s1 + $0x13a8] sm:$0xff]
      %v860 = vld [vmem:[%s1 + $0x13b0] sm:$0xff]
      %v861 = vld [vmem:[%s1 + $0x13b8] sm:$0xff]
      %v862 = vld [vmem:[%s1 + $0x13c0] sm:$0xff]
      %v863 = vld [vmem:[%s1 + $0x13c8] sm:$0xff]
      %v864 = vld [vmem:[%s1 + $0x13d0] sm:$0xff]
      %v865 = vld [vmem:[%s1 + $0x13d8] sm:$0xff]
      %v866 = vld [vmem:[%s1 + $0x13e0] sm:$0xff]
      %v867 = vld [vmem:[%s1 + $0x13e8] sm:$0xff]
      %v868 = vld [vmem:[%s1 + $0x13f0] sm:$0xff]
      %v869 = vld [vmem:[%s1 + $0x13f8] sm:$0xff]
      %v870 = vld [vmem:[%s1 + $0x1400] sm:$0xff]
      %v871 = vld [vmem:[%s1 + $0x1408] sm:$0xff]
      %v872 = vld [vmem:[%s1 + $0x1410] sm:$0xff]
      %v873 = vld [vmem:[%s1 + $0x1418] sm:$0xff]
      %v874 = vld [vmem:[%s1 + $0x1420] sm:$0xff]
      %v875 = vld [vmem:[%s1 + $0x1428] sm:$0xff]
      %v876 = vld [vmem:[%s1 + $0x1430] sm:$0xff]
      %v877 = vld [vmem:[%s1 + $0x1438] sm:$0xff]
      %v878 = vld [vmem:[%s1 + $0x1440] sm:$0xff]
      %v879 = vld [vmem:[%s1 + $0x1448] sm:$0xff]
      %v880 = vld [vmem:[%s1 + $0x1450] sm:$0xff]
      %v881 = vld [vmem:[%s1 + $0x1458] sm:$0xff]
      %v882 = vld [vmem:[%s1 + $0x1460] sm:$0xff]
      %v883 = vld [vmem:[%s1 + $0x1468] sm:$0xff]
      %v884 = vld [vmem:[%s1 + $0x1470] sm:$0xff]
      %v885 = vld [vmem:[%s1 + $0x1478] sm:$0xff]
      %v886 = vld [vmem:[%s1 + $0x1480] sm:$0xff]
      %v887 = vld [vmem:[%s1 + $0x1488] sm:$0xff]
      %v888 = vld [vmem:[%s1 + $0x1490] sm:$0xff]
      %v889 = vld [vmem:[%s1 + $0x1498] sm:$0xff]
      %v890 = vld [vmem:[%s1 + $0x14a0] sm:$0xff]
      %v891 = vld [vmem:[%s1 + $0x14a8] sm:$0xff]
      %v892 = vld [vmem:[%s1 + $0x14b0] sm:$0xff]
      %v893 = vld [vmem:[%s1 + $0x14b8] sm:$0xff]
      %v894 = vld [vmem:[%s1 + $0x14c0] sm:$0xff]
      %v895 = vld [vmem:[%s1 + $0x14c8] sm:$0xff]
      %v896 = vld [vmem:[%s1 + $0x14d0] sm:$0xff]
      %v897 = vld [vmem:[%s1 + $0x14d8] sm:$0xff]
      %v898 = vld [vmem:[%s1 + $0x14e0] sm:$0xff]
      %v899 = vld [vmem:[%s1 + $0x14e8] sm:$0xff]
      %v900 = vld [vmem:[%s1 + $0x14f0] sm:$0xff]
      %v901 = vld [vmem:[%s1 + $0x14f8] sm:$0xff]
      %v902 = vld [vmem:[%s1 + $0x1500] sm:$0xff]
      %v903 = vld [vmem:[%s1 + $0x1508] sm:$0xff]
      %v904 = vld [vmem:[%s1 + $0x1510] sm:$0xff]
      %v905 = vld [vmem:[%s1 + $0x1518] sm:$0xff]
      %v906 = vld [vmem:[%s1 + $0x1520] sm:$0xff]
      %v907 = vld [vmem:[%s1 + $0x1528] sm:$0xff]
      %v908 = vld [vmem:[%s1 + $0x1530] sm:$0xff]
      %v909 = vld [vmem:[%s1 + $0x1538] sm:$0xff]
      %v910 = vld [vmem:[%s1 + $0x1540] sm:$0xff]
      %v911 = vld [vmem:[%s1 + $0x1548] sm:$0xff]
      %v912 = vld [vmem:[%s1 + $0x1550] sm:$0xff]
      %v913 = vld [vmem:[%s1 + $0x1558] sm:$0xff]
      %v914 = vld [vmem:[%s1 + $0x1560] sm:$0xff]
      %v915 = vld [vmem:[%s1 + $0x1568] sm:$0xff]
      %v916 = vld [vmem:[%s1 + $0x1570] sm:$0xff]
      %v917 = vld [vmem:[%s1 + $0x1578] sm:$0xff]
      %v918 = vld [vmem:[%s1 + $0x1580] sm:$0xff]
      %v919 = vld [vmem:[%s1 + $0x1588] sm:$0xff]
      %v920 = vld [vmem:[%s1 + $0x1590] sm:$0xff]
      %v921 = vld [vmem:[%s1 + $0x1598] sm:$0xff]
      %v922 = vld [vmem:[%s1 + $0x15a0] sm:$0xff]
      %v923 = vld [vmem:[%s1 + $0x15a8] sm:$0xff]
      %v924 = vld [vmem:[%s1 + $0x15b0] sm:$0xff]
      %v925 = vld [vmem:[%s1 + $0x15b8] sm:$0xff]
      %v926 = vld [vmem:[%s1 + $0x15c0] sm:$0xff]
      %v927 = vld [vmem:[%s1 + $0x15c8] sm:$0xff]
      %v928 = vld [vmem:[%s1 + $0x15d0] sm:$0xff]
      %v929 = vld [vmem:[%s1 + $0x15d8] sm:$0xff]
      %v930 = vld [vmem:[%s1 + $0x15e0] sm:$0xff]
      %v931 = vld [vmem:[%s1 + $0x15e8] sm:$0xff]
      %v932 = vld [vmem:[%s1 + $0x15f0] sm:$0xff]
      %v933 = vld [vmem:[%s1 + $0x15f8] sm:$0xff]
      %v934 = vld [vmem:[%s1 + $0x1600] sm:$0xff]
      %v935 = vld [vmem:[%s1 + $0x1608] sm:$0xff]
      %v936 = vld [vmem:[%s1 + $0x1610] sm:$0xff]
      %v937 = vld [vmem:[%s1 + $0x1618] sm:$0xff]
      %v938 = vld [vmem:[%s1 + $0x1620] sm:$0xff]
      %v939 = vld [vmem:[%s1 + $0x1628] sm:$0xff]
      %v940 = vld [vmem:[%s1 + $0x1630] sm:$0xff]
      %v941 = vld [vmem:[%s1 + $0x1638] sm:$0xff]
      %v942 = vld [vmem:[%s1 + $0x1640] sm:$0xff]
      %v943 = vld [vmem:[%s1 + $0x1648] sm:$0xff]
      %v944 = vld [vmem:[%s1 + $0x1650] sm:$0xff]
      %v945 = vld [vmem:[%s1 + $0x1658] sm:$0xff]
      %v946 = vld [vmem:[%s1 + $0x1660] sm:$0xff]
      %v947 = vld [vmem:[%s1 + $0x1668] sm:$0xff]
      %v948 = vld [vmem:[%s1 + $0x1670] sm:$0xff]
      %v949 = vld [vmem:[%s1 + $0x1678] sm:$0xff]
      %v950 = vld [vmem:[%s1 + $0x1680] sm:$0xff]
      %v951 = vld [vmem:[%s1 + $0x1688] sm:$0xff]
      %v952 = vld [vmem:[%s1 + $0x1690] sm:$0xff]
      %v953 = vld [vmem:[%s1 + $0x1698] sm:$0xff]
      %v954 = vld [vmem:[%s1 + $0x16a0] sm:$0xff]
      %v955 = vld [vmem:[%s1 + $0x16a8] sm:$0xff]
      %v956 = vld [vmem:[%s1 + $0x16b0] sm:$0xff]
      %v957 = vld [vmem:[%s1 + $0x16b8] sm:$0xff]
      %v958 = vld [vmem:[%s1 + $0x16c0] sm:$0xff]
      %v959 = vld [vmem:[%s1 + $0x16c8] sm:$0xff]
      %v960 = vld [vmem:[%s1 + $0x16d0] sm:$0xff]
      %v961 = vld [vmem:[%s1 + $0x16d8] sm:$0xff]
      %v962 = vld [vmem:[%s1 + $0x16e0] sm:$0xff]
      %v963 = vld [vmem:[%s1 + $0x16e8] sm:$0xff]
      %v964 = vld [vmem:[%s1 + $0x16f0] sm:$0xff]
      %v965 = vld [vmem:[%s1 + $0x16f8] sm:$0xff]
      %v966 = vld [vmem:[%s1 + $0x1700] sm:$0xff]
      %v967 = vld [vmem:[%s1 + $0x1708] sm:$0xff]
      %v968 = vld [vmem:[%s1 + $0x1710] sm:$0xff]
      %v969 = vld [vmem:[%s1 + $0x1718] sm:$0xff]
      %v970 = vld [vmem:[%s1 + $0x1720] sm:$0xff]
      %v971 = vld [vmem:[%s1 + $0x1728] sm:$0xff]
      %v972 = vld [vmem:[%s1 + $0x1730] sm:$0xff]
      %v973 = vld [vmem:[%s1 + $0x1738] sm:$0xff]
      %v974 = vld [vmem:[%s1 + $0x1740] sm:$0xff]
      %v975 = vld [vmem:[%s1 + $0x1748] sm:$0xff]
      %v976 = vld [vmem:[%s1 + $0x1750] sm:$0xff]
      %v977 = vld [vmem:[%s1 + $0x1758] sm:$0xff]
      %v978 = vld [vmem:[%s1 + $0x1760] sm:$0xff]
      %v979 = vld [vmem:[%s1 + $0x1768] sm:$0xff]
      %v980 = vld [vmem:[%s1 + $0x1770] sm:$0xff]
      %v981 = vld [vmem:[%s1 + $0x1778] sm:$0xff]
      %v982 = vld [vmem:[%s1 + $0x1780] sm:$0xff]
      %v983 = vld [vmem:[%s1 + $0x1788] sm:$0xff]
      %v984 = vld [vmem:[%s1 + $0x1790] sm:$0xff]
      %v985 = vld [vmem:[%s1 + $0x1798] sm:$0xff]
      %v986 = vld [vmem:[%s1 + $0x17a0] sm:$0xff]
      %v987 = vld [vmem:[%s1 + $0x17a8] sm:$0xff]
      %v988 = vld [vmem:[%s1 + $0x17b0] sm:$0xff]
      %v989 = vld [vmem:[%s1 + $0x17b8] sm:$0xff]
      %v990 = vld [vmem:[%s1 + $0x17c0] sm:$0xff]
      %v991 = vld [vmem:[%s1 + $0x17c8] sm:$0xff]
      %v992 = vld [vmem:[%s1 + $0x17d0] sm:$0xff]
      %v993 = vld [vmem:[%s1 + $0x17d8] sm:$0xff]
      %v994 = vld [vmem:[%s1 + $0x17e0] sm:$0xff]
      %v995 = vld [vmem:[%s1 + $0x17e8] sm:$0xff]
      %v996 = vld [vmem:[%s1 + $0x17f0] sm:$0xff]
      %v997 = vld [vmem:[%s1 + $0x17f8] sm:$0xff]
      %v998 = vld [vmem:[%s1 + $0x1800] sm:$0xff]
      %v999 = vld [vmem:[%s1 + $0x1808] sm:$0xff]
      %v1000 = vld [vmem:[%s1 + $0x1810] sm:$0xff]
      %v1001 = vld [vmem:[%s1 + $0x1818] sm:$0xff]
      %v1002 = vld [vmem:[%s1 + $0x1820] sm:$0xff]
      %v1003 = vld [vmem:[%s1 + $0x1828] sm:$0xff]
      %v1004 = vld [vmem:[%s1 + $0x1830] sm:$0xff]
      %v1005 = vld [vmem:[%s1 + $0x1838] sm:$0xff]
      %v1006 = vld [vmem:[%s1 + $0x1840] sm:$0xff]
      %v1007 = vld [vmem:[%s1 + $0x1848] sm:$0xff]
      %v1008 = vld [vmem:[%s1 + $0x1850] sm:$0xff]
      %v1009 = vld [vmem:[%s1 + $0x1858] sm:$0xff]
      %v1010 = vld [vmem:[%s1 + $0x1860] sm:$0xff]
      %v1011 = vld [vmem:[%s1 + $0x1868] sm:$0xff]
      %v1012 = vld [vmem:[%s1 + $0x1870] sm:$0xff]
      %v1013 = vld [vmem:[%s1 + $0x1878] sm:$0xff]
      %v1014 = vld [vmem:[%s1 + $0x1880] sm:$0xff]
      %v1015 = vld [vmem:[%s1 + $0x1888] sm:$0xff]
      %v1016 = vld [vmem:[%s1 + $0x1890] sm:$0xff]
      %v1017 = vld [vmem:[%s1 + $0x1898] sm:$0xff]
      %v1018 = vld [vmem:[%s1 + $0x18a0] sm:$0xff]
      %v1019 = vld [vmem:[%s1 + $0x18a8] sm:$0xff]
      %v1020 = vld [vmem:[%s1 + $0x18b0] sm:$0xff]
      %v1021 = vld [vmem:[%s1 + $0x18b8] sm:$0xff]
      %v1022 = vld [vmem:[%s1 + $0x18c0] sm:$0xff]
      %v1023 = vld [vmem:[%s1 + $0x18c8] sm:$0xff]
      %v1024 = vld [vmem:[%s1 + $0x18d0] sm:$0xff]
      %v1025 = vld [vmem:[%s1 + $0x18d8] sm:$0xff]
      %v1026 = vld [vmem:[%s1 + $0x18e0] sm:$0xff]
      %v1027 = vld [vmem:[%s1 + $0x18e8] sm:$0xff]
      %v1028 = vld [vmem:[%s1 + $0x18f0] sm:$0xff]
      %v1029 = vld [vmem:[%s1 + $0x18f8] sm:$0xff]
      %v1030 = vld [vmem:[%s1 + $0x1900] sm:$0xff]
      %v1031 = vld [vmem:[%s1 + $0x1908] sm:$0xff]
      %v1032 = vld [vmem:[%s1 + $0x1910] sm:$0xff]
      %v1033 = vld [vmem:[%s1 + $0x1918] sm:$0xff]
      %v1034 = vld [vmem:[%s1 + $0x1920] sm:$0xff]
      %v1035 = vld [vmem:[%s1 + $0x1928] sm:$0xff]
      %v1036 = vld [vmem:[%s1 + $0x1930] sm:$0xff]
      %v1037 = vld [vmem:[%s1 + $0x1938] sm:$0xff]
      %v1038 = vld [vmem:[%s1 + $0x1940] sm:$0xff]
      %v1039 = vld [vmem:[%s1 + $0x1948] sm:$0xff]
      %v1040 = vld [vmem:[%s1 + $0x1950] sm:$0xff]
      %v1041 = vld [vmem:[%s1 + $0x1958] sm:$0xff]
      %v1042 = vld [vmem:[%s1 + $0x1960] sm:$0xff]
      %v1043 = vld [vmem:[%s1 + $0x1968] sm:$0xff]
      %v1044 = vld [vmem:[%s1 + $0x1970] sm:$0xff]
      %v1045 = vld [vmem:[%s1 + $0x1978] sm:$0xff]
      %v1046 = vld [vmem:[%s1 + $0x1980] sm:$0xff]
      %v1047 = vld [vmem:[%s1 + $0x1988] sm:$0xff]
      %v1048 = vld [vmem:[%s1 + $0x1990] sm:$0xff]
      %v1049 = vld [vmem:[%s1 + $0x1998] sm:$0xff]
      %v1050 = vld [vmem:[%s1 + $0x19a0] sm:$0xff]
      %v1051 = vld [vmem:[%s1 + $0x19a8] sm:$0xff]
      %v1052 = vld [vmem:[%s1 + $0x19b0] sm:$0xff]
      %v1053 = vld [vmem:[%s1 + $0x19b8] sm:$0xff]
      %v1054 = vld [vmem:[%s1 + $0x19c0] sm:$0xff]
      %v1055 = vld [vmem:[%s1 + $0x19c8] sm:$0xff]
      %v1056 = vld [vmem:[%s1 + $0x19d0] sm:$0xff]
      %v1057 = vld [vmem:[%s1 + $0x19d8] sm:$0xff]
      %v1058 = vld [vmem:[%s1 + $0x19e0] sm:$0xff]
      %v1059 = vld [vmem:[%s1 + $0x19e8] sm:$0xff]
      %v1060 = vld [vmem:[%s1 + $0x19f0] sm:$0xff]
      %v1061 = vld [vmem:[%s1 + $0x19f8] sm:$0xff]
      %v1062 = vld [vmem:[%s1 + $0x1a00] sm:$0xff]
      %v1063 = vld [vmem:[%s1 + $0x1a08] sm:$0xff]
      %v1064 = vld [vmem:[%s1 + $0x1a10] sm:$0xff]
      %v1065 = vld [vmem:[%s1 + $0x1a18] sm:$0xff]
      %v1066 = vld [vmem:[%s1 + $0x1a20] sm:$0xff]
      %v1067 = vld [vmem:[%s1 + $0x1a28] sm:$0xff]
      %v1068 = vld [vmem:[%s1 + $0x1a30] sm:$0xff]
      %v1069 = vld [vmem:[%s1 + $0x1a38] sm:$0xff]
      %v1070 = vld [vmem:[%s1 + $0x1a40] sm:$0xff]
      %v1071 = vld [vmem:[%s1 + $0x1a48] sm:$0xff]
      %v1072 = vld [vmem:[%s1 + $0x1a50] sm:$0xff]
      %v1073 = vld [vmem:[%s1 + $0x1a58] sm:$0xff]
      %v1074 = vld [vmem:[%s1 + $0x1a60] sm:$0xff]
      %v1075 = vld [vmem:[%s1 + $0x1a68] sm:$0xff]
      %v1076 = vld [vmem:[%s1 + $0x1a70] sm:$0xff]
      %v1077 = vld [vmem:[%s1 + $0x1a78] sm:$0xff]
      %v1078 = vld [vmem:[%s1 + $0x1a80] sm:$0xff]
      %v1079 = vld [vmem:[%s1 + $0x1a88] sm:$0xff]
      %v1080 = vld [vmem:[%s1 + $0x1a90] sm:$0xff]
      %v1081 = vld [vmem:[%s1 + $0x1a98] sm:$0xff]
      %v1082 = vld [vmem:[%s1 + $0x1aa0] sm:$0xff]
      %v1083 = vld [vmem:[%s1 + $0x1aa8] sm:$0xff]
      %v1084 = vld [vmem:[%s1 + $0x1ab0] sm:$0xff]
      %v1085 = vld [vmem:[%s1 + $0x1ab8] sm:$0xff]
      %v1086 = vld [vmem:[%s1 + $0x1ac0] sm:$0xff]
      %v1087 = vld [vmem:[%s1 + $0x1ac8] sm:$0xff]
      %v1088 = vld [vmem:[%s1 + $0x1ad0] sm:$0xff]
      %v1089 = vld [vmem:[%s1 + $0x1ad8] sm:$0xff]
      %v1090 = vld [vmem:[%s1 + $0x1ae0] sm:$0xff]
      %v1091 = vld [vmem:[%s1 + $0x1ae8] sm:$0xff]
      %v1092 = vld [vmem:[%s1 + $0x1af0] sm:$0xff]
      %v1093 = vld [vmem:[%s1 + $0x1af8] sm:$0xff]
      %v1094 = vld [vmem:[%s1 + $0x1b00] sm:$0xff]
      %v1095 = vld [vmem:[%s1 + $0x1b08] sm:$0xff]
      %v1096 = vld [vmem:[%s1 + $0x1b10] sm:$0xff]
      %v1097 = vld [vmem:[%s1 + $0x1b18] sm:$0xff]
      %v1098 = vld [vmem:[%s1 + $0x1b20] sm:$0xff]
      %v1099 = vld [vmem:[%s1 + $0x1b28] sm:$0xff]
      %v1100 = vld [vmem:[%s1 + $0x1b30] sm:$0xff]
      %v1101 = vld [vmem:[%s1 + $0x1b38] sm:$0xff]
      %v1102 = vld [vmem:[%s1 + $0x1b40] sm:$0xff]
      %v1103 = vld [vmem:[%s1 + $0x1b48] sm:$0xff]
      %v1104 = vld [vmem:[%s1 + $0x1b50] sm:$0xff]
      %v1105 = vld [vmem:[%s1 + $0x1b58] sm:$0xff]
      %v1106 = vld [vmem:[%s1 + $0x1b60] sm:$0xff]
      %v1107 = vld [vmem:[%s1 + $0x1b68] sm:$0xff]
      %v1108 = vld [vmem:[%s1 + $0x1b70] sm:$0xff]
      %v1109 = vld [vmem:[%s1 + $0x1b78] sm:$0xff]
      %v1110 = vld [vmem:[%s1 + $0x1b80] sm:$0xff]
      %v1111 = vld [vmem:[%s1 + $0x1b88] sm:$0xff]
      %v1112 = vld [vmem:[%s1 + $0x1b90] sm:$0xff]
      %v1113 = vld [vmem:[%s1 + $0x1b98] sm:$0xff]
      %v1114 = vld [vmem:[%s1 + $0x1ba0] sm:$0xff]
      %v1115 = vld [vmem:[%s1 + $0x1ba8] sm:$0xff]
      %v1116 = vld [vmem:[%s1 + $0x1bb0] sm:$0xff]
      %v1117 = vld [vmem:[%s1 + $0x1bb8] sm:$0xff]
      %v1118 = vld [vmem:[%s1 + $0x1bc0] sm:$0xff]
      %v1119 = vld [vmem:[%s1 + $0x1bc8] sm:$0xff]
      %v1120 = vld [vmem:[%s1 + $0x1bd0] sm:$0xff]
      %v1121 = vld [vmem:[%s1 + $0x1bd8] sm:$0xff]
      %v1122 = vld [vmem:[%s1 + $0x1be0] sm:$0xff]
      %v1123 = vld [vmem:[%s1 + $0x1be8] sm:$0xff]
      %v1124 = vld [vmem:[%s1 + $0x1bf0] sm:$0xff]
      %v1125 = vld [vmem:[%s1 + $0x1bf8] sm:$0xff]
      %v1126 = vld [vmem:[%s1 + $0x1c00] sm:$0xff]
      %v1127 = vld [vmem:[%s1 + $0x1c08] sm:$0xff]
      %v1128 = vld [vmem:[%s1 + $0x1c10] sm:$0xff]
      %v1129 = vld [vmem:[%s1 + $0x1c18] sm:$0xff]
      %v1130 = vld [vmem:[%s1 + $0x1c20] sm:$0xff]
      %v1131 = vld [vmem:[%s1 + $0x1c28] sm:$0xff]
      %v1132 = vld [vmem:[%s1 + $0x1c30] sm:$0xff]
      %v1133 = vld [vmem:[%s1 + $0x1c38] sm:$0xff]
      %v1134 = vld [vmem:[%s1 + $0x1c40] sm:$0xff]
      %v1135 = vld [vmem:[%s1 + $0x1c48] sm:$0xff]
      %v1136 = vld [vmem:[%s1 + $0x1c50] sm:$0xff]
      %v1137 = vld [vmem:[%s1 + $0x1c58] sm:$0xff]
      %v1138 = vld [vmem:[%s1 + $0x1c60] sm:$0xff]
      %v1139 = vld [vmem:[%s1 + $0x1c68] sm:$0xff]
      %v1140 = vld [vmem:[%s1 + $0x1c70] sm:$0xff]
      %v1141 = vld [vmem:[%s1 + $0x1c78] sm:$0xff]
      %v1142 = vld [vmem:[%s1 + $0x1c80] sm:$0xff]
      %v1143 = vld [vmem:[%s1 + $0x1c88] sm:$0xff]
      %v1144 = vld [vmem:[%s1 + $0x1c90] sm:$0xff]
      %v1145 = vld [vmem:[%s1 + $0x1c98] sm:$0xff]
      %v1146 = vld [vmem:[%s1 + $0x1ca0] sm:$0xff]
      %v1147 = vld [vmem:[%s1 + $0x1ca8] sm:$0xff]
      %v1148 = vld [vmem:[%s1 + $0x1cb0] sm:$0xff]
      %v1149 = vld [vmem:[%s1 + $0x1cb8] sm:$0xff]
      %v1150 = vld [vmem:[%s1 + $0x1cc0] sm:$0xff]
      %v1151 = vld [vmem:[%s1 + $0x1cc8] sm:$0xff]
      %v1152 = vld [vmem:[%s1 + $0x1cd0] sm:$0xff]
      %v1153 = vld [vmem:[%s1 + $0x1cd8] sm:$0xff]
      %v1154 = vld [vmem:[%s1 + $0x1ce0] sm:$0xff]
      %v1155 = vld [vmem:[%s1 + $0x1ce8] sm:$0xff]
      %v1156 = vld [vmem:[%s1 + $0x1cf0] sm:$0xff]
      %v1157 = vld [vmem:[%s1 + $0x1cf8] sm:$0xff]
      %v1158 = vld [vmem:[%s1 + $0x1d00] sm:$0xff]
      %v1159 = vld [vmem:[%s1 + $0x1d08] sm:$0xff]
      %v1160 = vld [vmem:[%s1 + $0x1d10] sm:$0xff]
      %v1161 = vld [vmem:[%s1 + $0x1d18] sm:$0xff]
      %v1162 = vld [vmem:[%s1 + $0x1d20] sm:$0xff]
      %v1163 = vld [vmem:[%s1 + $0x1d28] sm:$0xff]
      %v1164 = vld [vmem:[%s1 + $0x1d30] sm:$0xff]
      %v1165 = vld [vmem:[%s1 + $0x1d38] sm:$0xff]
      %v1166 = vld [vmem:[%s1 + $0x1d40] sm:$0xff]
      %v1167 = vld [vmem:[%s1 + $0x1d48] sm:$0xff]
      %v1168 = vld [vmem:[%s1 + $0x1d50] sm:$0xff]
      %v1169 = vld [vmem:[%s1 + $0x1d58] sm:$0xff]
      %v1170 = vld [vmem:[%s1 + $0x1d60] sm:$0xff]
      %v1171 = vld [vmem:[%s1 + $0x1d68] sm:$0xff]
      %v1172 = vld [vmem:[%s1 + $0x1d70] sm:$0xff]
      %v1173 = vld [vmem:[%s1 + $0x1d78] sm:$0xff]
      %v1174 = vld [vmem:[%s1 + $0x1d80] sm:$0xff]
      %v1175 = vld [vmem:[%s1 + $0x1d88] sm:$0xff]
      %v1176 = vld [vmem:[%s1 + $0x1d90] sm:$0xff]
      %v1177 = vld [vmem:[%s1 + $0x1d98] sm:$0xff]
      %v1178 = vld [vmem:[%s1 + $0x1da0] sm:$0xff]
      %v1179 = vld [vmem:[%s1 + $0x1da8] sm:$0xff]
      %v1180 = vld [vmem:[%s1 + $0x1db0] sm:$0xff]
      %v1181 = vld [vmem:[%s1 + $0x1db8] sm:$0xff]
      %v1182 = vld [vmem:[%s1 + $0x1dc0] sm:$0xff]
      %v1183 = vld [vmem:[%s1 + $0x1dc8] sm:$0xff]
      %v1184 = vld [vmem:[%s1 + $0x1dd0] sm:$0xff]
      %v1185 = vld [vmem:[%s1 + $0x1dd8] sm:$0xff]
      %v1186 = vld [vmem:[%s1 + $0x1de0] sm:$0xff]
      %v1187 = vld [vmem:[%s1 + $0x1de8] sm:$0xff]
      %v1188 = vld [vmem:[%s1 + $0x1df0] sm:$0xff]
      %v1189 = vld [vmem:[%s1 + $0x1df8] sm:$0xff]
      %v1190 = vld [vmem:[%s1 + $0x1e00] sm:$0xff]
      %v1191 = vld [vmem:[%s1 + $0x1e08] sm:$0xff]
      %v1192 = vld [vmem:[%s1 + $0x1e10] sm:$0xff]
      %v1193 = vld [vmem:[%s1 + $0x1e18] sm:$0xff]
      %v1194 = vld [vmem:[%s1 + $0x1e20] sm:$0xff]
      %v1195 = vld [vmem:[%s1 + $0x1e28] sm:$0xff]
      %v1196 = vld [vmem:[%s1 + $0x1e30] sm:$0xff]
      %v1197 = vld [vmem:[%s1 + $0x1e38] sm:$0xff]
      %v1198 = vld [vmem:[%s1 + $0x1e40] sm:$0xff]
      %v1199 = vld [vmem:[%s1 + $0x1e48] sm:$0xff]
      %v1200 = vld [vmem:[%s1 + $0x1e50] sm:$0xff]
      %v1201 = vld [vmem:[%s1 + $0x1e58] sm:$0xff]
      %v1202 = vld [vmem:[%s1 + $0x1e60] sm:$0xff]
      %v1203 = vld [vmem:[%s1 + $0x1e68] sm:$0xff]
      %v1204 = vld [vmem:[%s1 + $0x1e70] sm:$0xff]
      %v1205 = vld [vmem:[%s1 + $0x1e78] sm:$0xff]
      %v1206 = vld [vmem:[%s1 + $0x1e80] sm:$0xff]
      %v1207 = vld [vmem:[%s1 + $0x1e88] sm:$0xff]
      %v1208 = vld [vmem:[%s1 + $0x1e90] sm:$0xff]
      %v1209 = vld [vmem:[%s1 + $0x1e98] sm:$0xff]
      %v1210 = vld [vmem:[%s1 + $0x1ea0] sm:$0xff]
      %v1211 = vld [vmem:[%s1 + $0x1ea8] sm:$0xff]
      %v1212 = vld [vmem:[%s1 + $0x1eb0] sm:$0xff]
      %v1213 = vld [vmem:[%s1 + $0x1eb8] sm:$0xff]
      %v1214 = vld [vmem:[%s1 + $0x1ec0] sm:$0xff]
      %v1215 = vld [vmem:[%s1 + $0x1ec8] sm:$0xff]
      %v1216 = vld [vmem:[%s1 + $0x1ed0] sm:$0xff]
      %v1217 = vld [vmem:[%s1 + $0x1ed8] sm:$0xff]
      %v1218 = vld [vmem:[%s1 + $0x1ee0] sm:$0xff]
      %v1219 = vld [vmem:[%s1 + $0x1ee8] sm:$0xff]
      %v1220 = vld [vmem:[%s1 + $0x1ef0] sm:$0xff]
      %v1221 = vld [vmem:[%s1 + $0x1ef8] sm:$0xff]
      %v1222 = vld [vmem:[%s1 + $0x1f00] sm:$0xff]
      %v1223 = vld [vmem:[%s1 + $0x1f08] sm:$0xff]
      %v1224 = vld [vmem:[%s1 + $0x1f10] sm:$0xff]
      %v1225 = vld [vmem:[%s1 + $0x1f18] sm:$0xff]
      %v1226 = vld [vmem:[%s1 + $0x1f20] sm:$0xff]
      %v1227 = vld [vmem:[%s1 + $0x1f28] sm:$0xff]
      %v1228 = vld [vmem:[%s1 + $0x1f30] sm:$0xff]
      %v1229 = vld [vmem:[%s1 + $0x1f38] sm:$0xff]
      %v1230 = vld [vmem:[%s1 + $0x1f40] sm:$0xff]
      %v1231 = vld [vmem:[%s1 + $0x1f48] sm:$0xff]
      %v1232 = vld [vmem:[%s1 + $0x1f50] sm:$0xff]
      %v1233 = vld [vmem:[%s1 + $0x1f58] sm:$0xff]
      %v1234 = vld [vmem:[%s1 + $0x1f60] sm:$0xff]
      %v1235 = vld [vmem:[%s1 + $0x1f68] sm:$0xff]
      %v1236 = vld [vmem:[%s1 + $0x1f70] sm:$0xff]
      %v1237 = vld [vmem:[%s1 + $0x1f78] sm:$0xff]
      %v1238 = vld [vmem:[%s1 + $0x1f80] sm:$0xff]
      %v1239 = vld [vmem:[%s1 + $0x1f88] sm:$0xff]
      %v1240 = vld [vmem:[%s1 + $0x1f90] sm:$0xff]
      %v1241 = vld [vmem:[%s1 + $0x1f98] sm:$0xff]
      %v1242 = vld [vmem:[%s1 + $0x1fa0] sm:$0xff]
      %v1243 = vld [vmem:[%s1 + $0x1fa8] sm:$0xff]
      %v1244 = vld [vmem:[%s1 + $0x1fb0] sm:$0xff]
      %v1245 = vld [vmem:[%s1 + $0x1fb8] sm:$0xff]
      %v1246 = vld [vmem:[%s1 + $0x1fc0] sm:$0xff]
      %v1247 = vld [vmem:[%s1 + $0x1fc8] sm:$0xff]
      %v1248 = vld [vmem:[%s1 + $0x1fd0] sm:$0xff]
      %v1249 = vld [vmem:[%s1 + $0x1fd8] sm:$0xff]
      %v1250 = vld [vmem:[%s1 + $0x1fe0] sm:$0xff]
      %v1251 = vld [vmem:[%s1 + $0x1fe8] sm:$0xff]
      %v1252 = vld [vmem:[%s1 + $0x1ff0] sm:$0xff]
      %v1253 = vld [vmem:[%s1 + $0x1ff8] sm:$0xff]
      %v1254 = vld [vmem:[%s1 + $0x2000] sm:$0xff]
      %v1255 = vld [vmem:[%s1 + $0x2008] sm:$0xff]
      %v1256 = vld [vmem:[%s1 + $0x2010] sm:$0xff]
      %v1257 = vld [vmem:[%s1 + $0x2018] sm:$0xff]
      %v1258 = vld [vmem:[%s1 + $0x2020] sm:$0xff]
      %v1259 = vld [vmem:[%s1 + $0x2028] sm:$0xff]
      %v1260 = vld [vmem:[%s1 + $0x2030] sm:$0xff]
      %v1261 = vld [vmem:[%s1 + $0x2038] sm:$0xff]
      %v1262 = vld [vmem:[%s1 + $0x2040] sm:$0xff]
      %v1263 = vld [vmem:[%s1 + $0x2048] sm:$0xff]
      %v1264 = vld [vmem:[%s1 + $0x2050] sm:$0xff]
      %v1265 = vld [vmem:[%s1 + $0x2058] sm:$0xff]
      %v1266 = vld [vmem:[%s1 + $0x2060] sm:$0xff]
      %v1267 = vld [vmem:[%s1 + $0x2068] sm:$0xff]
      %v1268 = vld [vmem:[%s1 + $0x2070] sm:$0xff]
      %v1269 = vld [vmem:[%s1 + $0x2078] sm:$0xff]
      %v1270 = vld [vmem:[%s1 + $0x2080] sm:$0xff]
      %v1271 = vld [vmem:[%s1 + $0x2088] sm:$0xff]
      %v1272 = vld [vmem:[%s1 + $0x2090] sm:$0xff]
      %v1273 = vld [vmem:[%s1 + $0x2098] sm:$0xff]
      %v1274 = vld [vmem:[%s1 + $0x20a0] sm:$0xff]
      %v1275 = vld [vmem:[%s1 + $0x20a8] sm:$0xff]
      %v1276 = vld [vmem:[%s1 + $0x20b0] sm:$0xff]
      %v1277 = vld [vmem:[%s1 + $0x20b8] sm:$0xff]
      %v1278 = vld [vmem:[%s1 + $0x20c0] sm:$0xff]
      %v1279 = vld [vmem:[%s1 + $0x20c8] sm:$0xff]
      %v1280 = vld [vmem:[%s1 + $0x20d0] sm:$0xff]
      %v1281 = vld [vmem:[%s1 + $0x20d8] sm:$0xff]
      %v1282 = vld [vmem:[%s1 + $0x20e0] sm:$0xff]
      %v1283 = vld [vmem:[%s1 + $0x20e8] sm:$0xff]
      %v1284 = vld [vmem:[%s1 + $0x20f0] sm:$0xff]
      %v1285 = vld [vmem:[%s1 + $0x20f8] sm:$0xff]
      %v1286 = vld [vmem:[%s1 + $0x2100] sm:$0xff]
      %v1287 = vld [vmem:[%s1 + $0x2108] sm:$0xff]
      %v1288 = vld [vmem:[%s1 + $0x2110] sm:$0xff]
      %v1289 = vld [vmem:[%s1 + $0x2118] sm:$0xff]
      %v1290 = vld [vmem:[%s1 + $0x2120] sm:$0xff]
      %v1291 = vld [vmem:[%s1 + $0x2128] sm:$0xff]
      %v1292 = vld [vmem:[%s1 + $0x2130] sm:$0xff]
      %v1293 = vld [vmem:[%s1 + $0x2138] sm:$0xff]
      %v1294 = vld [vmem:[%s1 + $0x2140] sm:$0xff]
      %v1295 = vld [vmem:[%s1 + $0x2148] sm:$0xff]
      %v1296 = vld [vmem:[%s1 + $0x2150] sm:$0xff]
      %v1297 = vld [vmem:[%s1 + $0x2158] sm:$0xff]
      %v1298 = vld [vmem:[%s1 + $0x2160] sm:$0xff]
      %v1299 = vld [vmem:[%s1 + $0x2168] sm:$0xff]
      %v1300 = vld [vmem:[%s1 + $0x2170] sm:$0xff]
      %v1301 = vld [vmem:[%s1 + $0x2178] sm:$0xff]
      %v1302 = vld [vmem:[%s1 + $0x2180] sm:$0xff]
      %v1303 = vld [vmem:[%s1 + $0x2188] sm:$0xff]
      %v1304 = vld [vmem:[%s1 + $0x2190] sm:$0xff]
      %v1305 = vld [vmem:[%s1 + $0x2198] sm:$0xff]
      %v1306 = vld [vmem:[%s1 + $0x21a0] sm:$0xff]
      %v1307 = vld [vmem:[%s1 + $0x21a8] sm:$0xff]
      %v1308 = vld [vmem:[%s1 + $0x21b0] sm:$0xff]
      %v1309 = vld [vmem:[%s1 + $0x21b8] sm:$0xff]
      %v1310 = vld [vmem:[%s1 + $0x21c0] sm:$0xff]
      %v1311 = vld [vmem:[%s1 + $0x21c8] sm:$0xff]
      %v1312 = vld [vmem:[%s1 + $0x21d0] sm:$0xff]
      %v1313 = vld [vmem:[%s1 + $0x21d8] sm:$0xff]
      %v1314 = vld [vmem:[%s1 + $0x21e0] sm:$0xff]
      %v1315 = vld [vmem:[%s1 + $0x21e8] sm:$0xff]
      %v1316 = vld [vmem:[%s1 + $0x21f0] sm:$0xff]
      %v1317 = vld [vmem:[%s1 + $0x21f8] sm:$0xff]
      %v1318 = vld [vmem:[%s1 + $0x2200] sm:$0xff]
      %v1319 = vld [vmem:[%s1 + $0x2208] sm:$0xff]
      %v1320 = vld [vmem:[%s1 + $0x2210] sm:$0xff]
      %v1321 = vld [vmem:[%s1 + $0x2218] sm:$0xff]
      %v1322 = vld [vmem:[%s1 + $0x2220] sm:$0xff]
      %v1323 = vld [vmem:[%s1 + $0x2228] sm:$0xff]
      %v1324 = vld [vmem:[%s1 + $0x2230] sm:$0xff]
      %v1325 = vld [vmem:[%s1 + $0x2238] sm:$0xff]
      %v1326 = vld [vmem:[%s1 + $0x2240] sm:$0xff]
      %v1327 = vld [vmem:[%s1 + $0x2248] sm:$0xff]
      %v1328 = vld [vmem:[%s1 + $0x2250] sm:$0xff]
      %v1329 = vld [vmem:[%s1 + $0x2258] sm:$0xff]
      %v1330 = vld [vmem:[%s1 + $0x2260] sm:$0xff]
      %v1331 = vld [vmem:[%s1 + $0x2268] sm:$0xff]
      %v1332 = vld [vmem:[%s1 + $0x2270] sm:$0xff]
      %v1333 = vld [vmem:[%s1 + $0x2278] sm:$0xff]
      %v1334 = vld [vmem:[%s1 + $0x2280] sm:$0xff]
      %v1335 = vld [vmem:[%s1 + $0x2288] sm:$0xff]
      %v1336 = vld [vmem:[%s1 + $0x2290] sm:$0xff]
      %v1337 = vld [vmem:[%s1 + $0x2298] sm:$0xff]
      %v1338 = vld [vmem:[%s1 + $0x22a0] sm:$0xff]
      %v1339 = vld [vmem:[%s1 + $0x22a8] sm:$0xff]
      %v1340 = vld [vmem:[%s1 + $0x22b0] sm:$0xff]
      %v1341 = vld [vmem:[%s1 + $0x22b8] sm:$0xff]
      %v1342 = vld [vmem:[%s1 + $0x22c0] sm:$0xff]
      %v1343 = vld [vmem:[%s1 + $0x22c8] sm:$0xff]
      %v1344 = vld [vmem:[%s1 + $0x22d0] sm:$0xff]
      %v1345 = vld [vmem:[%s1 + $0x22d8] sm:$0xff]
      %v1346 = vld [vmem:[%s1 + $0x22e0] sm:$0xff]
      %v1347 = vld [vmem:[%s1 + $0x22e8] sm:$0xff]
      %v1348 = vld [vmem:[%s1 + $0x22f0] sm:$0xff]
      %v1349 = vld [vmem:[%s1 + $0x22f8] sm:$0xff]
      %v1350 = vld [vmem:[%s1 + $0x2300] sm:$0xff]
      %v1351 = vld [vmem:[%s1 + $0x2308] sm:$0xff]
      %v1352 = vld [vmem:[%s1 + $0x2310] sm:$0xff]
      %v1353 = vld [vmem:[%s1 + $0x2318] sm:$0xff]
      %v1354 = vld [vmem:[%s1 + $0x2320] sm:$0xff]
      %v1355 = vld [vmem:[%s1 + $0x2328] sm:$0xff]
      %v1356 = vld [vmem:[%s1 + $0x2330] sm:$0xff]
      %v1357 = vld [vmem:[%s1 + $0x2338] sm:$0xff]
      %v1358 = vld [vmem:[%s1 + $0x2340] sm:$0xff]
      %v1359 = vld [vmem:[%s1 + $0x2348] sm:$0xff]
      %v1360 = vld [vmem:[%s1 + $0x2350] sm:$0xff]
      %v1361 = vld [vmem:[%s1 + $0x2358] sm:$0xff]
      %v1362 = vld [vmem:[%s1 + $0x2360] sm:$0xff]
      %v1363 = vld [vmem:[%s1 + $0x2368] sm:$0xff]
      %v1364 = vld [vmem:[%s1 + $0x2370] sm:$0xff]
      %v1365 = vld [vmem:[%s1 + $0x2378] sm:$0xff]
      %v1366 = vld [vmem:[%s1 + $0x2380] sm:$0xff]
      %v1367 = vld [vmem:[%s1 + $0x2388] sm:$0xff]
      %v1368 = vld [vmem:[%s1 + $0x2390] sm:$0xff]
      %v1369 = vld [vmem:[%s1 + $0x2398] sm:$0xff]
      %v1370 = vld [vmem:[%s1 + $0x23a0] sm:$0xff]
      %v1371 = vld [vmem:[%s1 + $0x23a8] sm:$0xff]
      %v1372 = vld [vmem:[%s1 + $0x23b0] sm:$0xff]
      %v1373 = vld [vmem:[%s1 + $0x23b8] sm:$0xff]
      %v1374 = vld [vmem:[%s1 + $0x23c0] sm:$0xff]
      %v1375 = vld [vmem:[%s1 + $0x23c8] sm:$0xff]
      %v1376 = vld [vmem:[%s1 + $0x23d0] sm:$0xff]
      %v1377 = vld [vmem:[%s1 + $0x23d8] sm:$0xff]
      %v1378 = vld [vmem:[%s1 + $0x23e0] sm:$0xff]
      %v1379 = vld [vmem:[%s1 + $0x23e8] sm:$0xff]
      %v1380 = vld [vmem:[%s1 + $0x23f0] sm:$0xff]
      %v1381 = vld [vmem:[%s1 + $0x23f8] sm:$0xff]
      %v1382 = vld [vmem:[%s1 + $0x2400] sm:$0xff]
      %v1383 = vld [vmem:[%s1 + $0x2408] sm:$0xff]
      %v1384 = vld [vmem:[%s1 + $0x2410] sm:$0xff]
      %v1385 = vld [vmem:[%s1 + $0x2418] sm:$0xff]
      %v1386 = vld [vmem:[%s1 + $0x2420] sm:$0xff]
      %v1387 = vld [vmem:[%s1 + $0x2428] sm:$0xff]
      %v1388 = vld [vmem:[%s1 + $0x2430] sm:$0xff]
      %v1389 = vld [vmem:[%s1 + $0x2438] sm:$0xff]
      %v1390 = vld [vmem:[%s1 + $0x2440] sm:$0xff]
      %v1391 = vld [vmem:[%s1 + $0x2448] sm:$0xff]
      %v1392 = vld [vmem:[%s1 + $0x2450] sm:$0xff]
      %v1393 = vld [vmem:[%s1 + $0x2458] sm:$0xff]
      %v1394 = vld [vmem:[%s1 + $0x2460] sm:$0xff]
      %v1395 = vld [vmem:[%s1 + $0x2468] sm:$0xff]
      %v1396 = vld [vmem:[%s1 + $0x2470] sm:$0xff]
      %v1397 = vld [vmem:[%s1 + $0x2478] sm:$0xff]
      %v1398 = vld [vmem:[%s1 + $0x2480] sm:$0xff]
      %v1399 = vld [vmem:[%s1 + $0x2488] sm:$0xff]
      %v1400 = vld [vmem:[%s1 + $0x2490] sm:$0xff]
      %v1401 = vld [vmem:[%s1 + $0x2498] sm:$0xff]
      %v1402 = vld [vmem:[%s1 + $0x24a0] sm:$0xff]
      %v1403 = vld [vmem:[%s1 + $0x24a8] sm:$0xff]
      %v1404 = vld [vmem:[%s1 + $0x24b0] sm:$0xff]
      %v1405 = vld [vmem:[%s1 + $0x24b8] sm:$0xff]
      %v1406 = vld [vmem:[%s1 + $0x24c0] sm:$0xff]
      %v1407 = vld [vmem:[%s1 + $0x24c8] sm:$0xff]
      %v1408 = vld [vmem:[%s1 + $0x24d0] sm:$0xff]
      %v1409 = vld [vmem:[%s1 + $0x24d8] sm:$0xff]
      %v1410 = vld [vmem:[%s1 + $0x24e0] sm:$0xff]
      %v1411 = vld [vmem:[%s1 + $0x24e8] sm:$0xff]
      %v1412 = vld [vmem:[%s1 + $0x24f0] sm:$0xff]
      %v1413 = vld [vmem:[%s1 + $0x24f8] sm:$0xff]
      %v1414 = vld [vmem:[%s1 + $0x2500] sm:$0xff]
      %v1415 = vld [vmem:[%s1 + $0x2508] sm:$0xff]
      %v1416 = vld [vmem:[%s1 + $0x2510] sm:$0xff]
      %v1417 = vld [vmem:[%s1 + $0x2518] sm:$0xff]
      %v1418 = vld [vmem:[%s1 + $0x2520] sm:$0xff]
      %v1419 = vld [vmem:[%s1 + $0x2528] sm:$0xff]
      %v1420 = vld [vmem:[%s1 + $0x2530] sm:$0xff]
      %v1421 = vld [vmem:[%s1 + $0x2538] sm:$0xff]
      %v1422 = vld [vmem:[%s1 + $0x2540] sm:$0xff]
      %v1423 = vld [vmem:[%s1 + $0x2548] sm:$0xff]
      %v1424 = vld [vmem:[%s1 + $0x2550] sm:$0xff]
      %v1425 = vld [vmem:[%s1 + $0x2558] sm:$0xff]
      %v1426 = vld [vmem:[%s1 + $0x2560] sm:$0xff]
      %v1427 = vld [vmem:[%s1 + $0x2568] sm:$0xff]
      %v1428 = vld [vmem:[%s1 + $0x2570] sm:$0xff]
      %v1429 = vld [vmem:[%s1 + $0x2578] sm:$0xff]
      %v1430 = vld [vmem:[%s1 + $0x2580] sm:$0xff]
      %v1431 = vld [vmem:[%s1 + $0x2588] sm:$0xff]
      %v1432 = vld [vmem:[%s1 + $0x2590] sm:$0xff]
      %v1433 = vld [vmem:[%s1 + $0x2598] sm:$0xff]
      %v1434 = vld [vmem:[%s1 + $0x25a0] sm:$0xff]
      %v1435 = vld [vmem:[%s1 + $0x25a8] sm:$0xff]
      %v1436 = vld [vmem:[%s1 + $0x25b0] sm:$0xff]
      %v1437 = vld [vmem:[%s1 + $0x25b8] sm:$0xff]
      %v1438 = vld [vmem:[%s1 + $0x25c0] sm:$0xff]
      %v1439 = vld [vmem:[%s1 + $0x25c8] sm:$0xff]
      %v1440 = vld [vmem:[%s1 + $0x25d0] sm:$0xff]
      %v1441 = vld [vmem:[%s1 + $0x25d8] sm:$0xff]
      %v1442 = vld [vmem:[%s1 + $0x25e0] sm:$0xff]
      %v1443 = vld [vmem:[%s1 + $0x25e8] sm:$0xff]
      %v1444 = vld [vmem:[%s1 + $0x25f0] sm:$0xff]
      %v1445 = vld [vmem:[%s1 + $0x25f8] sm:$0xff]
      %v1446 = vld [vmem:[%s1 + $0x2600] sm:$0xff]
      %v1447 = vld [vmem:[%s1 + $0x2608] sm:$0xff]
      %v1448 = vld [vmem:[%s1 + $0x2610] sm:$0xff]
      %v1449 = vld [vmem:[%s1 + $0x2618] sm:$0xff]
      %v1450 = vld [vmem:[%s1 + $0x2620] sm:$0xff]
      %v1451 = vld [vmem:[%s1 + $0x2628] sm:$0xff]
      %v1452 = vld [vmem:[%s1 + $0x2630] sm:$0xff]
      %v1453 = vld [vmem:[%s1 + $0x2638] sm:$0xff]
      %v1454 = vld [vmem:[%s1 + $0x2640] sm:$0xff]
      %v1455 = vld [vmem:[%s1 + $0x2648] sm:$0xff]
      %v1456 = vld [vmem:[%s1 + $0x2650] sm:$0xff]
      %v1457 = vld [vmem:[%s1 + $0x2658] sm:$0xff]
      %v1458 = vld [vmem:[%s1 + $0x2660] sm:$0xff]
      %v1459 = vld [vmem:[%s1 + $0x2668] sm:$0xff]
      %v1460 = vld [vmem:[%s1 + $0x2670] sm:$0xff]
      %v1461 = vld [vmem:[%s1 + $0x2678] sm:$0xff]
      %v1462 = vld [vmem:[%s1 + $0x2680] sm:$0xff]
      %v1463 = vld [vmem:[%s1 + $0x2688] sm:$0xff]
      %v1464 = vld [vmem:[%s1 + $0x2690] sm:$0xff]
      %v1465 = vld [vmem:[%s1 + $0x2698] sm:$0xff]
      %v1466 = vld [vmem:[%s1 + $0x26a0] sm:$0xff]
      %v1467 = vld [vmem:[%s1 + $0x26a8] sm:$0xff]
      %v1468 = vld [vmem:[%s1 + $0x26b0] sm:$0xff]
      %v1469 = vld [vmem:[%s1 + $0x26b8] sm:$0xff]
      %v1470 = vld [vmem:[%s1 + $0x26c0] sm:$0xff]
      %v1471 = vld [vmem:[%s1 + $0x26c8] sm:$0xff]
      %v1472 = vld [vmem:[%s1 + $0x26d0] sm:$0xff]
      %v1473 = vld [vmem:[%s1 + $0x26d8] sm:$0xff]
      %v1474 = vld [vmem:[%s1 + $0x26e0] sm:$0xff]
      %v1475 = vld [vmem:[%s1 + $0x26e8] sm:$0xff]
      %v1476 = vld [vmem:[%s1 + $0x26f0] sm:$0xff]
      %v1477 = vld [vmem:[%s1 + $0x26f8] sm:$0xff]
      %v1478 = vld [vmem:[%s1 + $0x2700] sm:$0xff]
      %v1479 = vld [vmem:[%s1 + $0x2708] sm:$0xff]
      %v1480 = vld [vmem:[%s1 + $0x2710] sm:$0xff]
      %v1481 = vld [vmem:[%s1 + $0x2718] sm:$0xff]
      %v1482 = vld [vmem:[%s1 + $0x2720] sm:$0xff]
      %v1483 = vld [vmem:[%s1 + $0x2728] sm:$0xff]
      %v1484 = vld [vmem:[%s1 + $0x2730] sm:$0xff]
      %v1485 = vld [vmem:[%s1 + $0x2738] sm:$0xff]
      %v1486 = vld [vmem:[%s1 + $0x2740] sm:$0xff]
      %v1487 = vld [vmem:[%s1 + $0x2748] sm:$0xff]
      %v1488 = vld [vmem:[%s1 + $0x2750] sm:$0xff]
      %v1489 = vld [vmem:[%s1 + $0x2758] sm:$0xff]
      %v1490 = vld [vmem:[%s1 + $0x2760] sm:$0xff]
      %v1491 = vld [vmem:[%s1 + $0x2768] sm:$0xff]
      %v1492 = vld [vmem:[%s1 + $0x2770] sm:$0xff]
      %v1493 = vld [vmem:[%s1 + $0x2778] sm:$0xff]
      %v1494 = vld [vmem:[%s1 + $0x2780] sm:$0xff]
      %v1495 = vld [vmem:[%s1 + $0x2788] sm:$0xff]
      %v1496 = vld [vmem:[%s1 + $0x2790] sm:$0xff]
      %v1497 = vld [vmem:[%s1 + $0x2798] sm:$0xff]
      %v1498 = vld [vmem:[%s1 + $0x27a0] sm:$0xff]
      %v1499 = vld [vmem:[%s1 + $0x27a8] sm:$0xff]
      %v1500 = vld [vmem:[%s1 + $0x27b0] sm:$0xff]
      %v1501 = vld [vmem:[%s1 + $0x27b8] sm:$0xff]
      %v1502 = vld [vmem:[%s1 + $0x27c0] sm:$0xff]
      %v1503 = vld [vmem:[%s1 + $0x27c8] sm:$0xff]
      %v1504 = vld [vmem:[%s1 + $0x27d0] sm:$0xff]
      %v1505 = vld [vmem:[%s1 + $0x27d8] sm:$0xff]
      %v1506 = vld [vmem:[%s1 + $0x27e0] sm:$0xff]
      %v1507 = vld [vmem:[%s1 + $0x27e8] sm:$0xff]
      %v1508 = vld [vmem:[%s1 + $0x27f0] sm:$0xff]
      %v1509 = vld [vmem:[%s1 + $0x27f8] sm:$0xff]
      %v1510 = vld [vmem:[%s1 + $0x2800] sm:$0xff]
      %v1511 = vld [vmem:[%s1 + $0x2808] sm:$0xff]
      %v1512 = vld [vmem:[%s1 + $0x2810] sm:$0xff]
      %v1513 = vld [vmem:[%s1 + $0x2818] sm:$0xff]
      %v1514 = vld [vmem:[%s1 + $0x2820] sm:$0xff]
      %v1515 = vld [vmem:[%s1 + $0x2828] sm:$0xff]
      %v1516 = vld [vmem:[%s1 + $0x2830] sm:$0xff]
      %v1517 = vld [vmem:[%s1 + $0x2838] sm:$0xff]
      %v1518 = vld [vmem:[%s1 + $0x2840] sm:$0xff]
      %v1519 = vld [vmem:[%s1 + $0x2848] sm:$0xff]
      %v1520 = vld [vmem:[%s1 + $0x2850] sm:$0xff]
      %v1521 = vld [vmem:[%s1 + $0x2858] sm:$0xff]
      %v1522 = vld [vmem:[%s1 + $0x2860] sm:$0xff]
      %v1523 = vld [vmem:[%s1 + $0x2868] sm:$0xff]
      %v1524 = vld [vmem:[%s1 + $0x2870] sm:$0xff]
      %v1525 = vld [vmem:[%s1 + $0x2878] sm:$0xff]
      %v1526 = vld [vmem:[%s1 + $0x2880] sm:$0xff]
      %v1527 = vld [vmem:[%s1 + $0x2888] sm:$0xff]
      %v1528 = vld [vmem:[%s1 + $0x2890] sm:$0xff]
      %v1529 = vld [vmem:[%s1 + $0x2898] sm:$0xff]
      %v1530 = vld [vmem:[%s1 + $0x28a0] sm:$0xff]
      %v1531 = vld [vmem:[%s1 + $0x28a8] sm:$0xff]
      %v1532 = vld [vmem:[%s1 + $0x28b0] sm:$0xff]
      %v1533 = vld [vmem:[%s1 + $0x28b8] sm:$0xff]
      %v1534 = vld [vmem:[%s1 + $0x28c0] sm:$0xff]
      %v1535 = vld [vmem:[%s1 + $0x28c8] sm:$0xff]
      %v1536 = vld [vmem:[%s1 + $0x28d0] sm:$0xff]
      %v1537 = vld [vmem:[%s1 + $0x28d8] sm:$0xff]
      %v1538 = vld [vmem:[%s1 + $0x28e0] sm:$0xff]
      %v1539 = vld [vmem:[%s1 + $0x28e8] sm:$0xff]
      %v1540 = vld [vmem:[%s1 + $0x28f0] sm:$0xff]
      %v1541 = vld [vmem:[%s1 + $0x28f8] sm:$0xff]
      %v1542 = vld [vmem:[%s1 + $0x2900] sm:$0xff]
      %v1543 = vld [vmem:[%s1 + $0x2908] sm:$0xff]
      %v1544 = vld [vmem:[%s1 + $0x2910] sm:$0xff]
      %v1545 = vld [vmem:[%s1 + $0x2918] sm:$0xff]
      %v1546 = vld [vmem:[%s1 + $0x2920] sm:$0xff]
      %v1547 = vld [vmem:[%s1 + $0x2928] sm:$0xff]
      %v1548 = vld [vmem:[%s1 + $0x2930] sm:$0xff]
      %v1549 = vld [vmem:[%s1 + $0x2938] sm:$0xff]
      %v1550 = vld [vmem:[%s1 + $0x2940] sm:$0xff]
      %v1551 = vld [vmem:[%s1 + $0x2948] sm:$0xff]
      %v1552 = vld [vmem:[%s1 + $0x2950] sm:$0xff]
      %v1553 = vld [vmem:[%s1 + $0x2958] sm:$0xff]
      %v1554 = vld [vmem:[%s1 + $0x2960] sm:$0xff]
      %v1555 = vld [vmem:[%s1 + $0x2968] sm:$0xff]
      %v1556 = vld [vmem:[%s1 + $0x2970] sm:$0xff]
      %v1557 = vld [vmem:[%s1 + $0x2978] sm:$0xff]
      %v1558 = vld [vmem:[%s1 + $0x2980] sm:$0xff]
      %v1559 = vld [vmem:[%s1 + $0x2988] sm:$0xff]
      %v1560 = vld [vmem:[%s1 + $0x2990] sm:$0xff]
      %v1561 = vld [vmem:[%s1 + $0x2998] sm:$0xff]
      %v1562 = vld [vmem:[%s1 + $0x29a0] sm:$0xff]
      %v1563 = vld [vmem:[%s1 + $0x29a8] sm:$0xff]
      %v1564 = vld [vmem:[%s1 + $0x29b0] sm:$0xff]
      %v1565 = vld [vmem:[%s1 + $0x29b8] sm:$0xff]
      %v1566 = vld [vmem:[%s1 + $0x29c0] sm:$0xff]
      %v1567 = vld [vmem:[%s1 + $0x29c8] sm:$0xff]
      %v1568 = vld [vmem:[%s1 + $0x29d0] sm:$0xff]
      %v1569 = vld [vmem:[%s1 + $0x29d8] sm:$0xff]
      %v1570 = vld [vmem:[%s1 + $0x29e0] sm:$0xff]
      %v1571 = vld [vmem:[%s1 + $0x29e8] sm:$0xff]
      %v1572 = vld [vmem:[%s1 + $0x29f0] sm:$0xff]
      %v1573 = vld [vmem:[%s1 + $0x29f8] sm:$0xff]
      %v1574 = vld [vmem:[%s1 + $0x2a00] sm:$0xff]
      %v1575 = vld [vmem:[%s1 + $0x2a08] sm:$0xff]
      %v1576 = vld [vmem:[%s1 + $0x2a10] sm:$0xff]
      %v1577 = vld [vmem:[%s1 + $0x2a18] sm:$0xff]
      %v1578 = vld [vmem:[%s1 + $0x2a20] sm:$0xff]
      %v1579 = vld [vmem:[%s1 + $0x2a28] sm:$0xff]
      %v1580 = vld [vmem:[%s1 + $0x2a30] sm:$0xff]
      %v1581 = vld [vmem:[%s1 + $0x2a38] sm:$0xff]
      %v1582 = vld [vmem:[%s1 + $0x2a40] sm:$0xff]
      %v1583 = vld [vmem:[%s1 + $0x2a48] sm:$0xff]
      %v1584 = vld [vmem:[%s1 + $0x2a50] sm:$0xff]
      %v1585 = vld [vmem:[%s1 + $0x2a58] sm:$0xff]
      %v1586 = vld [vmem:[%s1 + $0x2a60] sm:$0xff]
      %v1587 = vld [vmem:[%s1 + $0x2a68] sm:$0xff]
      %v1588 = vld [vmem:[%s1 + $0x2a70] sm:$0xff]
      %v1589 = vld [vmem:[%s1 + $0x2a78] sm:$0xff]
      %v1590 = vld [vmem:[%s1 + $0x2a80] sm:$0xff]
      %v1591 = vld [vmem:[%s1 + $0x2a88] sm:$0xff]
      %v1592 = vld [vmem:[%s1 + $0x2a90] sm:$0xff]
      %v1593 = vld [vmem:[%s1 + $0x2a98] sm:$0xff]
      %v1594 = vld [vmem:[%s1 + $0x2aa0] sm:$0xff]
      %v1595 = vld [vmem:[%s1 + $0x2aa8] sm:$0xff]
      %v1596 = vld [vmem:[%s1 + $0x2ab0] sm:$0xff]
      %v1597 = vld [vmem:[%s1 + $0x2ab8] sm:$0xff]
      %v1598 = vld [vmem:[%s1 + $0x2ac0] sm:$0xff]
      %v1599 = vld [vmem:[%s1 + $0x2ac8] sm:$0xff]
      %v1600 = vld [vmem:[%s1 + $0x2ad0] sm:$0xff]
      %v1601 = vld [vmem:[%s1 + $0x2ad8] sm:$0xff]
      %vm1602 = vcmask 130048
      %v1604 = vsel %vm1602, %v229, 0
      %1606 = vmatpush.msra.mxu0 %v440
      %1607 = vmatpush.msra.mxu0 %v426
      %1608 = vmatpush.msra.mxu0 %v412
      %1609 = vmatpush.msra.mxu0 %v398
      %1610 = vmatpush.msra.mxu0 %v384
      %1611 = vmatpush.msra.mxu0 %v370
      %1612 = vmatpush.msra.mxu0 %v356
      %1613 = vmatpush.msra.mxu0 %v342
      %1614 = vmatpush.msra.mxu0 %v328
      %1615 = vmatpush.msra.mxu0 %v314
      %1616 = vmatpush.msra.mxu0 %v300
      %1617 = vmatpush.msra.mxu0 %v286
      %1618 = vmatpush.msra.mxu0 %v272
      %1619 = vmatpush.msra.mxu0 %v258
      %1620 = vmatpush.msra.mxu0 %v244
      %1621 = vmatpush.msra.mxu0 %v230
      %1622 = vmatmul.f32.gmra.mxu0 %v223
      %v1623 = vpop.f32.mrf.mxu0
      %v1624 = vadd.f32 0.0, %v1623
      %1625 = vdwg.mxu0
      %1626 = vmatpush.msra.mxu0 %v664
      %1627 = vmatpush.msra.mxu0 %v650
      %1628 = vmatpush.msra.mxu0 %v636
      %1629 = vmatpush.msra.mxu0 %v622
      %1630 = vmatpush.msra.mxu0 %v608
      %1631 = vmatpush.msra.mxu0 %v594
      %1632 = vmatpush.msra.mxu0 %v580
      %1633 = vmatpush.msra.mxu0 %v566
      %1634 = vmatpush.msra.mxu0 %v552
      %1635 = vmatpush.msra.mxu0 %v538
      %1636 = vmatpush.msra.mxu0 %v524
      %1637 = vmatpush.msra.mxu0 %v510
      %1638 = vmatpush.msra.mxu0 %v496
      %1639 = vmatpush.msra.mxu0 %v482
      %1640 = vmatpush.msra.mxu0 %v468
      %1641 = vmatpush.msra.mxu0 %v454
      %1642 = vmatmul.f32.gmra.mxu0 %v224
      %v1643 = vpop.f32.mrf.mxu0
      %v1644 = vadd.f32 %v1624, %v1643
      %1645 = vdwg.mxu0
      %1646 = vmatpush.msra.mxu0 %v888
      %1647 = vmatpush.msra.mxu0 %v874
      %1648 = vmatpush.msra.mxu0 %v860
      %1649 = vmatpush.msra.mxu0 %v846
      %1650 = vmatpush.msra.mxu0 %v832
      %1651 = vmatpush.msra.mxu0 %v818
      %1652 = vmatpush.msra.mxu0 %v804
      %1653 = vmatpush.msra.mxu0 %v790
      %1654 = vmatpush.msra.mxu0 %v776
      %1655 = vmatpush.msra.mxu0 %v762
      %1656 = vmatpush.msra.mxu0 %v748
      %1657 = vmatpush.msra.mxu0 %v734
      %1658 = vmatpush.msra.mxu0 %v720
      %1659 = vmatpush.msra.mxu0 %v706
      %1660 = vmatpush.msra.mxu0 %v692
      %1661 = vmatpush.msra.mxu0 %v678
      %1662 = vmatmul.f32.gmra.mxu0 %v225
      %v1663 = vpop.f32.mrf.mxu0
      %v1664 = vadd.f32 %v1644, %v1663
      %1665 = vdwg.mxu0
      %1666 = vmatpush.msra.mxu0 %v1112
      %1667 = vmatpush.msra.mxu0 %v1098
      %1668 = vmatpush.msra.mxu0 %v1084
      %1669 = vmatpush.msra.mxu0 %v1070
      %1670 = vmatpush.msra.mxu0 %v1056
      %1671 = vmatpush.msra.mxu0 %v1042
      %1672 = vmatpush.msra.mxu0 %v1028
      %1673 = vmatpush.msra.mxu0 %v1014
      %1674 = vmatpush.msra.mxu0 %v1000
      %1675 = vmatpush.msra.mxu0 %v986
      %1676 = vmatpush.msra.mxu0 %v972
      %1677 = vmatpush.msra.mxu0 %v958
      %1678 = vmatpush.msra.mxu0 %v944
      %1679 = vmatpush.msra.mxu0 %v930
      %1680 = vmatpush.msra.mxu0 %v916
      %1681 = vmatpush.msra.mxu0 %v902
      %1682 = vmatmul.f32.gmra.mxu0 %v226
      %v1683 = vpop.f32.mrf.mxu0
      %v1684 = vadd.f32 %v1664, %v1683
      %1685 = vdwg.mxu0
      %1686 = vmatpush.msra.mxu0 %v1336
      %1687 = vmatpush.msra.mxu0 %v1322
      %1688 = vmatpush.msra.mxu0 %v1308
      %1689 = vmatpush.msra.mxu0 %v1294
      %1690 = vmatpush.msra.mxu0 %v1280
      %1691 = vmatpush.msra.mxu0 %v1266
      %1692 = vmatpush.msra.mxu0 %v1252
      %1693 = vmatpush.msra.mxu0 %v1238
      %1694 = vmatpush.msra.mxu0 %v1224
      %1695 = vmatpush.msra.mxu0 %v1210
      %1696 = vmatpush.msra.mxu0 %v1196
      %1697 = vmatpush.msra.mxu0 %v1182
      %1698 = vmatpush.msra.mxu0 %v1168
      %1699 = vmatpush.msra.mxu0 %v1154
      %1700 = vmatpush.msra.mxu0 %v1140
      %1701 = vmatpush.msra.mxu0 %v1126
      %1702 = vmatmul.f32.gmra.mxu0 %v227
      %v1703 = vpop.f32.mrf.mxu0
      %v1704 = vadd.f32 %v1684, %v1703
      %1705 = vdwg.mxu0
      %1706 = vmatpush.msra.mxu0 %v1560
      %1707 = vmatpush.msra.mxu0 %v1546
      %1708 = vmatpush.msra.mxu0 %v1532
      %1709 = vmatpush.msra.mxu0 %v1518
      %1710 = vmatpush.msra.mxu0 %v1504
      %1711 = vmatpush.msra.mxu0 %v1490
      %1712 = vmatpush.msra.mxu0 %v1476
      %1713 = vmatpush.msra.mxu0 %v1462
      %1714 = vmatpush.msra.mxu0 %v1448
      %1715 = vmatpush.msra.mxu0 %v1434
      %1716 = vmatpush.msra.mxu0 %v1420
      %1717 = vmatpush.msra.mxu0 %v1406
      %1718 = vmatpush.msra.mxu0 %v1392
      %1719 = vmatpush.msra.mxu0 %v1378
      %1720 = vmatpush.msra.mxu0 %v1364
      %1721 = vmatpush.msra.mxu0 %v1350
      %1722 = vmatmul.f32.gmra.mxu0 %v228
      %v1723 = vpop.f32.mrf.mxu0
      %v1724 = vadd.f32 %v1704, %v1723
      %1725 = vdwg.mxu0
      %1726 = vmatpush.msra.mxu0 0.0
      %1727 = vmatpush.msra.mxu0 0.0
      %1728 = vmatpush.msra.mxu0 0.0
      %1729 = vmatpush.msra.mxu0 0.0
      %1730 = vmatpush.msra.mxu0 0.0
      %1731 = vmatpush.msra.mxu0 0.0
      %1732 = vmatpush.msra.mxu0 0.0
      %1733 = vmatpush.msra.mxu0 0.0
      %1734 = vmatpush.msra.mxu0 0.0
      %1735 = vmatpush.msra.mxu0 0.0
      %1736 = vmatpush.msra.mxu0 0.0
      %1737 = vmatpush.msra.mxu0 0.0
      %1738 = vmatpush.msra.mxu0 0.0
      %1739 = vmatpush.msra.mxu0 0.0
      %1740 = vmatpush.msra.mxu0 %v1588
      %1741 = vmatpush.msra.mxu0 %v1574
      %1742 = vmatmul.f32.gmra.mxu0 %v1604
      %v1743 = vpop.f32.mrf.mxu0
      %v1744 = vadd.f32 %v1724, %v1743
      %1745 = vdwg.mxu0
      %1746 = vmatpush.msra.mxu0 %v441
      %1747 = vmatpush.msra.mxu0 %v427
      %1748 = vmatpush.msra.mxu0 %v413
      %1749 = vmatpush.msra.mxu0 %v399
      %1750 = vmatpush.msra.mxu0 %v385
      %1751 = vmatpush.msra.mxu0 %v371
      %1752 = vmatpush.msra.mxu0 %v357
      %1753 = vmatpush.msra.mxu0 %v343
      %1754 = vmatpush.msra.mxu0 %v329
      %1755 = vmatpush.msra.mxu0 %v315
      %1756 = vmatpush.msra.mxu0 %v301
      %1757 = vmatpush.msra.mxu0 %v287
      %1758 = vmatpush.msra.mxu0 %v273
      %1759 = vmatpush.msra.mxu0 %v259
      %1760 = vmatpush.msra.mxu0 %v245
      %1761 = vmatpush.msra.mxu0 %v231
      %1762 = vmatmul.f32.gmra.mxu0 %v223
      %v1763 = vpop.f32.mrf.mxu0
      %v1764 = vadd.f32 0.0, %v1763
      %1765 = vdwg.mxu0
      %1766 = vmatpush.msra.mxu0 %v665
      %1767 = vmatpush.msra.mxu0 %v651
      %1768 = vmatpush.msra.mxu0 %v637
      %1769 = vmatpush.msra.mxu0 %v623
      %1770 = vmatpush.msra.mxu0 %v609
      %1771 = vmatpush.msra.mxu0 %v595
      %1772 = vmatpush.msra.mxu0 %v581
      %1773 = vmatpush.msra.mxu0 %v567
      %1774 = vmatpush.msra.mxu0 %v553
      %1775 = vmatpush.msra.mxu0 %v539
      %1776 = vmatpush.msra.mxu0 %v525
      %1777 = vmatpush.msra.mxu0 %v511
      %1778 = vmatpush.msra.mxu0 %v497
      %1779 = vmatpush.msra.mxu0 %v483
      %1780 = vmatpush.msra.mxu0 %v469
      %1781 = vmatpush.msra.mxu0 %v455
      %1782 = vmatmul.f32.gmra.mxu0 %v224
      %v1783 = vpop.f32.mrf.mxu0
      %v1784 = vadd.f32 %v1764, %v1783
      %1785 = vdwg.mxu0
      %1786 = vmatpush.msra.mxu0 %v889
      %1787 = vmatpush.msra.mxu0 %v875
      %1788 = vmatpush.msra.mxu0 %v861
      %1789 = vmatpush.msra.mxu0 %v847
      %1790 = vmatpush.msra.mxu0 %v833
      %1791 = vmatpush.msra.mxu0 %v819
      %1792 = vmatpush.msra.mxu0 %v805
      %1793 = vmatpush.msra.mxu0 %v791
      %1794 = vmatpush.msra.mxu0 %v777
      %1795 = vmatpush.msra.mxu0 %v763
      %1796 = vmatpush.msra.mxu0 %v749
      %1797 = vmatpush.msra.mxu0 %v735
      %1798 = vmatpush.msra.mxu0 %v721
      %1799 = vmatpush.msra.mxu0 %v707
      %1800 = vmatpush.msra.mxu0 %v693
      %1801 = vmatpush.msra.mxu0 %v679
      %1802 = vmatmul.f32.gmra.mxu0 %v225
      %v1803 = vpop.f32.mrf.mxu0
      %v1804 = vadd.f32 %v1784, %v1803
      %1805 = vdwg.mxu0
      %1806 = vmatpush.msra.mxu0 %v1113
      %1807 = vmatpush.msra.mxu0 %v1099
      %1808 = vmatpush.msra.mxu0 %v1085
      %1809 = vmatpush.msra.mxu0 %v1071
      %1810 = vmatpush.msra.mxu0 %v1057
      %1811 = vmatpush.msra.mxu0 %v1043
      %1812 = vmatpush.msra.mxu0 %v1029
      %1813 = vmatpush.msra.mxu0 %v1015
      %1814 = vmatpush.msra.mxu0 %v1001
      %1815 = vmatpush.msra.mxu0 %v987
      %1816 = vmatpush.msra.mxu0 %v973
      %1817 = vmatpush.msra.mxu0 %v959
      %1818 = vmatpush.msra.mxu0 %v945
      %1819 = vmatpush.msra.mxu0 %v931
      %1820 = vmatpush.msra.mxu0 %v917
      %1821 = vmatpush.msra.mxu0 %v903
      %1822 = vmatmul.f32.gmra.mxu0 %v226
      %v1823 = vpop.f32.mrf.mxu0
      %v1824 = vadd.f32 %v1804, %v1823
      %1825 = vdwg.mxu0
      %1826 = vmatpush.msra.mxu0 %v1337
      %1827 = vmatpush.msra.mxu0 %v1323
      %1828 = vmatpush.msra.mxu0 %v1309
      %1829 = vmatpush.msra.mxu0 %v1295
      %1830 = vmatpush.msra.mxu0 %v1281
      %1831 = vmatpush.msra.mxu0 %v1267
      %1832 = vmatpush.msra.mxu0 %v1253
      %1833 = vmatpush.msra.mxu0 %v1239
      %1834 = vmatpush.msra.mxu0 %v1225
      %1835 = vmatpush.msra.mxu0 %v1211
      %1836 = vmatpush.msra.mxu0 %v1197
      %1837 = vmatpush.msra.mxu0 %v1183
      %1838 = vmatpush.msra.mxu0 %v1169
      %1839 = vmatpush.msra.mxu0 %v1155
      %1840 = vmatpush.msra.mxu0 %v1141
      %1841 = vmatpush.msra.mxu0 %v1127
      %1842 = vmatmul.f32.gmra.mxu0 %v227
      %v1843 = vpop.f32.mrf.mxu0
      %v1844 = vadd.f32 %v1824, %v1843
      %1845 = vdwg.mxu0
      %1846 = vmatpush.msra.mxu0 %v1561
      %1847 = vmatpush.msra.mxu0 %v1547
      %1848 = vmatpush.msra.mxu0 %v1533
      %1849 = vmatpush.msra.mxu0 %v1519
      %1850 = vmatpush.msra.mxu0 %v1505
      %1851 = vmatpush.msra.mxu0 %v1491
      %1852 = vmatpush.msra.mxu0 %v1477
      %1853 = vmatpush.msra.mxu0 %v1463
      %1854 = vmatpush.msra.mxu0 %v1449
      %1855 = vmatpush.msra.mxu0 %v1435
      %1856 = vmatpush.msra.mxu0 %v1421
      %1857 = vmatpush.msra.mxu0 %v1407
      %1858 = vmatpush.msra.mxu0 %v1393
      %1859 = vmatpush.msra.mxu0 %v1379
      %1860 = vmatpush.msra.mxu0 %v1365
      %1861 = vmatpush.msra.mxu0 %v1351
      %1862 = vmatmul.f32.gmra.mxu0 %v228
      %v1863 = vpop.f32.mrf.mxu0
      %v1864 = vadd.f32 %v1844, %v1863
      %1865 = vdwg.mxu0
      %1866 = vmatpush.msra.mxu0 0.0
      %1867 = vmatpush.msra.mxu0 0.0
      %1868 = vmatpush.msra.mxu0 0.0
      %1869 = vmatpush.msra.mxu0 0.0
      %1870 = vmatpush.msra.mxu0 0.0
      %1871 = vmatpush.msra.mxu0 0.0
      %1872 = vmatpush.msra.mxu0 0.0
      %1873 = vmatpush.msra.mxu0 0.0
      %1874 = vmatpush.msra.mxu0 0.0
      %1875 = vmatpush.msra.mxu0 0.0
      %1876 = vmatpush.msra.mxu0 0.0
      %1877 = vmatpush.msra.mxu0 0.0
      %1878 = vmatpush.msra.mxu0 0.0
      %1879 = vmatpush.msra.mxu0 0.0
      %1880 = vmatpush.msra.mxu0 %v1589
      %1881 = vmatpush.msra.mxu0 %v1575
      %1882 = vmatmul.f32.gmra.mxu0 %v1604
      %v1883 = vpop.f32.mrf.mxu0
      %v1884 = vadd.f32 %v1864, %v1883
      %1885 = vdwg.mxu0
      %1886 = vmatpush.msra.mxu0 %v442
      %1887 = vmatpush.msra.mxu0 %v428
      %1888 = vmatpush.msra.mxu0 %v414
      %1889 = vmatpush.msra.mxu0 %v400
      %1890 = vmatpush.msra.mxu0 %v386
      %1891 = vmatpush.msra.mxu0 %v372
      %1892 = vmatpush.msra.mxu0 %v358
      %1893 = vmatpush.msra.mxu0 %v344
      %1894 = vmatpush.msra.mxu0 %v330
      %1895 = vmatpush.msra.mxu0 %v316
      %1896 = vmatpush.msra.mxu0 %v302
      %1897 = vmatpush.msra.mxu0 %v288
      %1898 = vmatpush.msra.mxu0 %v274
      %1899 = vmatpush.msra.mxu0 %v260
      %1900 = vmatpush.msra.mxu0 %v246
      %1901 = vmatpush.msra.mxu0 %v232
      %1902 = vmatmul.f32.gmra.mxu0 %v223
      %v1903 = vpop.f32.mrf.mxu0
      %v1904 = vadd.f32 0.0, %v1903
      %1905 = vdwg.mxu0
      %1906 = vmatpush.msra.mxu0 %v666
      %1907 = vmatpush.msra.mxu0 %v652
      %1908 = vmatpush.msra.mxu0 %v638
      %1909 = vmatpush.msra.mxu0 %v624
      %1910 = vmatpush.msra.mxu0 %v610
      %1911 = vmatpush.msra.mxu0 %v596
      %1912 = vmatpush.msra.mxu0 %v582
      %1913 = vmatpush.msra.mxu0 %v568
      %1914 = vmatpush.msra.mxu0 %v554
      %1915 = vmatpush.msra.mxu0 %v540
      %1916 = vmatpush.msra.mxu0 %v526
      %1917 = vmatpush.msra.mxu0 %v512
      %1918 = vmatpush.msra.mxu0 %v498
      %1919 = vmatpush.msra.mxu0 %v484
      %1920 = vmatpush.msra.mxu0 %v470
      %1921 = vmatpush.msra.mxu0 %v456
      %1922 = vmatmul.f32.gmra.mxu0 %v224
      %v1923 = vpop.f32.mrf.mxu0
      %v1924 = vadd.f32 %v1904, %v1923
      %1925 = vdwg.mxu0
      %1926 = vmatpush.msra.mxu0 %v890
      %1927 = vmatpush.msra.mxu0 %v876
      %1928 = vmatpush.msra.mxu0 %v862
      %1929 = vmatpush.msra.mxu0 %v848
      %1930 = vmatpush.msra.mxu0 %v834
      %1931 = vmatpush.msra.mxu0 %v820
      %1932 = vmatpush.msra.mxu0 %v806
      %1933 = vmatpush.msra.mxu0 %v792
      %1934 = vmatpush.msra.mxu0 %v778
      %1935 = vmatpush.msra.mxu0 %v764
      %1936 = vmatpush.msra.mxu0 %v750
      %1937 = vmatpush.msra.mxu0 %v736
      %1938 = vmatpush.msra.mxu0 %v722
      %1939 = vmatpush.msra.mxu0 %v708
      %1940 = vmatpush.msra.mxu0 %v694
      %1941 = vmatpush.msra.mxu0 %v680
      %1942 = vmatmul.f32.gmra.mxu0 %v225
      %v1943 = vpop.f32.mrf.mxu0
      %v1944 = vadd.f32 %v1924, %v1943
      %1945 = vdwg.mxu0
      %1946 = vmatpush.msra.mxu0 %v1114
      %1947 = vmatpush.msra.mxu0 %v1100
      %1948 = vmatpush.msra.mxu0 %v1086
      %1949 = vmatpush.msra.mxu0 %v1072
      %1950 = vmatpush.msra.mxu0 %v1058
      %1951 = vmatpush.msra.mxu0 %v1044
      %1952 = vmatpush.msra.mxu0 %v1030
      %1953 = vmatpush.msra.mxu0 %v1016
      %1954 = vmatpush.msra.mxu0 %v1002
      %1955 = vmatpush.msra.mxu0 %v988
      %1956 = vmatpush.msra.mxu0 %v974
      %1957 = vmatpush.msra.mxu0 %v960
      %1958 = vmatpush.msra.mxu0 %v946
      %1959 = vmatpush.msra.mxu0 %v932
      %1960 = vmatpush.msra.mxu0 %v918
      %1961 = vmatpush.msra.mxu0 %v904
      %1962 = vmatmul.f32.gmra.mxu0 %v226
      %v1963 = vpop.f32.mrf.mxu0
      %v1964 = vadd.f32 %v1944, %v1963
      %1965 = vdwg.mxu0
      %1966 = vmatpush.msra.mxu0 %v1338
      %1967 = vmatpush.msra.mxu0 %v1324
      %1968 = vmatpush.msra.mxu0 %v1310
      %1969 = vmatpush.msra.mxu0 %v1296
      %1970 = vmatpush.msra.mxu0 %v1282
      %1971 = vmatpush.msra.mxu0 %v1268
      %1972 = vmatpush.msra.mxu0 %v1254
      %1973 = vmatpush.msra.mxu0 %v1240
      %1974 = vmatpush.msra.mxu0 %v1226
      %1975 = vmatpush.msra.mxu0 %v1212
      %1976 = vmatpush.msra.mxu0 %v1198
      %1977 = vmatpush.msra.mxu0 %v1184
      %1978 = vmatpush.msra.mxu0 %v1170
      %1979 = vmatpush.msra.mxu0 %v1156
      %1980 = vmatpush.msra.mxu0 %v1142
      %1981 = vmatpush.msra.mxu0 %v1128
      %1982 = vmatmul.f32.gmra.mxu0 %v227
      %v1983 = vpop.f32.mrf.mxu0
      %v1984 = vadd.f32 %v1964, %v1983
      %1985 = vdwg.mxu0
      %1986 = vmatpush.msra.mxu0 %v1562
      %1987 = vmatpush.msra.mxu0 %v1548
      %1988 = vmatpush.msra.mxu0 %v1534
      %1989 = vmatpush.msra.mxu0 %v1520
      %1990 = vmatpush.msra.mxu0 %v1506
      %1991 = vmatpush.msra.mxu0 %v1492
      %1992 = vmatpush.msra.mxu0 %v1478
      %1993 = vmatpush.msra.mxu0 %v1464
      %1994 = vmatpush.msra.mxu0 %v1450
      %1995 = vmatpush.msra.mxu0 %v1436
      %1996 = vmatpush.msra.mxu0 %v1422
      %1997 = vmatpush.msra.mxu0 %v1408
      %1998 = vmatpush.msra.mxu0 %v1394
      %1999 = vmatpush.msra.mxu0 %v1380
      %2000 = vmatpush.msra.mxu0 %v1366
      %2001 = vmatpush.msra.mxu0 %v1352
      %2002 = vmatmul.f32.gmra.mxu0 %v228
      %v2003 = vpop.f32.mrf.mxu0
      %v2004 = vadd.f32 %v1984, %v2003
      %2005 = vdwg.mxu0
      %2006 = vmatpush.msra.mxu0 0.0
      %2007 = vmatpush.msra.mxu0 0.0
      %2008 = vmatpush.msra.mxu0 0.0
      %2009 = vmatpush.msra.mxu0 0.0
      %2010 = vmatpush.msra.mxu0 0.0
      %2011 = vmatpush.msra.mxu0 0.0
      %2012 = vmatpush.msra.mxu0 0.0
      %2013 = vmatpush.msra.mxu0 0.0
      %2014 = vmatpush.msra.mxu0 0.0
      %2015 = vmatpush.msra.mxu0 0.0
      %2016 = vmatpush.msra.mxu0 0.0
      %2017 = vmatpush.msra.mxu0 0.0
      %2018 = vmatpush.msra.mxu0 0.0
      %2019 = vmatpush.msra.mxu0 0.0
      %2020 = vmatpush.msra.mxu0 %v1590
      %2021 = vmatpush.msra.mxu0 %v1576
      %2022 = vmatmul.f32.gmra.mxu0 %v1604
      %v2023 = vpop.f32.mrf.mxu0
      %v2024 = vadd.f32 %v2004, %v2023
      %2025 = vdwg.mxu0
      %2026 = vmatpush.msra.mxu0 %v443
      %2027 = vmatpush.msra.mxu0 %v429
      %2028 = vmatpush.msra.mxu0 %v415
      %2029 = vmatpush.msra.mxu0 %v401
      %2030 = vmatpush.msra.mxu0 %v387
      %2031 = vmatpush.msra.mxu0 %v373
      %2032 = vmatpush.msra.mxu0 %v359
      %2033 = vmatpush.msra.mxu0 %v345
      %2034 = vmatpush.msra.mxu0 %v331
      %2035 = vmatpush.msra.mxu0 %v317
      %2036 = vmatpush.msra.mxu0 %v303
      %2037 = vmatpush.msra.mxu0 %v289
      %2038 = vmatpush.msra.mxu0 %v275
      %2039 = vmatpush.msra.mxu0 %v261
      %2040 = vmatpush.msra.mxu0 %v247
      %2041 = vmatpush.msra.mxu0 %v233
      %2042 = vmatmul.f32.gmra.mxu0 %v223
      %v2043 = vpop.f32.mrf.mxu0
      %v2044 = vadd.f32 0.0, %v2043
      %2045 = vdwg.mxu0
      %2046 = vmatpush.msra.mxu0 %v667
      %2047 = vmatpush.msra.mxu0 %v653
      %2048 = vmatpush.msra.mxu0 %v639
      %2049 = vmatpush.msra.mxu0 %v625
      %2050 = vmatpush.msra.mxu0 %v611
      %2051 = vmatpush.msra.mxu0 %v597
      %2052 = vmatpush.msra.mxu0 %v583
      %2053 = vmatpush.msra.mxu0 %v569
      %2054 = vmatpush.msra.mxu0 %v555
      %2055 = vmatpush.msra.mxu0 %v541
      %2056 = vmatpush.msra.mxu0 %v527
      %2057 = vmatpush.msra.mxu0 %v513
      %2058 = vmatpush.msra.mxu0 %v499
      %2059 = vmatpush.msra.mxu0 %v485
      %2060 = vmatpush.msra.mxu0 %v471
      %2061 = vmatpush.msra.mxu0 %v457
      %2062 = vmatmul.f32.gmra.mxu0 %v224
      %v2063 = vpop.f32.mrf.mxu0
      %v2064 = vadd.f32 %v2044, %v2063
      %2065 = vdwg.mxu0
      %2066 = vmatpush.msra.mxu0 %v891
      %2067 = vmatpush.msra.mxu0 %v877
      %2068 = vmatpush.msra.mxu0 %v863
      %2069 = vmatpush.msra.mxu0 %v849
      %2070 = vmatpush.msra.mxu0 %v835
      %2071 = vmatpush.msra.mxu0 %v821
      %2072 = vmatpush.msra.mxu0 %v807
      %2073 = vmatpush.msra.mxu0 %v793
      %2074 = vmatpush.msra.mxu0 %v779
      %2075 = vmatpush.msra.mxu0 %v765
      %2076 = vmatpush.msra.mxu0 %v751
      %2077 = vmatpush.msra.mxu0 %v737
      %2078 = vmatpush.msra.mxu0 %v723
      %2079 = vmatpush.msra.mxu0 %v709
      %2080 = vmatpush.msra.mxu0 %v695
      %2081 = vmatpush.msra.mxu0 %v681
      %2082 = vmatmul.f32.gmra.mxu0 %v225
      %v2083 = vpop.f32.mrf.mxu0
      %v2084 = vadd.f32 %v2064, %v2083
      %2085 = vdwg.mxu0
      %2086 = vmatpush.msra.mxu0 %v1115
      %2087 = vmatpush.msra.mxu0 %v1101
      %2088 = vmatpush.msra.mxu0 %v1087
      %2089 = vmatpush.msra.mxu0 %v1073
      %2090 = vmatpush.msra.mxu0 %v1059
      %2091 = vmatpush.msra.mxu0 %v1045
      %2092 = vmatpush.msra.mxu0 %v1031
      %2093 = vmatpush.msra.mxu0 %v1017
      %2094 = vmatpush.msra.mxu0 %v1003
      %2095 = vmatpush.msra.mxu0 %v989
      %2096 = vmatpush.msra.mxu0 %v975
      %2097 = vmatpush.msra.mxu0 %v961
      %2098 = vmatpush.msra.mxu0 %v947
      %2099 = vmatpush.msra.mxu0 %v933
      %2100 = vmatpush.msra.mxu0 %v919
      %2101 = vmatpush.msra.mxu0 %v905
      %2102 = vmatmul.f32.gmra.mxu0 %v226
      %v2103 = vpop.f32.mrf.mxu0
      %v2104 = vadd.f32 %v2084, %v2103
      %2105 = vdwg.mxu0
      %2106 = vmatpush.msra.mxu0 %v1339
      %2107 = vmatpush.msra.mxu0 %v1325
      %2108 = vmatpush.msra.mxu0 %v1311
      %2109 = vmatpush.msra.mxu0 %v1297
      %2110 = vmatpush.msra.mxu0 %v1283
      %2111 = vmatpush.msra.mxu0 %v1269
      %2112 = vmatpush.msra.mxu0 %v1255
      %2113 = vmatpush.msra.mxu0 %v1241
      %2114 = vmatpush.msra.mxu0 %v1227
      %2115 = vmatpush.msra.mxu0 %v1213
      %2116 = vmatpush.msra.mxu0 %v1199
      %2117 = vmatpush.msra.mxu0 %v1185
      %2118 = vmatpush.msra.mxu0 %v1171
      %2119 = vmatpush.msra.mxu0 %v1157
      %2120 = vmatpush.msra.mxu0 %v1143
      %2121 = vmatpush.msra.mxu0 %v1129
      %2122 = vmatmul.f32.gmra.mxu0 %v227
      %v2123 = vpop.f32.mrf.mxu0
      %v2124 = vadd.f32 %v2104, %v2123
      %2125 = vdwg.mxu0
      %2126 = vmatpush.msra.mxu0 %v1563
      %2127 = vmatpush.msra.mxu0 %v1549
      %2128 = vmatpush.msra.mxu0 %v1535
      %2129 = vmatpush.msra.mxu0 %v1521
      %2130 = vmatpush.msra.mxu0 %v1507
      %2131 = vmatpush.msra.mxu0 %v1493
      %2132 = vmatpush.msra.mxu0 %v1479
      %2133 = vmatpush.msra.mxu0 %v1465
      %2134 = vmatpush.msra.mxu0 %v1451
      %2135 = vmatpush.msra.mxu0 %v1437
      %2136 = vmatpush.msra.mxu0 %v1423
      %2137 = vmatpush.msra.mxu0 %v1409
      %2138 = vmatpush.msra.mxu0 %v1395
      %2139 = vmatpush.msra.mxu0 %v1381
      %2140 = vmatpush.msra.mxu0 %v1367
      %2141 = vmatpush.msra.mxu0 %v1353
      %2142 = vmatmul.f32.gmra.mxu0 %v228
      %v2143 = vpop.f32.mrf.mxu0
      %v2144 = vadd.f32 %v2124, %v2143
      %2145 = vdwg.mxu0
      %2146 = vmatpush.msra.mxu0 0.0
      %2147 = vmatpush.msra.mxu0 0.0
      %2148 = vmatpush.msra.mxu0 0.0
      %2149 = vmatpush.msra.mxu0 0.0
      %2150 = vmatpush.msra.mxu0 0.0
      %2151 = vmatpush.msra.mxu0 0.0
      %2152 = vmatpush.msra.mxu0 0.0
      %2153 = vmatpush.msra.mxu0 0.0
      %2154 = vmatpush.msra.mxu0 0.0
      %2155 = vmatpush.msra.mxu0 0.0
      %2156 = vmatpush.msra.mxu0 0.0
      %2157 = vmatpush.msra.mxu0 0.0
      %2158 = vmatpush.msra.mxu0 0.0
      %2159 = vmatpush.msra.mxu0 0.0
      %2160 = vmatpush.msra.mxu0 %v1591
      %2161 = vmatpush.msra.mxu0 %v1577
      %2162 = vmatmul.f32.gmra.mxu0 %v1604
      %v2163 = vpop.f32.mrf.mxu0
      %v2164 = vadd.f32 %v2144, %v2163
      %2165 = vdwg.mxu0
      %2166 = vmatpush.msra.mxu0 %v444
      %2167 = vmatpush.msra.mxu0 %v430
      %2168 = vmatpush.msra.mxu0 %v416
      %2169 = vmatpush.msra.mxu0 %v402
      %2170 = vmatpush.msra.mxu0 %v388
      %2171 = vmatpush.msra.mxu0 %v374
      %2172 = vmatpush.msra.mxu0 %v360
      %2173 = vmatpush.msra.mxu0 %v346
      %2174 = vmatpush.msra.mxu0 %v332
      %2175 = vmatpush.msra.mxu0 %v318
      %2176 = vmatpush.msra.mxu0 %v304
      %2177 = vmatpush.msra.mxu0 %v290
      %2178 = vmatpush.msra.mxu0 %v276
      %2179 = vmatpush.msra.mxu0 %v262
      %2180 = vmatpush.msra.mxu0 %v248
      %2181 = vmatpush.msra.mxu0 %v234
      %2182 = vmatmul.f32.gmra.mxu0 %v223
      %v2183 = vpop.f32.mrf.mxu0
      %v2184 = vadd.f32 0.0, %v2183
      %2185 = vdwg.mxu0
      %2186 = vmatpush.msra.mxu0 %v668
      %2187 = vmatpush.msra.mxu0 %v654
      %2188 = vmatpush.msra.mxu0 %v640
      %2189 = vmatpush.msra.mxu0 %v626
      %2190 = vmatpush.msra.mxu0 %v612
      %2191 = vmatpush.msra.mxu0 %v598
      %2192 = vmatpush.msra.mxu0 %v584
      %2193 = vmatpush.msra.mxu0 %v570
      %2194 = vmatpush.msra.mxu0 %v556
      %2195 = vmatpush.msra.mxu0 %v542
      %2196 = vmatpush.msra.mxu0 %v528
      %2197 = vmatpush.msra.mxu0 %v514
      %2198 = vmatpush.msra.mxu0 %v500
      %2199 = vmatpush.msra.mxu0 %v486
      %2200 = vmatpush.msra.mxu0 %v472
      %2201 = vmatpush.msra.mxu0 %v458
      %2202 = vmatmul.f32.gmra.mxu0 %v224
      %v2203 = vpop.f32.mrf.mxu0
      %v2204 = vadd.f32 %v2184, %v2203
      %2205 = vdwg.mxu0
      %2206 = vmatpush.msra.mxu0 %v892
      %2207 = vmatpush.msra.mxu0 %v878
      %2208 = vmatpush.msra.mxu0 %v864
      %2209 = vmatpush.msra.mxu0 %v850
      %2210 = vmatpush.msra.mxu0 %v836
      %2211 = vmatpush.msra.mxu0 %v822
      %2212 = vmatpush.msra.mxu0 %v808
      %2213 = vmatpush.msra.mxu0 %v794
      %2214 = vmatpush.msra.mxu0 %v780
      %2215 = vmatpush.msra.mxu0 %v766
      %2216 = vmatpush.msra.mxu0 %v752
      %2217 = vmatpush.msra.mxu0 %v738
      %2218 = vmatpush.msra.mxu0 %v724
      %2219 = vmatpush.msra.mxu0 %v710
      %2220 = vmatpush.msra.mxu0 %v696
      %2221 = vmatpush.msra.mxu0 %v682
      %2222 = vmatmul.f32.gmra.mxu0 %v225
      %v2223 = vpop.f32.mrf.mxu0
      %v2224 = vadd.f32 %v2204, %v2223
      %2225 = vdwg.mxu0
      %2226 = vmatpush.msra.mxu0 %v1116
      %2227 = vmatpush.msra.mxu0 %v1102
      %2228 = vmatpush.msra.mxu0 %v1088
      %2229 = vmatpush.msra.mxu0 %v1074
      %2230 = vmatpush.msra.mxu0 %v1060
      %2231 = vmatpush.msra.mxu0 %v1046
      %2232 = vmatpush.msra.mxu0 %v1032
      %2233 = vmatpush.msra.mxu0 %v1018
      %2234 = vmatpush.msra.mxu0 %v1004
      %2235 = vmatpush.msra.mxu0 %v990
      %2236 = vmatpush.msra.mxu0 %v976
      %2237 = vmatpush.msra.mxu0 %v962
      %2238 = vmatpush.msra.mxu0 %v948
      %2239 = vmatpush.msra.mxu0 %v934
      %2240 = vmatpush.msra.mxu0 %v920
      %2241 = vmatpush.msra.mxu0 %v906
      %2242 = vmatmul.f32.gmra.mxu0 %v226
      %v2243 = vpop.f32.mrf.mxu0
      %v2244 = vadd.f32 %v2224, %v2243
      %2245 = vdwg.mxu0
      %2246 = vmatpush.msra.mxu0 %v1340
      %2247 = vmatpush.msra.mxu0 %v1326
      %2248 = vmatpush.msra.mxu0 %v1312
      %2249 = vmatpush.msra.mxu0 %v1298
      %2250 = vmatpush.msra.mxu0 %v1284
      %2251 = vmatpush.msra.mxu0 %v1270
      %2252 = vmatpush.msra.mxu0 %v1256
      %2253 = vmatpush.msra.mxu0 %v1242
      %2254 = vmatpush.msra.mxu0 %v1228
      %2255 = vmatpush.msra.mxu0 %v1214
      %2256 = vmatpush.msra.mxu0 %v1200
      %2257 = vmatpush.msra.mxu0 %v1186
      %2258 = vmatpush.msra.mxu0 %v1172
      %2259 = vmatpush.msra.mxu0 %v1158
      %2260 = vmatpush.msra.mxu0 %v1144
      %2261 = vmatpush.msra.mxu0 %v1130
      %2262 = vmatmul.f32.gmra.mxu0 %v227
      %v2263 = vpop.f32.mrf.mxu0
      %v2264 = vadd.f32 %v2244, %v2263
      %2265 = vdwg.mxu0
      %2266 = vmatpush.msra.mxu0 %v1564
      %2267 = vmatpush.msra.mxu0 %v1550
      %2268 = vmatpush.msra.mxu0 %v1536
      %2269 = vmatpush.msra.mxu0 %v1522
      %2270 = vmatpush.msra.mxu0 %v1508
      %2271 = vmatpush.msra.mxu0 %v1494
      %2272 = vmatpush.msra.mxu0 %v1480
      %2273 = vmatpush.msra.mxu0 %v1466
      %2274 = vmatpush.msra.mxu0 %v1452
      %2275 = vmatpush.msra.mxu0 %v1438
      %2276 = vmatpush.msra.mxu0 %v1424
      %2277 = vmatpush.msra.mxu0 %v1410
      %2278 = vmatpush.msra.mxu0 %v1396
      %2279 = vmatpush.msra.mxu0 %v1382
      %2280 = vmatpush.msra.mxu0 %v1368
      %2281 = vmatpush.msra.mxu0 %v1354
      %2282 = vmatmul.f32.gmra.mxu0 %v228
      %v2283 = vpop.f32.mrf.mxu0
      %v2284 = vadd.f32 %v2264, %v2283
      %2285 = vdwg.mxu0
      %2286 = vmatpush.msra.mxu0 0.0
      %2287 = vmatpush.msra.mxu0 0.0
      %2288 = vmatpush.msra.mxu0 0.0
      %2289 = vmatpush.msra.mxu0 0.0
      %2290 = vmatpush.msra.mxu0 0.0
      %2291 = vmatpush.msra.mxu0 0.0
      %2292 = vmatpush.msra.mxu0 0.0
      %2293 = vmatpush.msra.mxu0 0.0
      %2294 = vmatpush.msra.mxu0 0.0
      %2295 = vmatpush.msra.mxu0 0.0
      %2296 = vmatpush.msra.mxu0 0.0
      %2297 = vmatpush.msra.mxu0 0.0
      %2298 = vmatpush.msra.mxu0 0.0
      %2299 = vmatpush.msra.mxu0 0.0
      %2300 = vmatpush.msra.mxu0 %v1592
      %2301 = vmatpush.msra.mxu0 %v1578
      %2302 = vmatmul.f32.gmra.mxu0 %v1604
      %v2303 = vpop.f32.mrf.mxu0
      %v2304 = vadd.f32 %v2284, %v2303
      %2305 = vdwg.mxu0
      %2306 = vmatpush.msra.mxu0 %v445
      %2307 = vmatpush.msra.mxu0 %v431
      %2308 = vmatpush.msra.mxu0 %v417
      %2309 = vmatpush.msra.mxu0 %v403
      %2310 = vmatpush.msra.mxu0 %v389
      %2311 = vmatpush.msra.mxu0 %v375
      %2312 = vmatpush.msra.mxu0 %v361
      %2313 = vmatpush.msra.mxu0 %v347
      %2314 = vmatpush.msra.mxu0 %v333
      %2315 = vmatpush.msra.mxu0 %v319
      %2316 = vmatpush.msra.mxu0 %v305
      %2317 = vmatpush.msra.mxu0 %v291
      %2318 = vmatpush.msra.mxu0 %v277
      %2319 = vmatpush.msra.mxu0 %v263
      %2320 = vmatpush.msra.mxu0 %v249
      %2321 = vmatpush.msra.mxu0 %v235
      %2322 = vmatmul.f32.gmra.mxu0 %v223
      %v2323 = vpop.f32.mrf.mxu0
      %v2324 = vadd.f32 0.0, %v2323
      %2325 = vdwg.mxu0
      %2326 = vmatpush.msra.mxu0 %v669
      %2327 = vmatpush.msra.mxu0 %v655
      %2328 = vmatpush.msra.mxu0 %v641
      %2329 = vmatpush.msra.mxu0 %v627
      %2330 = vmatpush.msra.mxu0 %v613
      %2331 = vmatpush.msra.mxu0 %v599
      %2332 = vmatpush.msra.mxu0 %v585
      %2333 = vmatpush.msra.mxu0 %v571
      %2334 = vmatpush.msra.mxu0 %v557
      %2335 = vmatpush.msra.mxu0 %v543
      %2336 = vmatpush.msra.mxu0 %v529
      %2337 = vmatpush.msra.mxu0 %v515
      %2338 = vmatpush.msra.mxu0 %v501
      %2339 = vmatpush.msra.mxu0 %v487
      %2340 = vmatpush.msra.mxu0 %v473
      %2341 = vmatpush.msra.mxu0 %v459
      %2342 = vmatmul.f32.gmra.mxu0 %v224
      %v2343 = vpop.f32.mrf.mxu0
      %v2344 = vadd.f32 %v2324, %v2343
      %2345 = vdwg.mxu0
      %2346 = vmatpush.msra.mxu0 %v893
      %2347 = vmatpush.msra.mxu0 %v879
      %2348 = vmatpush.msra.mxu0 %v865
      %2349 = vmatpush.msra.mxu0 %v851
      %2350 = vmatpush.msra.mxu0 %v837
      %2351 = vmatpush.msra.mxu0 %v823
      %2352 = vmatpush.msra.mxu0 %v809
      %2353 = vmatpush.msra.mxu0 %v795
      %2354 = vmatpush.msra.mxu0 %v781
      %2355 = vmatpush.msra.mxu0 %v767
      %2356 = vmatpush.msra.mxu0 %v753
      %2357 = vmatpush.msra.mxu0 %v739
      %2358 = vmatpush.msra.mxu0 %v725
      %2359 = vmatpush.msra.mxu0 %v711
      %2360 = vmatpush.msra.mxu0 %v697
      %2361 = vmatpush.msra.mxu0 %v683
      %2362 = vmatmul.f32.gmra.mxu0 %v225
      %v2363 = vpop.f32.mrf.mxu0
      %v2364 = vadd.f32 %v2344, %v2363
      %2365 = vdwg.mxu0
      %2366 = vmatpush.msra.mxu0 %v1117
      %2367 = vmatpush.msra.mxu0 %v1103
      %2368 = vmatpush.msra.mxu0 %v1089
      %2369 = vmatpush.msra.mxu0 %v1075
      %2370 = vmatpush.msra.mxu0 %v1061
      %2371 = vmatpush.msra.mxu0 %v1047
      %2372 = vmatpush.msra.mxu0 %v1033
      %2373 = vmatpush.msra.mxu0 %v1019
      %2374 = vmatpush.msra.mxu0 %v1005
      %2375 = vmatpush.msra.mxu0 %v991
      %2376 = vmatpush.msra.mxu0 %v977
      %2377 = vmatpush.msra.mxu0 %v963
      %2378 = vmatpush.msra.mxu0 %v949
      %2379 = vmatpush.msra.mxu0 %v935
      %2380 = vmatpush.msra.mxu0 %v921
      %2381 = vmatpush.msra.mxu0 %v907
      %2382 = vmatmul.f32.gmra.mxu0 %v226
      %v2383 = vpop.f32.mrf.mxu0
      %v2384 = vadd.f32 %v2364, %v2383
      %2385 = vdwg.mxu0
      %2386 = vmatpush.msra.mxu0 %v1341
      %2387 = vmatpush.msra.mxu0 %v1327
      %2388 = vmatpush.msra.mxu0 %v1313
      %2389 = vmatpush.msra.mxu0 %v1299
      %2390 = vmatpush.msra.mxu0 %v1285
      %2391 = vmatpush.msra.mxu0 %v1271
      %2392 = vmatpush.msra.mxu0 %v1257
      %2393 = vmatpush.msra.mxu0 %v1243
      %2394 = vmatpush.msra.mxu0 %v1229
      %2395 = vmatpush.msra.mxu0 %v1215
      %2396 = vmatpush.msra.mxu0 %v1201
      %2397 = vmatpush.msra.mxu0 %v1187
      %2398 = vmatpush.msra.mxu0 %v1173
      %2399 = vmatpush.msra.mxu0 %v1159
      %2400 = vmatpush.msra.mxu0 %v1145
      %2401 = vmatpush.msra.mxu0 %v1131
      %2402 = vmatmul.f32.gmra.mxu0 %v227
      %v2403 = vpop.f32.mrf.mxu0
      %v2404 = vadd.f32 %v2384, %v2403
      %2405 = vdwg.mxu0
      %2406 = vmatpush.msra.mxu0 %v1565
      %2407 = vmatpush.msra.mxu0 %v1551
      %2408 = vmatpush.msra.mxu0 %v1537
      %2409 = vmatpush.msra.mxu0 %v1523
      %2410 = vmatpush.msra.mxu0 %v1509
      %2411 = vmatpush.msra.mxu0 %v1495
      %2412 = vmatpush.msra.mxu0 %v1481
      %2413 = vmatpush.msra.mxu0 %v1467
      %2414 = vmatpush.msra.mxu0 %v1453
      %2415 = vmatpush.msra.mxu0 %v1439
      %2416 = vmatpush.msra.mxu0 %v1425
      %2417 = vmatpush.msra.mxu0 %v1411
      %2418 = vmatpush.msra.mxu0 %v1397
      %2419 = vmatpush.msra.mxu0 %v1383
      %2420 = vmatpush.msra.mxu0 %v1369
      %2421 = vmatpush.msra.mxu0 %v1355
      %2422 = vmatmul.f32.gmra.mxu0 %v228
      %v2423 = vpop.f32.mrf.mxu0
      %v2424 = vadd.f32 %v2404, %v2423
      %2425 = vdwg.mxu0
      %2426 = vmatpush.msra.mxu0 0.0
      %2427 = vmatpush.msra.mxu0 0.0
      %2428 = vmatpush.msra.mxu0 0.0
      %2429 = vmatpush.msra.mxu0 0.0
      %2430 = vmatpush.msra.mxu0 0.0
      %2431 = vmatpush.msra.mxu0 0.0
      %2432 = vmatpush.msra.mxu0 0.0
      %2433 = vmatpush.msra.mxu0 0.0
      %2434 = vmatpush.msra.mxu0 0.0
      %2435 = vmatpush.msra.mxu0 0.0
      %2436 = vmatpush.msra.mxu0 0.0
      %2437 = vmatpush.msra.mxu0 0.0
      %2438 = vmatpush.msra.mxu0 0.0
      %2439 = vmatpush.msra.mxu0 0.0
      %2440 = vmatpush.msra.mxu0 %v1593
      %2441 = vmatpush.msra.mxu0 %v1579
      %2442 = vmatmul.f32.gmra.mxu0 %v1604
      %v2443 = vpop.f32.mrf.mxu0
      %v2444 = vadd.f32 %v2424, %v2443
      %2445 = vdwg.mxu0
      %2446 = vmatpush.msra.mxu0 %v446
      %2447 = vmatpush.msra.mxu0 %v432
      %2448 = vmatpush.msra.mxu0 %v418
      %2449 = vmatpush.msra.mxu0 %v404
      %2450 = vmatpush.msra.mxu0 %v390
      %2451 = vmatpush.msra.mxu0 %v376
      %2452 = vmatpush.msra.mxu0 %v362
      %2453 = vmatpush.msra.mxu0 %v348
      %2454 = vmatpush.msra.mxu0 %v334
      %2455 = vmatpush.msra.mxu0 %v320
      %2456 = vmatpush.msra.mxu0 %v306
      %2457 = vmatpush.msra.mxu0 %v292
      %2458 = vmatpush.msra.mxu0 %v278
      %2459 = vmatpush.msra.mxu0 %v264
      %2460 = vmatpush.msra.mxu0 %v250
      %2461 = vmatpush.msra.mxu0 %v236
      %2462 = vmatmul.f32.gmra.mxu0 %v223
      %v2463 = vpop.f32.mrf.mxu0
      %v2464 = vadd.f32 0.0, %v2463
      %2465 = vdwg.mxu0
      %2466 = vmatpush.msra.mxu0 %v670
      %2467 = vmatpush.msra.mxu0 %v656
      %2468 = vmatpush.msra.mxu0 %v642
      %2469 = vmatpush.msra.mxu0 %v628
      %2470 = vmatpush.msra.mxu0 %v614
      %2471 = vmatpush.msra.mxu0 %v600
      %2472 = vmatpush.msra.mxu0 %v586
      %2473 = vmatpush.msra.mxu0 %v572
      %2474 = vmatpush.msra.mxu0 %v558
      %2475 = vmatpush.msra.mxu0 %v544
      %2476 = vmatpush.msra.mxu0 %v530
      %2477 = vmatpush.msra.mxu0 %v516
      %2478 = vmatpush.msra.mxu0 %v502
      %2479 = vmatpush.msra.mxu0 %v488
      %2480 = vmatpush.msra.mxu0 %v474
      %2481 = vmatpush.msra.mxu0 %v460
      %2482 = vmatmul.f32.gmra.mxu0 %v224
      %v2483 = vpop.f32.mrf.mxu0
      %v2484 = vadd.f32 %v2464, %v2483
      %2485 = vdwg.mxu0
      %2486 = vmatpush.msra.mxu0 %v894
      %2487 = vmatpush.msra.mxu0 %v880
      %2488 = vmatpush.msra.mxu0 %v866
      %2489 = vmatpush.msra.mxu0 %v852
      %2490 = vmatpush.msra.mxu0 %v838
      %2491 = vmatpush.msra.mxu0 %v824
      %2492 = vmatpush.msra.mxu0 %v810
      %2493 = vmatpush.msra.mxu0 %v796
      %2494 = vmatpush.msra.mxu0 %v782
      %2495 = vmatpush.msra.mxu0 %v768
      %2496 = vmatpush.msra.mxu0 %v754
      %2497 = vmatpush.msra.mxu0 %v740
      %2498 = vmatpush.msra.mxu0 %v726
      %2499 = vmatpush.msra.mxu0 %v712
      %2500 = vmatpush.msra.mxu0 %v698
      %2501 = vmatpush.msra.mxu0 %v684
      %2502 = vmatmul.f32.gmra.mxu0 %v225
      %v2503 = vpop.f32.mrf.mxu0
      %v2504 = vadd.f32 %v2484, %v2503
      %2505 = vdwg.mxu0
      %2506 = vmatpush.msra.mxu0 %v1118
      %2507 = vmatpush.msra.mxu0 %v1104
      %2508 = vmatpush.msra.mxu0 %v1090
      %2509 = vmatpush.msra.mxu0 %v1076
      %2510 = vmatpush.msra.mxu0 %v1062
      %2511 = vmatpush.msra.mxu0 %v1048
      %2512 = vmatpush.msra.mxu0 %v1034
      %2513 = vmatpush.msra.mxu0 %v1020
      %2514 = vmatpush.msra.mxu0 %v1006
      %2515 = vmatpush.msra.mxu0 %v992
      %2516 = vmatpush.msra.mxu0 %v978
      %2517 = vmatpush.msra.mxu0 %v964
      %2518 = vmatpush.msra.mxu0 %v950
      %2519 = vmatpush.msra.mxu0 %v936
      %2520 = vmatpush.msra.mxu0 %v922
      %2521 = vmatpush.msra.mxu0 %v908
      %2522 = vmatmul.f32.gmra.mxu0 %v226
      %v2523 = vpop.f32.mrf.mxu0
      %v2524 = vadd.f32 %v2504, %v2523
      %2525 = vdwg.mxu0
      %2526 = vmatpush.msra.mxu0 %v1342
      %2527 = vmatpush.msra.mxu0 %v1328
      %2528 = vmatpush.msra.mxu0 %v1314
      %2529 = vmatpush.msra.mxu0 %v1300
      %2530 = vmatpush.msra.mxu0 %v1286
      %2531 = vmatpush.msra.mxu0 %v1272
      %2532 = vmatpush.msra.mxu0 %v1258
      %2533 = vmatpush.msra.mxu0 %v1244
      %2534 = vmatpush.msra.mxu0 %v1230
      %2535 = vmatpush.msra.mxu0 %v1216
      %2536 = vmatpush.msra.mxu0 %v1202
      %2537 = vmatpush.msra.mxu0 %v1188
      %2538 = vmatpush.msra.mxu0 %v1174
      %2539 = vmatpush.msra.mxu0 %v1160
      %2540 = vmatpush.msra.mxu0 %v1146
      %2541 = vmatpush.msra.mxu0 %v1132
      %2542 = vmatmul.f32.gmra.mxu0 %v227
      %v2543 = vpop.f32.mrf.mxu0
      %v2544 = vadd.f32 %v2524, %v2543
      %2545 = vdwg.mxu0
      %2546 = vmatpush.msra.mxu0 %v1566
      %2547 = vmatpush.msra.mxu0 %v1552
      %2548 = vmatpush.msra.mxu0 %v1538
      %2549 = vmatpush.msra.mxu0 %v1524
      %2550 = vmatpush.msra.mxu0 %v1510
      %2551 = vmatpush.msra.mxu0 %v1496
      %2552 = vmatpush.msra.mxu0 %v1482
      %2553 = vmatpush.msra.mxu0 %v1468
      %2554 = vmatpush.msra.mxu0 %v1454
      %2555 = vmatpush.msra.mxu0 %v1440
      %2556 = vmatpush.msra.mxu0 %v1426
      %2557 = vmatpush.msra.mxu0 %v1412
      %2558 = vmatpush.msra.mxu0 %v1398
      %2559 = vmatpush.msra.mxu0 %v1384
      %2560 = vmatpush.msra.mxu0 %v1370
      %2561 = vmatpush.msra.mxu0 %v1356
      %2562 = vmatmul.f32.gmra.mxu0 %v228
      %v2563 = vpop.f32.mrf.mxu0
      %v2564 = vadd.f32 %v2544, %v2563
      %2565 = vdwg.mxu0
      %2566 = vmatpush.msra.mxu0 0.0
      %2567 = vmatpush.msra.mxu0 0.0
      %2568 = vmatpush.msra.mxu0 0.0
      %2569 = vmatpush.msra.mxu0 0.0
      %2570 = vmatpush.msra.mxu0 0.0
      %2571 = vmatpush.msra.mxu0 0.0
      %2572 = vmatpush.msra.mxu0 0.0
      %2573 = vmatpush.msra.mxu0 0.0
      %2574 = vmatpush.msra.mxu0 0.0
      %2575 = vmatpush.msra.mxu0 0.0
      %2576 = vmatpush.msra.mxu0 0.0
      %2577 = vmatpush.msra.mxu0 0.0
      %2578 = vmatpush.msra.mxu0 0.0
      %2579 = vmatpush.msra.mxu0 0.0
      %2580 = vmatpush.msra.mxu0 %v1594
      %2581 = vmatpush.msra.mxu0 %v1580
      %2582 = vmatmul.f32.gmra.mxu0 %v1604
      %v2583 = vpop.f32.mrf.mxu0
      %v2584 = vadd.f32 %v2564, %v2583
      %2585 = vdwg.mxu0
      %2586 = vmatpush.msra.mxu0 %v447
      %2587 = vmatpush.msra.mxu0 %v433
      %2588 = vmatpush.msra.mxu0 %v419
      %2589 = vmatpush.msra.mxu0 %v405
      %2590 = vmatpush.msra.mxu0 %v391
      %2591 = vmatpush.msra.mxu0 %v377
      %2592 = vmatpush.msra.mxu0 %v363
      %2593 = vmatpush.msra.mxu0 %v349
      %2594 = vmatpush.msra.mxu0 %v335
      %2595 = vmatpush.msra.mxu0 %v321
      %2596 = vmatpush.msra.mxu0 %v307
      %2597 = vmatpush.msra.mxu0 %v293
      %2598 = vmatpush.msra.mxu0 %v279
      %2599 = vmatpush.msra.mxu0 %v265
      %2600 = vmatpush.msra.mxu0 %v251
      %2601 = vmatpush.msra.mxu0 %v237
      %2602 = vmatmul.f32.gmra.mxu0 %v223
      %v2603 = vpop.f32.mrf.mxu0
      %v2604 = vadd.f32 0.0, %v2603
      %2605 = vdwg.mxu0
      %2606 = vmatpush.msra.mxu0 %v671
      %2607 = vmatpush.msra.mxu0 %v657
      %2608 = vmatpush.msra.mxu0 %v643
      %2609 = vmatpush.msra.mxu0 %v629
      %2610 = vmatpush.msra.mxu0 %v615
      %2611 = vmatpush.msra.mxu0 %v601
      %2612 = vmatpush.msra.mxu0 %v587
      %2613 = vmatpush.msra.mxu0 %v573
      %2614 = vmatpush.msra.mxu0 %v559
      %2615 = vmatpush.msra.mxu0 %v545
      %2616 = vmatpush.msra.mxu0 %v531
      %2617 = vmatpush.msra.mxu0 %v517
      %2618 = vmatpush.msra.mxu0 %v503
      %2619 = vmatpush.msra.mxu0 %v489
      %2620 = vmatpush.msra.mxu0 %v475
      %2621 = vmatpush.msra.mxu0 %v461
      %2622 = vmatmul.f32.gmra.mxu0 %v224
      %v2623 = vpop.f32.mrf.mxu0
      %v2624 = vadd.f32 %v2604, %v2623
      %2625 = vdwg.mxu0
      %2626 = vmatpush.msra.mxu0 %v895
      %2627 = vmatpush.msra.mxu0 %v881
      %2628 = vmatpush.msra.mxu0 %v867
      %2629 = vmatpush.msra.mxu0 %v853
      %2630 = vmatpush.msra.mxu0 %v839
      %2631 = vmatpush.msra.mxu0 %v825
      %2632 = vmatpush.msra.mxu0 %v811
      %2633 = vmatpush.msra.mxu0 %v797
      %2634 = vmatpush.msra.mxu0 %v783
      %2635 = vmatpush.msra.mxu0 %v769
      %2636 = vmatpush.msra.mxu0 %v755
      %2637 = vmatpush.msra.mxu0 %v741
      %2638 = vmatpush.msra.mxu0 %v727
      %2639 = vmatpush.msra.mxu0 %v713
      %2640 = vmatpush.msra.mxu0 %v699
      %2641 = vmatpush.msra.mxu0 %v685
      %2642 = vmatmul.f32.gmra.mxu0 %v225
      %v2643 = vpop.f32.mrf.mxu0
      %v2644 = vadd.f32 %v2624, %v2643
      %2645 = vdwg.mxu0
      %2646 = vmatpush.msra.mxu0 %v1119
      %2647 = vmatpush.msra.mxu0 %v1105
      %2648 = vmatpush.msra.mxu0 %v1091
      %2649 = vmatpush.msra.mxu0 %v1077
      %2650 = vmatpush.msra.mxu0 %v1063
      %2651 = vmatpush.msra.mxu0 %v1049
      %2652 = vmatpush.msra.mxu0 %v1035
      %2653 = vmatpush.msra.mxu0 %v1021
      %2654 = vmatpush.msra.mxu0 %v1007
      %2655 = vmatpush.msra.mxu0 %v993
      %2656 = vmatpush.msra.mxu0 %v979
      %2657 = vmatpush.msra.mxu0 %v965
      %2658 = vmatpush.msra.mxu0 %v951
      %2659 = vmatpush.msra.mxu0 %v937
      %2660 = vmatpush.msra.mxu0 %v923
      %2661 = vmatpush.msra.mxu0 %v909
      %2662 = vmatmul.f32.gmra.mxu0 %v226
      %v2663 = vpop.f32.mrf.mxu0
      %v2664 = vadd.f32 %v2644, %v2663
      %2665 = vdwg.mxu0
      %2666 = vmatpush.msra.mxu0 %v1343
      %2667 = vmatpush.msra.mxu0 %v1329
      %2668 = vmatpush.msra.mxu0 %v1315
      %2669 = vmatpush.msra.mxu0 %v1301
      %2670 = vmatpush.msra.mxu0 %v1287
      %2671 = vmatpush.msra.mxu0 %v1273
      %2672 = vmatpush.msra.mxu0 %v1259
      %2673 = vmatpush.msra.mxu0 %v1245
      %2674 = vmatpush.msra.mxu0 %v1231
      %2675 = vmatpush.msra.mxu0 %v1217
      %2676 = vmatpush.msra.mxu0 %v1203
      %2677 = vmatpush.msra.mxu0 %v1189
      %2678 = vmatpush.msra.mxu0 %v1175
      %2679 = vmatpush.msra.mxu0 %v1161
      %2680 = vmatpush.msra.mxu0 %v1147
      %2681 = vmatpush.msra.mxu0 %v1133
      %2682 = vmatmul.f32.gmra.mxu0 %v227
      %v2683 = vpop.f32.mrf.mxu0
      %v2684 = vadd.f32 %v2664, %v2683
      %2685 = vdwg.mxu0
      %2686 = vmatpush.msra.mxu0 %v1567
      %2687 = vmatpush.msra.mxu0 %v1553
      %2688 = vmatpush.msra.mxu0 %v1539
      %2689 = vmatpush.msra.mxu0 %v1525
      %2690 = vmatpush.msra.mxu0 %v1511
      %2691 = vmatpush.msra.mxu0 %v1497
      %2692 = vmatpush.msra.mxu0 %v1483
      %2693 = vmatpush.msra.mxu0 %v1469
      %2694 = vmatpush.msra.mxu0 %v1455
      %2695 = vmatpush.msra.mxu0 %v1441
      %2696 = vmatpush.msra.mxu0 %v1427
      %2697 = vmatpush.msra.mxu0 %v1413
      %2698 = vmatpush.msra.mxu0 %v1399
      %2699 = vmatpush.msra.mxu0 %v1385
      %2700 = vmatpush.msra.mxu0 %v1371
      %2701 = vmatpush.msra.mxu0 %v1357
      %2702 = vmatmul.f32.gmra.mxu0 %v228
      %v2703 = vpop.f32.mrf.mxu0
      %v2704 = vadd.f32 %v2684, %v2703
      %2705 = vdwg.mxu0
      %2706 = vmatpush.msra.mxu0 0.0
      %2707 = vmatpush.msra.mxu0 0.0
      %2708 = vmatpush.msra.mxu0 0.0
      %2709 = vmatpush.msra.mxu0 0.0
      %2710 = vmatpush.msra.mxu0 0.0
      %2711 = vmatpush.msra.mxu0 0.0
      %2712 = vmatpush.msra.mxu0 0.0
      %2713 = vmatpush.msra.mxu0 0.0
      %2714 = vmatpush.msra.mxu0 0.0
      %2715 = vmatpush.msra.mxu0 0.0
      %2716 = vmatpush.msra.mxu0 0.0
      %2717 = vmatpush.msra.mxu0 0.0
      %2718 = vmatpush.msra.mxu0 0.0
      %2719 = vmatpush.msra.mxu0 0.0
      %2720 = vmatpush.msra.mxu0 %v1595
      %2721 = vmatpush.msra.mxu0 %v1581
      %2722 = vmatmul.f32.gmra.mxu0 %v1604
      %v2723 = vpop.f32.mrf.mxu0
      %v2724 = vadd.f32 %v2704, %v2723
      %2725 = vdwg.mxu0
      %2726 = vmatpush.msra.mxu0 %v448
      %2727 = vmatpush.msra.mxu0 %v434
      %2728 = vmatpush.msra.mxu0 %v420
      %2729 = vmatpush.msra.mxu0 %v406
      %2730 = vmatpush.msra.mxu0 %v392
      %2731 = vmatpush.msra.mxu0 %v378
      %2732 = vmatpush.msra.mxu0 %v364
      %2733 = vmatpush.msra.mxu0 %v350
      %2734 = vmatpush.msra.mxu0 %v336
      %2735 = vmatpush.msra.mxu0 %v322
      %2736 = vmatpush.msra.mxu0 %v308
      %2737 = vmatpush.msra.mxu0 %v294
      %2738 = vmatpush.msra.mxu0 %v280
      %2739 = vmatpush.msra.mxu0 %v266
      %2740 = vmatpush.msra.mxu0 %v252
      %2741 = vmatpush.msra.mxu0 %v238
      %2742 = vmatmul.f32.gmra.mxu0 %v223
      %v2743 = vpop.f32.mrf.mxu0
      %v2744 = vadd.f32 0.0, %v2743
      %2745 = vdwg.mxu0
      %2746 = vmatpush.msra.mxu0 %v672
      %2747 = vmatpush.msra.mxu0 %v658
      %2748 = vmatpush.msra.mxu0 %v644
      %2749 = vmatpush.msra.mxu0 %v630
      %2750 = vmatpush.msra.mxu0 %v616
      %2751 = vmatpush.msra.mxu0 %v602
      %2752 = vmatpush.msra.mxu0 %v588
      %2753 = vmatpush.msra.mxu0 %v574
      %2754 = vmatpush.msra.mxu0 %v560
      %2755 = vmatpush.msra.mxu0 %v546
      %2756 = vmatpush.msra.mxu0 %v532
      %2757 = vmatpush.msra.mxu0 %v518
      %2758 = vmatpush.msra.mxu0 %v504
      %2759 = vmatpush.msra.mxu0 %v490
      %2760 = vmatpush.msra.mxu0 %v476
      %2761 = vmatpush.msra.mxu0 %v462
      %2762 = vmatmul.f32.gmra.mxu0 %v224
      %v2763 = vpop.f32.mrf.mxu0
      %v2764 = vadd.f32 %v2744, %v2763
      %2765 = vdwg.mxu0
      %2766 = vmatpush.msra.mxu0 %v896
      %2767 = vmatpush.msra.mxu0 %v882
      %2768 = vmatpush.msra.mxu0 %v868
      %2769 = vmatpush.msra.mxu0 %v854
      %2770 = vmatpush.msra.mxu0 %v840
      %2771 = vmatpush.msra.mxu0 %v826
      %2772 = vmatpush.msra.mxu0 %v812
      %2773 = vmatpush.msra.mxu0 %v798
      %2774 = vmatpush.msra.mxu0 %v784
      %2775 = vmatpush.msra.mxu0 %v770
      %2776 = vmatpush.msra.mxu0 %v756
      %2777 = vmatpush.msra.mxu0 %v742
      %2778 = vmatpush.msra.mxu0 %v728
      %2779 = vmatpush.msra.mxu0 %v714
      %2780 = vmatpush.msra.mxu0 %v700
      %2781 = vmatpush.msra.mxu0 %v686
      %2782 = vmatmul.f32.gmra.mxu0 %v225
      %v2783 = vpop.f32.mrf.mxu0
      %v2784 = vadd.f32 %v2764, %v2783
      %2785 = vdwg.mxu0
      %2786 = vmatpush.msra.mxu0 %v1120
      %2787 = vmatpush.msra.mxu0 %v1106
      %2788 = vmatpush.msra.mxu0 %v1092
      %2789 = vmatpush.msra.mxu0 %v1078
      %2790 = vmatpush.msra.mxu0 %v1064
      %2791 = vmatpush.msra.mxu0 %v1050
      %2792 = vmatpush.msra.mxu0 %v1036
      %2793 = vmatpush.msra.mxu0 %v1022
      %2794 = vmatpush.msra.mxu0 %v1008
      %2795 = vmatpush.msra.mxu0 %v994
      %2796 = vmatpush.msra.mxu0 %v980
      %2797 = vmatpush.msra.mxu0 %v966
      %2798 = vmatpush.msra.mxu0 %v952
      %2799 = vmatpush.msra.mxu0 %v938
      %2800 = vmatpush.msra.mxu0 %v924
      %2801 = vmatpush.msra.mxu0 %v910
      %2802 = vmatmul.f32.gmra.mxu0 %v226
      %v2803 = vpop.f32.mrf.mxu0
      %v2804 = vadd.f32 %v2784, %v2803
      %2805 = vdwg.mxu0
      %2806 = vmatpush.msra.mxu0 %v1344
      %2807 = vmatpush.msra.mxu0 %v1330
      %2808 = vmatpush.msra.mxu0 %v1316
      %2809 = vmatpush.msra.mxu0 %v1302
      %2810 = vmatpush.msra.mxu0 %v1288
      %2811 = vmatpush.msra.mxu0 %v1274
      %2812 = vmatpush.msra.mxu0 %v1260
      %2813 = vmatpush.msra.mxu0 %v1246
      %2814 = vmatpush.msra.mxu0 %v1232
      %2815 = vmatpush.msra.mxu0 %v1218
      %2816 = vmatpush.msra.mxu0 %v1204
      %2817 = vmatpush.msra.mxu0 %v1190
      %2818 = vmatpush.msra.mxu0 %v1176
      %2819 = vmatpush.msra.mxu0 %v1162
      %2820 = vmatpush.msra.mxu0 %v1148
      %2821 = vmatpush.msra.mxu0 %v1134
      %2822 = vmatmul.f32.gmra.mxu0 %v227
      %v2823 = vpop.f32.mrf.mxu0
      %v2824 = vadd.f32 %v2804, %v2823
      %2825 = vdwg.mxu0
      %2826 = vmatpush.msra.mxu0 %v1568
      %2827 = vmatpush.msra.mxu0 %v1554
      %2828 = vmatpush.msra.mxu0 %v1540
      %2829 = vmatpush.msra.mxu0 %v1526
      %2830 = vmatpush.msra.mxu0 %v1512
      %2831 = vmatpush.msra.mxu0 %v1498
      %2832 = vmatpush.msra.mxu0 %v1484
      %2833 = vmatpush.msra.mxu0 %v1470
      %2834 = vmatpush.msra.mxu0 %v1456
      %2835 = vmatpush.msra.mxu0 %v1442
      %2836 = vmatpush.msra.mxu0 %v1428
      %2837 = vmatpush.msra.mxu0 %v1414
      %2838 = vmatpush.msra.mxu0 %v1400
      %2839 = vmatpush.msra.mxu0 %v1386
      %2840 = vmatpush.msra.mxu0 %v1372
      %2841 = vmatpush.msra.mxu0 %v1358
      %2842 = vmatmul.f32.gmra.mxu0 %v228
      %v2843 = vpop.f32.mrf.mxu0
      %v2844 = vadd.f32 %v2824, %v2843
      %2845 = vdwg.mxu0
      %2846 = vmatpush.msra.mxu0 0.0
      %2847 = vmatpush.msra.mxu0 0.0
      %2848 = vmatpush.msra.mxu0 0.0
      %2849 = vmatpush.msra.mxu0 0.0
      %2850 = vmatpush.msra.mxu0 0.0
      %2851 = vmatpush.msra.mxu0 0.0
      %2852 = vmatpush.msra.mxu0 0.0
      %2853 = vmatpush.msra.mxu0 0.0
      %2854 = vmatpush.msra.mxu0 0.0
      %2855 = vmatpush.msra.mxu0 0.0
      %2856 = vmatpush.msra.mxu0 0.0
      %2857 = vmatpush.msra.mxu0 0.0
      %2858 = vmatpush.msra.mxu0 0.0
      %2859 = vmatpush.msra.mxu0 0.0
      %2860 = vmatpush.msra.mxu0 %v1596
      %2861 = vmatpush.msra.mxu0 %v1582
      %2862 = vmatmul.f32.gmra.mxu0 %v1604
      %v2863 = vpop.f32.mrf.mxu0
      %v2864 = vadd.f32 %v2844, %v2863
      %2865 = vdwg.mxu0
      %2866 = vmatpush.msra.mxu0 %v449
      %2867 = vmatpush.msra.mxu0 %v435
      %2868 = vmatpush.msra.mxu0 %v421
      %2869 = vmatpush.msra.mxu0 %v407
      %2870 = vmatpush.msra.mxu0 %v393
      %2871 = vmatpush.msra.mxu0 %v379
      %2872 = vmatpush.msra.mxu0 %v365
      %2873 = vmatpush.msra.mxu0 %v351
      %2874 = vmatpush.msra.mxu0 %v337
      %2875 = vmatpush.msra.mxu0 %v323
      %2876 = vmatpush.msra.mxu0 %v309
      %2877 = vmatpush.msra.mxu0 %v295
      %2878 = vmatpush.msra.mxu0 %v281
      %2879 = vmatpush.msra.mxu0 %v267
      %2880 = vmatpush.msra.mxu0 %v253
      %2881 = vmatpush.msra.mxu0 %v239
      %2882 = vmatmul.f32.gmra.mxu0 %v223
      %v2883 = vpop.f32.mrf.mxu0
      %v2884 = vadd.f32 0.0, %v2883
      %2885 = vdwg.mxu0
      %2886 = vmatpush.msra.mxu0 %v673
      %2887 = vmatpush.msra.mxu0 %v659
      %2888 = vmatpush.msra.mxu0 %v645
      %2889 = vmatpush.msra.mxu0 %v631
      %2890 = vmatpush.msra.mxu0 %v617
      %2891 = vmatpush.msra.mxu0 %v603
      %2892 = vmatpush.msra.mxu0 %v589
      %2893 = vmatpush.msra.mxu0 %v575
      %2894 = vmatpush.msra.mxu0 %v561
      %2895 = vmatpush.msra.mxu0 %v547
      %2896 = vmatpush.msra.mxu0 %v533
      %2897 = vmatpush.msra.mxu0 %v519
      %2898 = vmatpush.msra.mxu0 %v505
      %2899 = vmatpush.msra.mxu0 %v491
      %2900 = vmatpush.msra.mxu0 %v477
      %2901 = vmatpush.msra.mxu0 %v463
      %2902 = vmatmul.f32.gmra.mxu0 %v224
      %v2903 = vpop.f32.mrf.mxu0
      %v2904 = vadd.f32 %v2884, %v2903
      %2905 = vdwg.mxu0
      %2906 = vmatpush.msra.mxu0 %v897
      %2907 = vmatpush.msra.mxu0 %v883
      %2908 = vmatpush.msra.mxu0 %v869
      %2909 = vmatpush.msra.mxu0 %v855
      %2910 = vmatpush.msra.mxu0 %v841
      %2911 = vmatpush.msra.mxu0 %v827
      %2912 = vmatpush.msra.mxu0 %v813
      %2913 = vmatpush.msra.mxu0 %v799
      %2914 = vmatpush.msra.mxu0 %v785
      %2915 = vmatpush.msra.mxu0 %v771
      %2916 = vmatpush.msra.mxu0 %v757
      %2917 = vmatpush.msra.mxu0 %v743
      %2918 = vmatpush.msra.mxu0 %v729
      %2919 = vmatpush.msra.mxu0 %v715
      %2920 = vmatpush.msra.mxu0 %v701
      %2921 = vmatpush.msra.mxu0 %v687
      %2922 = vmatmul.f32.gmra.mxu0 %v225
      %v2923 = vpop.f32.mrf.mxu0
      %v2924 = vadd.f32 %v2904, %v2923
      %2925 = vdwg.mxu0
      %2926 = vmatpush.msra.mxu0 %v1121
      %2927 = vmatpush.msra.mxu0 %v1107
      %2928 = vmatpush.msra.mxu0 %v1093
      %2929 = vmatpush.msra.mxu0 %v1079
      %2930 = vmatpush.msra.mxu0 %v1065
      %2931 = vmatpush.msra.mxu0 %v1051
      %2932 = vmatpush.msra.mxu0 %v1037
      %2933 = vmatpush.msra.mxu0 %v1023
      %2934 = vmatpush.msra.mxu0 %v1009
      %2935 = vmatpush.msra.mxu0 %v995
      %2936 = vmatpush.msra.mxu0 %v981
      %2937 = vmatpush.msra.mxu0 %v967
      %2938 = vmatpush.msra.mxu0 %v953
      %2939 = vmatpush.msra.mxu0 %v939
      %2940 = vmatpush.msra.mxu0 %v925
      %2941 = vmatpush.msra.mxu0 %v911
      %2942 = vmatmul.f32.gmra.mxu0 %v226
      %v2943 = vpop.f32.mrf.mxu0
      %v2944 = vadd.f32 %v2924, %v2943
      %2945 = vdwg.mxu0
      %2946 = vmatpush.msra.mxu0 %v1345
      %2947 = vmatpush.msra.mxu0 %v1331
      %2948 = vmatpush.msra.mxu0 %v1317
      %2949 = vmatpush.msra.mxu0 %v1303
      %2950 = vmatpush.msra.mxu0 %v1289
      %2951 = vmatpush.msra.mxu0 %v1275
      %2952 = vmatpush.msra.mxu0 %v1261
      %2953 = vmatpush.msra.mxu0 %v1247
      %2954 = vmatpush.msra.mxu0 %v1233
      %2955 = vmatpush.msra.mxu0 %v1219
      %2956 = vmatpush.msra.mxu0 %v1205
      %2957 = vmatpush.msra.mxu0 %v1191
      %2958 = vmatpush.msra.mxu0 %v1177
      %2959 = vmatpush.msra.mxu0 %v1163
      %2960 = vmatpush.msra.mxu0 %v1149
      %2961 = vmatpush.msra.mxu0 %v1135
      %2962 = vmatmul.f32.gmra.mxu0 %v227
      %v2963 = vpop.f32.mrf.mxu0
      %v2964 = vadd.f32 %v2944, %v2963
      %2965 = vdwg.mxu0
      %2966 = vmatpush.msra.mxu0 %v1569
      %2967 = vmatpush.msra.mxu0 %v1555
      %2968 = vmatpush.msra.mxu0 %v1541
      %2969 = vmatpush.msra.mxu0 %v1527
      %2970 = vmatpush.msra.mxu0 %v1513
      %2971 = vmatpush.msra.mxu0 %v1499
      %2972 = vmatpush.msra.mxu0 %v1485
      %2973 = vmatpush.msra.mxu0 %v1471
      %2974 = vmatpush.msra.mxu0 %v1457
      %2975 = vmatpush.msra.mxu0 %v1443
      %2976 = vmatpush.msra.mxu0 %v1429
      %2977 = vmatpush.msra.mxu0 %v1415
      %2978 = vmatpush.msra.mxu0 %v1401
      %2979 = vmatpush.msra.mxu0 %v1387
      %2980 = vmatpush.msra.mxu0 %v1373
      %2981 = vmatpush.msra.mxu0 %v1359
      %2982 = vmatmul.f32.gmra.mxu0 %v228
      %v2983 = vpop.f32.mrf.mxu0
      %v2984 = vadd.f32 %v2964, %v2983
      %2985 = vdwg.mxu0
      %2986 = vmatpush.msra.mxu0 0.0
      %2987 = vmatpush.msra.mxu0 0.0
      %2988 = vmatpush.msra.mxu0 0.0
      %2989 = vmatpush.msra.mxu0 0.0
      %2990 = vmatpush.msra.mxu0 0.0
      %2991 = vmatpush.msra.mxu0 0.0
      %2992 = vmatpush.msra.mxu0 0.0
      %2993 = vmatpush.msra.mxu0 0.0
      %2994 = vmatpush.msra.mxu0 0.0
      %2995 = vmatpush.msra.mxu0 0.0
      %2996 = vmatpush.msra.mxu0 0.0
      %2997 = vmatpush.msra.mxu0 0.0
      %2998 = vmatpush.msra.mxu0 0.0
      %2999 = vmatpush.msra.mxu0 0.0
      %3000 = vmatpush.msra.mxu0 %v1597
      %3001 = vmatpush.msra.mxu0 %v1583
      %3002 = vmatmul.f32.gmra.mxu0 %v1604
      %v3003 = vpop.f32.mrf.mxu0
      %v3004 = vadd.f32 %v2984, %v3003
      %3005 = vdwg.mxu0
      %3006 = vmatpush.msra.mxu0 %v450
      %3007 = vmatpush.msra.mxu0 %v436
      %3008 = vmatpush.msra.mxu0 %v422
      %3009 = vmatpush.msra.mxu0 %v408
      %3010 = vmatpush.msra.mxu0 %v394
      %3011 = vmatpush.msra.mxu0 %v380
      %3012 = vmatpush.msra.mxu0 %v366
      %3013 = vmatpush.msra.mxu0 %v352
      %3014 = vmatpush.msra.mxu0 %v338
      %3015 = vmatpush.msra.mxu0 %v324
      %3016 = vmatpush.msra.mxu0 %v310
      %3017 = vmatpush.msra.mxu0 %v296
      %3018 = vmatpush.msra.mxu0 %v282
      %3019 = vmatpush.msra.mxu0 %v268
      %3020 = vmatpush.msra.mxu0 %v254
      %3021 = vmatpush.msra.mxu0 %v240
      %3022 = vmatmul.f32.gmra.mxu0 %v223
      %v3023 = vpop.f32.mrf.mxu0
      %v3024 = vadd.f32 0.0, %v3023
      %3025 = vdwg.mxu0
      %3026 = vmatpush.msra.mxu0 %v674
      %3027 = vmatpush.msra.mxu0 %v660
      %3028 = vmatpush.msra.mxu0 %v646
      %3029 = vmatpush.msra.mxu0 %v632
      %3030 = vmatpush.msra.mxu0 %v618
      %3031 = vmatpush.msra.mxu0 %v604
      %3032 = vmatpush.msra.mxu0 %v590
      %3033 = vmatpush.msra.mxu0 %v576
      %3034 = vmatpush.msra.mxu0 %v562
      %3035 = vmatpush.msra.mxu0 %v548
      %3036 = vmatpush.msra.mxu0 %v534
      %3037 = vmatpush.msra.mxu0 %v520
      %3038 = vmatpush.msra.mxu0 %v506
      %3039 = vmatpush.msra.mxu0 %v492
      %3040 = vmatpush.msra.mxu0 %v478
      %3041 = vmatpush.msra.mxu0 %v464
      %3042 = vmatmul.f32.gmra.mxu0 %v224
      %v3043 = vpop.f32.mrf.mxu0
      %v3044 = vadd.f32 %v3024, %v3043
      %3045 = vdwg.mxu0
      %3046 = vmatpush.msra.mxu0 %v898
      %3047 = vmatpush.msra.mxu0 %v884
      %3048 = vmatpush.msra.mxu0 %v870
      %3049 = vmatpush.msra.mxu0 %v856
      %3050 = vmatpush.msra.mxu0 %v842
      %3051 = vmatpush.msra.mxu0 %v828
      %3052 = vmatpush.msra.mxu0 %v814
      %3053 = vmatpush.msra.mxu0 %v800
      %3054 = vmatpush.msra.mxu0 %v786
      %3055 = vmatpush.msra.mxu0 %v772
      %3056 = vmatpush.msra.mxu0 %v758
      %3057 = vmatpush.msra.mxu0 %v744
      %3058 = vmatpush.msra.mxu0 %v730
      %3059 = vmatpush.msra.mxu0 %v716
      %3060 = vmatpush.msra.mxu0 %v702
      %3061 = vmatpush.msra.mxu0 %v688
      %3062 = vmatmul.f32.gmra.mxu0 %v225
      %v3063 = vpop.f32.mrf.mxu0
      %v3064 = vadd.f32 %v3044, %v3063
      %3065 = vdwg.mxu0
      %3066 = vmatpush.msra.mxu0 %v1122
      %3067 = vmatpush.msra.mxu0 %v1108
      %3068 = vmatpush.msra.mxu0 %v1094
      %3069 = vmatpush.msra.mxu0 %v1080
      %3070 = vmatpush.msra.mxu0 %v1066
      %3071 = vmatpush.msra.mxu0 %v1052
      %3072 = vmatpush.msra.mxu0 %v1038
      %3073 = vmatpush.msra.mxu0 %v1024
      %3074 = vmatpush.msra.mxu0 %v1010
      %3075 = vmatpush.msra.mxu0 %v996
      %3076 = vmatpush.msra.mxu0 %v982
      %3077 = vmatpush.msra.mxu0 %v968
      %3078 = vmatpush.msra.mxu0 %v954
      %3079 = vmatpush.msra.mxu0 %v940
      %3080 = vmatpush.msra.mxu0 %v926
      %3081 = vmatpush.msra.mxu0 %v912
      %3082 = vmatmul.f32.gmra.mxu0 %v226
      %v3083 = vpop.f32.mrf.mxu0
      %v3084 = vadd.f32 %v3064, %v3083
      %3085 = vdwg.mxu0
      %3086 = vmatpush.msra.mxu0 %v1346
      %3087 = vmatpush.msra.mxu0 %v1332
      %3088 = vmatpush.msra.mxu0 %v1318
      %3089 = vmatpush.msra.mxu0 %v1304
      %3090 = vmatpush.msra.mxu0 %v1290
      %3091 = vmatpush.msra.mxu0 %v1276
      %3092 = vmatpush.msra.mxu0 %v1262
      %3093 = vmatpush.msra.mxu0 %v1248
      %3094 = vmatpush.msra.mxu0 %v1234
      %3095 = vmatpush.msra.mxu0 %v1220
      %3096 = vmatpush.msra.mxu0 %v1206
      %3097 = vmatpush.msra.mxu0 %v1192
      %3098 = vmatpush.msra.mxu0 %v1178
      %3099 = vmatpush.msra.mxu0 %v1164
      %3100 = vmatpush.msra.mxu0 %v1150
      %3101 = vmatpush.msra.mxu0 %v1136
      %3102 = vmatmul.f32.gmra.mxu0 %v227
      %v3103 = vpop.f32.mrf.mxu0
      %v3104 = vadd.f32 %v3084, %v3103
      %3105 = vdwg.mxu0
      %3106 = vmatpush.msra.mxu0 %v1570
      %3107 = vmatpush.msra.mxu0 %v1556
      %3108 = vmatpush.msra.mxu0 %v1542
      %3109 = vmatpush.msra.mxu0 %v1528
      %3110 = vmatpush.msra.mxu0 %v1514
      %3111 = vmatpush.msra.mxu0 %v1500
      %3112 = vmatpush.msra.mxu0 %v1486
      %3113 = vmatpush.msra.mxu0 %v1472
      %3114 = vmatpush.msra.mxu0 %v1458
      %3115 = vmatpush.msra.mxu0 %v1444
      %3116 = vmatpush.msra.mxu0 %v1430
      %3117 = vmatpush.msra.mxu0 %v1416
      %3118 = vmatpush.msra.mxu0 %v1402
      %3119 = vmatpush.msra.mxu0 %v1388
      %3120 = vmatpush.msra.mxu0 %v1374
      %3121 = vmatpush.msra.mxu0 %v1360
      %3122 = vmatmul.f32.gmra.mxu0 %v228
      %v3123 = vpop.f32.mrf.mxu0
      %v3124 = vadd.f32 %v3104, %v3123
      %3125 = vdwg.mxu0
      %3126 = vmatpush.msra.mxu0 0.0
      %3127 = vmatpush.msra.mxu0 0.0
      %3128 = vmatpush.msra.mxu0 0.0
      %3129 = vmatpush.msra.mxu0 0.0
      %3130 = vmatpush.msra.mxu0 0.0
      %3131 = vmatpush.msra.mxu0 0.0
      %3132 = vmatpush.msra.mxu0 0.0
      %3133 = vmatpush.msra.mxu0 0.0
      %3134 = vmatpush.msra.mxu0 0.0
      %3135 = vmatpush.msra.mxu0 0.0
      %3136 = vmatpush.msra.mxu0 0.0
      %3137 = vmatpush.msra.mxu0 0.0
      %3138 = vmatpush.msra.mxu0 0.0
      %3139 = vmatpush.msra.mxu0 0.0
      %3140 = vmatpush.msra.mxu0 %v1598
      %3141 = vmatpush.msra.mxu0 %v1584
      %3142 = vmatmul.f32.gmra.mxu0 %v1604
      %v3143 = vpop.f32.mrf.mxu0
      %v3144 = vadd.f32 %v3124, %v3143
      %3145 = vdwg.mxu0
      %3146 = vmatpush.msra.mxu0 %v451
      %3147 = vmatpush.msra.mxu0 %v437
      %3148 = vmatpush.msra.mxu0 %v423
      %3149 = vmatpush.msra.mxu0 %v409
      %3150 = vmatpush.msra.mxu0 %v395
      %3151 = vmatpush.msra.mxu0 %v381
      %3152 = vmatpush.msra.mxu0 %v367
      %3153 = vmatpush.msra.mxu0 %v353
      %3154 = vmatpush.msra.mxu0 %v339
      %3155 = vmatpush.msra.mxu0 %v325
      %3156 = vmatpush.msra.mxu0 %v311
      %3157 = vmatpush.msra.mxu0 %v297
      %3158 = vmatpush.msra.mxu0 %v283
      %3159 = vmatpush.msra.mxu0 %v269
      %3160 = vmatpush.msra.mxu0 %v255
      %3161 = vmatpush.msra.mxu0 %v241
      %3162 = vmatmul.f32.gmra.mxu0 %v223
      %v3163 = vpop.f32.mrf.mxu0
      %v3164 = vadd.f32 0.0, %v3163
      %3165 = vdwg.mxu0
      %3166 = vmatpush.msra.mxu0 %v675
      %3167 = vmatpush.msra.mxu0 %v661
      %3168 = vmatpush.msra.mxu0 %v647
      %3169 = vmatpush.msra.mxu0 %v633
      %3170 = vmatpush.msra.mxu0 %v619
      %3171 = vmatpush.msra.mxu0 %v605
      %3172 = vmatpush.msra.mxu0 %v591
      %3173 = vmatpush.msra.mxu0 %v577
      %3174 = vmatpush.msra.mxu0 %v563
      %3175 = vmatpush.msra.mxu0 %v549
      %3176 = vmatpush.msra.mxu0 %v535
      %3177 = vmatpush.msra.mxu0 %v521
      %3178 = vmatpush.msra.mxu0 %v507
      %3179 = vmatpush.msra.mxu0 %v493
      %3180 = vmatpush.msra.mxu0 %v479
      %3181 = vmatpush.msra.mxu0 %v465
      %3182 = vmatmul.f32.gmra.mxu0 %v224
      %v3183 = vpop.f32.mrf.mxu0
      %v3184 = vadd.f32 %v3164, %v3183
      %3185 = vdwg.mxu0
      %3186 = vmatpush.msra.mxu0 %v899
      %3187 = vmatpush.msra.mxu0 %v885
      %3188 = vmatpush.msra.mxu0 %v871
      %3189 = vmatpush.msra.mxu0 %v857
      %3190 = vmatpush.msra.mxu0 %v843
      %3191 = vmatpush.msra.mxu0 %v829
      %3192 = vmatpush.msra.mxu0 %v815
      %3193 = vmatpush.msra.mxu0 %v801
      %3194 = vmatpush.msra.mxu0 %v787
      %3195 = vmatpush.msra.mxu0 %v773
      %3196 = vmatpush.msra.mxu0 %v759
      %3197 = vmatpush.msra.mxu0 %v745
      %3198 = vmatpush.msra.mxu0 %v731
      %3199 = vmatpush.msra.mxu0 %v717
      %3200 = vmatpush.msra.mxu0 %v703
      %3201 = vmatpush.msra.mxu0 %v689
      %3202 = vmatmul.f32.gmra.mxu0 %v225
      %v3203 = vpop.f32.mrf.mxu0
      %v3204 = vadd.f32 %v3184, %v3203
      %3205 = vdwg.mxu0
      %3206 = vmatpush.msra.mxu0 %v1123
      %3207 = vmatpush.msra.mxu0 %v1109
      %3208 = vmatpush.msra.mxu0 %v1095
      %3209 = vmatpush.msra.mxu0 %v1081
      %3210 = vmatpush.msra.mxu0 %v1067
      %3211 = vmatpush.msra.mxu0 %v1053
      %3212 = vmatpush.msra.mxu0 %v1039
      %3213 = vmatpush.msra.mxu0 %v1025
      %3214 = vmatpush.msra.mxu0 %v1011
      %3215 = vmatpush.msra.mxu0 %v997
      %3216 = vmatpush.msra.mxu0 %v983
      %3217 = vmatpush.msra.mxu0 %v969
      %3218 = vmatpush.msra.mxu0 %v955
      %3219 = vmatpush.msra.mxu0 %v941
      %3220 = vmatpush.msra.mxu0 %v927
      %3221 = vmatpush.msra.mxu0 %v913
      %3222 = vmatmul.f32.gmra.mxu0 %v226
      %v3223 = vpop.f32.mrf.mxu0
      %v3224 = vadd.f32 %v3204, %v3223
      %3225 = vdwg.mxu0
      %3226 = vmatpush.msra.mxu0 %v1347
      %3227 = vmatpush.msra.mxu0 %v1333
      %3228 = vmatpush.msra.mxu0 %v1319
      %3229 = vmatpush.msra.mxu0 %v1305
      %3230 = vmatpush.msra.mxu0 %v1291
      %3231 = vmatpush.msra.mxu0 %v1277
      %3232 = vmatpush.msra.mxu0 %v1263
      %3233 = vmatpush.msra.mxu0 %v1249
      %3234 = vmatpush.msra.mxu0 %v1235
      %3235 = vmatpush.msra.mxu0 %v1221
      %3236 = vmatpush.msra.mxu0 %v1207
      %3237 = vmatpush.msra.mxu0 %v1193
      %3238 = vmatpush.msra.mxu0 %v1179
      %3239 = vmatpush.msra.mxu0 %v1165
      %3240 = vmatpush.msra.mxu0 %v1151
      %3241 = vmatpush.msra.mxu0 %v1137
      %3242 = vmatmul.f32.gmra.mxu0 %v227
      %v3243 = vpop.f32.mrf.mxu0
      %v3244 = vadd.f32 %v3224, %v3243
      %3245 = vdwg.mxu0
      %3246 = vmatpush.msra.mxu0 %v1571
      %3247 = vmatpush.msra.mxu0 %v1557
      %3248 = vmatpush.msra.mxu0 %v1543
      %3249 = vmatpush.msra.mxu0 %v1529
      %3250 = vmatpush.msra.mxu0 %v1515
      %3251 = vmatpush.msra.mxu0 %v1501
      %3252 = vmatpush.msra.mxu0 %v1487
      %3253 = vmatpush.msra.mxu0 %v1473
      %3254 = vmatpush.msra.mxu0 %v1459
      %3255 = vmatpush.msra.mxu0 %v1445
      %3256 = vmatpush.msra.mxu0 %v1431
      %3257 = vmatpush.msra.mxu0 %v1417
      %3258 = vmatpush.msra.mxu0 %v1403
      %3259 = vmatpush.msra.mxu0 %v1389
      %3260 = vmatpush.msra.mxu0 %v1375
      %3261 = vmatpush.msra.mxu0 %v1361
      %3262 = vmatmul.f32.gmra.mxu0 %v228
      %v3263 = vpop.f32.mrf.mxu0
      %v3264 = vadd.f32 %v3244, %v3263
      %3265 = vdwg.mxu0
      %3266 = vmatpush.msra.mxu0 0.0
      %3267 = vmatpush.msra.mxu0 0.0
      %3268 = vmatpush.msra.mxu0 0.0
      %3269 = vmatpush.msra.mxu0 0.0
      %3270 = vmatpush.msra.mxu0 0.0
      %3271 = vmatpush.msra.mxu0 0.0
      %3272 = vmatpush.msra.mxu0 0.0
      %3273 = vmatpush.msra.mxu0 0.0
      %3274 = vmatpush.msra.mxu0 0.0
      %3275 = vmatpush.msra.mxu0 0.0
      %3276 = vmatpush.msra.mxu0 0.0
      %3277 = vmatpush.msra.mxu0 0.0
      %3278 = vmatpush.msra.mxu0 0.0
      %3279 = vmatpush.msra.mxu0 0.0
      %3280 = vmatpush.msra.mxu0 %v1599
      %3281 = vmatpush.msra.mxu0 %v1585
      %3282 = vmatmul.f32.gmra.mxu0 %v1604
      %v3283 = vpop.f32.mrf.mxu0
      %v3284 = vadd.f32 %v3264, %v3283
      %3285 = vdwg.mxu0
      %3286 = vmatpush.msra.mxu0 %v452
      %3287 = vmatpush.msra.mxu0 %v438
      %3288 = vmatpush.msra.mxu0 %v424
      %3289 = vmatpush.msra.mxu0 %v410
      %3290 = vmatpush.msra.mxu0 %v396
      %3291 = vmatpush.msra.mxu0 %v382
      %3292 = vmatpush.msra.mxu0 %v368
      %3293 = vmatpush.msra.mxu0 %v354
      %3294 = vmatpush.msra.mxu0 %v340
      %3295 = vmatpush.msra.mxu0 %v326
      %3296 = vmatpush.msra.mxu0 %v312
      %3297 = vmatpush.msra.mxu0 %v298
      %3298 = vmatpush.msra.mxu0 %v284
      %3299 = vmatpush.msra.mxu0 %v270
      %3300 = vmatpush.msra.mxu0 %v256
      %3301 = vmatpush.msra.mxu0 %v242
      %3302 = vmatmul.f32.gmra.mxu0 %v223
      %v3303 = vpop.f32.mrf.mxu0
      %v3304 = vadd.f32 0.0, %v3303
      %3305 = vdwg.mxu0
      %3306 = vmatpush.msra.mxu0 %v676
      %3307 = vmatpush.msra.mxu0 %v662
      %3308 = vmatpush.msra.mxu0 %v648
      %3309 = vmatpush.msra.mxu0 %v634
      %3310 = vmatpush.msra.mxu0 %v620
      %3311 = vmatpush.msra.mxu0 %v606
      %3312 = vmatpush.msra.mxu0 %v592
      %3313 = vmatpush.msra.mxu0 %v578
      %3314 = vmatpush.msra.mxu0 %v564
      %3315 = vmatpush.msra.mxu0 %v550
      %3316 = vmatpush.msra.mxu0 %v536
      %3317 = vmatpush.msra.mxu0 %v522
      %3318 = vmatpush.msra.mxu0 %v508
      %3319 = vmatpush.msra.mxu0 %v494
      %3320 = vmatpush.msra.mxu0 %v480
      %3321 = vmatpush.msra.mxu0 %v466
      %3322 = vmatmul.f32.gmra.mxu0 %v224
      %v3323 = vpop.f32.mrf.mxu0
      %v3324 = vadd.f32 %v3304, %v3323
      %3325 = vdwg.mxu0
      %3326 = vmatpush.msra.mxu0 %v900
      %3327 = vmatpush.msra.mxu0 %v886
      %3328 = vmatpush.msra.mxu0 %v872
      %3329 = vmatpush.msra.mxu0 %v858
      %3330 = vmatpush.msra.mxu0 %v844
      %3331 = vmatpush.msra.mxu0 %v830
      %3332 = vmatpush.msra.mxu0 %v816
      %3333 = vmatpush.msra.mxu0 %v802
      %3334 = vmatpush.msra.mxu0 %v788
      %3335 = vmatpush.msra.mxu0 %v774
      %3336 = vmatpush.msra.mxu0 %v760
      %3337 = vmatpush.msra.mxu0 %v746
      %3338 = vmatpush.msra.mxu0 %v732
      %3339 = vmatpush.msra.mxu0 %v718
      %3340 = vmatpush.msra.mxu0 %v704
      %3341 = vmatpush.msra.mxu0 %v690
      %3342 = vmatmul.f32.gmra.mxu0 %v225
      %v3343 = vpop.f32.mrf.mxu0
      %v3344 = vadd.f32 %v3324, %v3343
      %3345 = vdwg.mxu0
      %3346 = vmatpush.msra.mxu0 %v1124
      %3347 = vmatpush.msra.mxu0 %v1110
      %3348 = vmatpush.msra.mxu0 %v1096
      %3349 = vmatpush.msra.mxu0 %v1082
      %3350 = vmatpush.msra.mxu0 %v1068
      %3351 = vmatpush.msra.mxu0 %v1054
      %3352 = vmatpush.msra.mxu0 %v1040
      %3353 = vmatpush.msra.mxu0 %v1026
      %3354 = vmatpush.msra.mxu0 %v1012
      %3355 = vmatpush.msra.mxu0 %v998
      %3356 = vmatpush.msra.mxu0 %v984
      %3357 = vmatpush.msra.mxu0 %v970
      %3358 = vmatpush.msra.mxu0 %v956
      %3359 = vmatpush.msra.mxu0 %v942
      %3360 = vmatpush.msra.mxu0 %v928
      %3361 = vmatpush.msra.mxu0 %v914
      %3362 = vmatmul.f32.gmra.mxu0 %v226
      %v3363 = vpop.f32.mrf.mxu0
      %v3364 = vadd.f32 %v3344, %v3363
      %3365 = vdwg.mxu0
      %3366 = vmatpush.msra.mxu0 %v1348
      %3367 = vmatpush.msra.mxu0 %v1334
      %3368 = vmatpush.msra.mxu0 %v1320
      %3369 = vmatpush.msra.mxu0 %v1306
      %3370 = vmatpush.msra.mxu0 %v1292
      %3371 = vmatpush.msra.mxu0 %v1278
      %3372 = vmatpush.msra.mxu0 %v1264
      %3373 = vmatpush.msra.mxu0 %v1250
      %3374 = vmatpush.msra.mxu0 %v1236
      %3375 = vmatpush.msra.mxu0 %v1222
      %3376 = vmatpush.msra.mxu0 %v1208
      %3377 = vmatpush.msra.mxu0 %v1194
      %3378 = vmatpush.msra.mxu0 %v1180
      %3379 = vmatpush.msra.mxu0 %v1166
      %3380 = vmatpush.msra.mxu0 %v1152
      %3381 = vmatpush.msra.mxu0 %v1138
      %3382 = vmatmul.f32.gmra.mxu0 %v227
      %v3383 = vpop.f32.mrf.mxu0
      %v3384 = vadd.f32 %v3364, %v3383
      %3385 = vdwg.mxu0
      %3386 = vmatpush.msra.mxu0 %v1572
      %3387 = vmatpush.msra.mxu0 %v1558
      %3388 = vmatpush.msra.mxu0 %v1544
      %3389 = vmatpush.msra.mxu0 %v1530
      %3390 = vmatpush.msra.mxu0 %v1516
      %3391 = vmatpush.msra.mxu0 %v1502
      %3392 = vmatpush.msra.mxu0 %v1488
      %3393 = vmatpush.msra.mxu0 %v1474
      %3394 = vmatpush.msra.mxu0 %v1460
      %3395 = vmatpush.msra.mxu0 %v1446
      %3396 = vmatpush.msra.mxu0 %v1432
      %3397 = vmatpush.msra.mxu0 %v1418
      %3398 = vmatpush.msra.mxu0 %v1404
      %3399 = vmatpush.msra.mxu0 %v1390
      %3400 = vmatpush.msra.mxu0 %v1376
      %3401 = vmatpush.msra.mxu0 %v1362
      %3402 = vmatmul.f32.gmra.mxu0 %v228
      %v3403 = vpop.f32.mrf.mxu0
      %v3404 = vadd.f32 %v3384, %v3403
      %3405 = vdwg.mxu0
      %3406 = vmatpush.msra.mxu0 0.0
      %3407 = vmatpush.msra.mxu0 0.0
      %3408 = vmatpush.msra.mxu0 0.0
      %3409 = vmatpush.msra.mxu0 0.0
      %3410 = vmatpush.msra.mxu0 0.0
      %3411 = vmatpush.msra.mxu0 0.0
      %3412 = vmatpush.msra.mxu0 0.0
      %3413 = vmatpush.msra.mxu0 0.0
      %3414 = vmatpush.msra.mxu0 0.0
      %3415 = vmatpush.msra.mxu0 0.0
      %3416 = vmatpush.msra.mxu0 0.0
      %3417 = vmatpush.msra.mxu0 0.0
      %3418 = vmatpush.msra.mxu0 0.0
      %3419 = vmatpush.msra.mxu0 0.0
      %3420 = vmatpush.msra.mxu0 %v1600
      %3421 = vmatpush.msra.mxu0 %v1586
      %3422 = vmatmul.f32.gmra.mxu0 %v1604
      %v3423 = vpop.f32.mrf.mxu0
      %v3424 = vadd.f32 %v3404, %v3423
      %3425 = vdwg.mxu0
      %3426 = vmatpush.msra.mxu0 %v453
      %3427 = vmatpush.msra.mxu0 %v439
      %3428 = vmatpush.msra.mxu0 %v425
      %3429 = vmatpush.msra.mxu0 %v411
      %3430 = vmatpush.msra.mxu0 %v397
      %3431 = vmatpush.msra.mxu0 %v383
      %3432 = vmatpush.msra.mxu0 %v369
      %3433 = vmatpush.msra.mxu0 %v355
      %3434 = vmatpush.msra.mxu0 %v341
      %3435 = vmatpush.msra.mxu0 %v327
      %3436 = vmatpush.msra.mxu0 %v313
      %3437 = vmatpush.msra.mxu0 %v299
      %3438 = vmatpush.msra.mxu0 %v285
      %3439 = vmatpush.msra.mxu0 %v271
      %3440 = vmatpush.msra.mxu0 %v257
      %3441 = vmatpush.msra.mxu0 %v243
      %3442 = vmatmul.f32.gmra.mxu0 %v223
      %v3443 = vpop.f32.mrf.mxu0
      %v3444 = vadd.f32 0.0, %v3443
      %3445 = vdwg.mxu0
      %3446 = vmatpush.msra.mxu0 %v677
      %3447 = vmatpush.msra.mxu0 %v663
      %3448 = vmatpush.msra.mxu0 %v649
      %3449 = vmatpush.msra.mxu0 %v635
      %3450 = vmatpush.msra.mxu0 %v621
      %3451 = vmatpush.msra.mxu0 %v607
      %3452 = vmatpush.msra.mxu0 %v593
      %3453 = vmatpush.msra.mxu0 %v579
      %3454 = vmatpush.msra.mxu0 %v565
      %3455 = vmatpush.msra.mxu0 %v551
      %3456 = vmatpush.msra.mxu0 %v537
      %3457 = vmatpush.msra.mxu0 %v523
      %3458 = vmatpush.msra.mxu0 %v509
      %3459 = vmatpush.msra.mxu0 %v495
      %3460 = vmatpush.msra.mxu0 %v481
      %3461 = vmatpush.msra.mxu0 %v467
      %3462 = vmatmul.f32.gmra.mxu0 %v224
      %v3463 = vpop.f32.mrf.mxu0
      %v3464 = vadd.f32 %v3444, %v3463
      %3465 = vdwg.mxu0
      %3466 = vmatpush.msra.mxu0 %v901
      %3467 = vmatpush.msra.mxu0 %v887
      %3468 = vmatpush.msra.mxu0 %v873
      %3469 = vmatpush.msra.mxu0 %v859
      %3470 = vmatpush.msra.mxu0 %v845
      %3471 = vmatpush.msra.mxu0 %v831
      %3472 = vmatpush.msra.mxu0 %v817
      %3473 = vmatpush.msra.mxu0 %v803
      %3474 = vmatpush.msra.mxu0 %v789
      %3475 = vmatpush.msra.mxu0 %v775
      %3476 = vmatpush.msra.mxu0 %v761
      %3477 = vmatpush.msra.mxu0 %v747
      %3478 = vmatpush.msra.mxu0 %v733
      %3479 = vmatpush.msra.mxu0 %v719
      %3480 = vmatpush.msra.mxu0 %v705
      %3481 = vmatpush.msra.mxu0 %v691
      %3482 = vmatmul.f32.gmra.mxu0 %v225
      %v3483 = vpop.f32.mrf.mxu0
      %v3484 = vadd.f32 %v3464, %v3483
      %3485 = vdwg.mxu0
      %3486 = vmatpush.msra.mxu0 %v1125
      %3487 = vmatpush.msra.mxu0 %v1111
      %3488 = vmatpush.msra.mxu0 %v1097
      %3489 = vmatpush.msra.mxu0 %v1083
      %3490 = vmatpush.msra.mxu0 %v1069
      %3491 = vmatpush.msra.mxu0 %v1055
      %3492 = vmatpush.msra.mxu0 %v1041
      %3493 = vmatpush.msra.mxu0 %v1027
      %3494 = vmatpush.msra.mxu0 %v1013
      %3495 = vmatpush.msra.mxu0 %v999
      %3496 = vmatpush.msra.mxu0 %v985
      %3497 = vmatpush.msra.mxu0 %v971
      %3498 = vmatpush.msra.mxu0 %v957
      %3499 = vmatpush.msra.mxu0 %v943
      %3500 = vmatpush.msra.mxu0 %v929
      %3501 = vmatpush.msra.mxu0 %v915
      %3502 = vmatmul.f32.gmra.mxu0 %v226
      %v3503 = vpop.f32.mrf.mxu0
      %v3504 = vadd.f32 %v3484, %v3503
      %3505 = vdwg.mxu0
      %3506 = vmatpush.msra.mxu0 %v1349
      %3507 = vmatpush.msra.mxu0 %v1335
      %3508 = vmatpush.msra.mxu0 %v1321
      %3509 = vmatpush.msra.mxu0 %v1307
      %3510 = vmatpush.msra.mxu0 %v1293
      %3511 = vmatpush.msra.mxu0 %v1279
      %3512 = vmatpush.msra.mxu0 %v1265
      %3513 = vmatpush.msra.mxu0 %v1251
      %3514 = vmatpush.msra.mxu0 %v1237
      %3515 = vmatpush.msra.mxu0 %v1223
      %3516 = vmatpush.msra.mxu0 %v1209
      %3517 = vmatpush.msra.mxu0 %v1195
      %3518 = vmatpush.msra.mxu0 %v1181
      %3519 = vmatpush.msra.mxu0 %v1167
      %3520 = vmatpush.msra.mxu0 %v1153
      %3521 = vmatpush.msra.mxu0 %v1139
      %3522 = vmatmul.f32.gmra.mxu0 %v227
      %v3523 = vpop.f32.mrf.mxu0
      %v3524 = vadd.f32 %v3504, %v3523
      %3525 = vdwg.mxu0
      %3526 = vmatpush.msra.mxu0 %v1573
      %3527 = vmatpush.msra.mxu0 %v1559
      %3528 = vmatpush.msra.mxu0 %v1545
      %3529 = vmatpush.msra.mxu0 %v1531
      %3530 = vmatpush.msra.mxu0 %v1517
      %3531 = vmatpush.msra.mxu0 %v1503
      %3532 = vmatpush.msra.mxu0 %v1489
      %3533 = vmatpush.msra.mxu0 %v1475
      %3534 = vmatpush.msra.mxu0 %v1461
      %3535 = vmatpush.msra.mxu0 %v1447
      %3536 = vmatpush.msra.mxu0 %v1433
      %3537 = vmatpush.msra.mxu0 %v1419
      %3538 = vmatpush.msra.mxu0 %v1405
      %3539 = vmatpush.msra.mxu0 %v1391
      %3540 = vmatpush.msra.mxu0 %v1377
      %3541 = vmatpush.msra.mxu0 %v1363
      %3542 = vmatmul.f32.gmra.mxu0 %v228
      %v3543 = vpop.f32.mrf.mxu0
      %v3544 = vadd.f32 %v3524, %v3543
      %3545 = vdwg.mxu0
      %3546 = vmatpush.msra.mxu0 0.0
      %3547 = vmatpush.msra.mxu0 0.0
      %3548 = vmatpush.msra.mxu0 0.0
      %3549 = vmatpush.msra.mxu0 0.0
      %3550 = vmatpush.msra.mxu0 0.0
      %3551 = vmatpush.msra.mxu0 0.0
      %3552 = vmatpush.msra.mxu0 0.0
      %3553 = vmatpush.msra.mxu0 0.0
      %3554 = vmatpush.msra.mxu0 0.0
      %3555 = vmatpush.msra.mxu0 0.0
      %3556 = vmatpush.msra.mxu0 0.0
      %3557 = vmatpush.msra.mxu0 0.0
      %3558 = vmatpush.msra.mxu0 0.0
      %3559 = vmatpush.msra.mxu0 0.0
      %3560 = vmatpush.msra.mxu0 %v1601
      %3561 = vmatpush.msra.mxu0 %v1587
      %3562 = vmatmul.f32.gmra.mxu0 %v1604
      %v3563 = vpop.f32.mrf.mxu0
      %v3564 = vadd.f32 %v3544, %v3563
      %3565 = vdwg.mxu0
      %3568 = vrot.lane.b32.xlu0 %v1884, 64
      %v3569 = vpop.permute.xlu0 %3568
      %3570 = vrot.lane.b32.xlu0 %v2024, 64
      %v3571 = vpop.permute.xlu0 %3570
      %vm3572 = vcmask 523264
      %v3573 = vsel %vm3572, %v3569, %v3571
      %v3576 = vmax.f32 %v1744, %v3573
      %v3577 = vmax.f32 %v1884, %v3571
      %v3578 = vmax.f32 %v3576, %v2164
      %v3579 = vmax.f32 %v3577, %v2304
      %3582 = vrot.lane.b32.xlu0 %v2304, 64
      %v3583 = vpop.permute.xlu0 %3582
      %3584 = vrot.lane.b32.xlu0 %v2444, 64
      %v3585 = vpop.permute.xlu0 %3584
      %v3586 = vsel %vm3572, %v3583, %v3585
      %v3589 = vmax.f32 %v3578, %v3586
      %v3590 = vmax.f32 %v3579, %v3585
      %v3591 = vmax.f32 %v3589, %v2584
      %v3592 = vmax.f32 %v3590, %v2724
      %3595 = vrot.lane.b32.xlu0 %v2724, 64
      %v3596 = vpop.permute.xlu0 %3595
      %3597 = vrot.lane.b32.xlu0 %v2864, 64
      %v3598 = vpop.permute.xlu0 %3597
      %v3599 = vsel %vm3572, %v3596, %v3598
      %v3602 = vmax.f32 %v3591, %v3599
      %v3603 = vmax.f32 %v3592, %v3598
      %v3604 = vmax.f32 %v3602, %v3004
      %v3605 = vmax.f32 %v3603, %v3144
      %3608 = vrot.lane.b32.xlu0 %v3144, 64
      %v3609 = vpop.permute.xlu0 %3608
      %3610 = vrot.lane.b32.xlu0 %v3284, 64
      %v3611 = vpop.permute.xlu0 %3610
      %v3612 = vsel %vm3572, %v3609, %v3611
      %v3615 = vmax.f32 %v3604, %v3612
      %v3616 = vmax.f32 %v3605, %v3611
      %v3617 = vmax.f32 %v3615, %v3424
      %v3618 = vmax.f32 %v3616, %v3564
      %v3619 = vld [vmem:[%s2] sm:$0x3]
      %v3621 = vperm.slane %v3619, 0
      %v3622 = vperm.slane %v3619, 1
      %v3625 = vadd.f32 %v3617, %v3621
      %v3626 = vadd.f32 %v3618, %v3622
      %v3627 = vmax.f32 %v3625, 0.0
      %v3628 = vmax.f32 %v3626, 0.0
      %v3629 = vld [vmem:[%s3] sm:$0xff]
      %v3630 = vld [vmem:[%s3 + $0x8] sm:$0xff]
      %v3631 = vld [vmem:[%s3 + $0x10] sm:$0xff]
      %v3632 = vld [vmem:[%s3 + $0x18] sm:$0xff]
      %v3633 = vld [vmem:[%s3 + $0x20] sm:$0xff]
      %v3634 = vld [vmem:[%s3 + $0x28] sm:$0xff]
      %v3635 = vld [vmem:[%s3 + $0x30] sm:$0xff]
      %v3636 = vld [vmem:[%s3 + $0x38] sm:$0xff]
      %v3637 = vld [vmem:[%s3 + $0x40] sm:$0xff]
      %v3638 = vld [vmem:[%s3 + $0x48] sm:$0xff]
      %v3639 = vld [vmem:[%s3 + $0x50] sm:$0xff]
      %v3640 = vld [vmem:[%s3 + $0x58] sm:$0xff]
      %v3641 = vld [vmem:[%s3 + $0x60] sm:$0xff]
      %v3642 = vld [vmem:[%s3 + $0x68] sm:$0xff]
      %v3643 = vld [vmem:[%s3 + $0x70] sm:$0xff]
      %v3644 = vld [vmem:[%s3 + $0x78] sm:$0xff]
      %v3645 = vld [vmem:[%s3 + $0x80] sm:$0xff]
      %v3646 = vld [vmem:[%s3 + $0x88] sm:$0xff]
      %v3647 = vld [vmem:[%s3 + $0x90] sm:$0xff]
      %v3648 = vld [vmem:[%s3 + $0x98] sm:$0xff]
      %v3649 = vld [vmem:[%s3 + $0xa0] sm:$0xff]
      %v3650 = vld [vmem:[%s3 + $0xa8] sm:$0xff]
      %v3651 = vld [vmem:[%s3 + $0xb0] sm:$0xff]
      %v3652 = vld [vmem:[%s3 + $0xb8] sm:$0xff]
      %v3653 = vld [vmem:[%s4] sm:$0x1]
      %v3655 = vperm.slane %v3653, 0
      %v3658 = vsel %vm3572, %v3628, 0
      %3660 = vmatpush.msra.mxu0 %v3644
      %3661 = vmatpush.msra.mxu0 %v3643
      %3662 = vmatpush.msra.mxu0 %v3642
      %3663 = vmatpush.msra.mxu0 %v3641
      %3664 = vmatpush.msra.mxu0 %v3640
      %3665 = vmatpush.msra.mxu0 %v3639
      %3666 = vmatpush.msra.mxu0 %v3638
      %3667 = vmatpush.msra.mxu0 %v3637
      %3668 = vmatpush.msra.mxu0 %v3636
      %3669 = vmatpush.msra.mxu0 %v3635
      %3670 = vmatpush.msra.mxu0 %v3634
      %3671 = vmatpush.msra.mxu0 %v3633
      %3672 = vmatpush.msra.mxu0 %v3632
      %3673 = vmatpush.msra.mxu0 %v3631
      %3674 = vmatpush.msra.mxu0 %v3630
      %3675 = vmatpush.msra.mxu0 %v3629
      %3676 = vmatmul.f32.gmra.mxu0 %v3627
      %v3677 = vpop.f32.mrf.mxu0
      %v3678 = vadd.f32 %v3655, %v3677
      %3679 = vdwg.mxu0
      %3680 = vmatpush.msra.mxu0 0.0
      %3681 = vmatpush.msra.mxu0 0.0
      %3682 = vmatpush.msra.mxu0 0.0
      %3683 = vmatpush.msra.mxu0 0.0
      %3684 = vmatpush.msra.mxu0 0.0
      %3685 = vmatpush.msra.mxu0 0.0
      %3686 = vmatpush.msra.mxu0 0.0
      %3687 = vmatpush.msra.mxu0 0.0
      %3688 = vmatpush.msra.mxu0 %v3652
      %3689 = vmatpush.msra.mxu0 %v3651
      %3690 = vmatpush.msra.mxu0 %v3650
      %3691 = vmatpush.msra.mxu0 %v3649
      %3692 = vmatpush.msra.mxu0 %v3648
      %3693 = vmatpush.msra.mxu0 %v3647
      %3694 = vmatpush.msra.mxu0 %v3646
      %3695 = vmatpush.msra.mxu0 %v3645
      %3696 = vmatmul.f32.gmra.mxu0 %v3658
      %v3697 = vpop.f32.mrf.mxu0
      %v3698 = vadd.f32 %v3678, %v3697
      %3699 = vdwg.mxu0
      %vm3700 = vcmask 80896
      %v3701 = vsel %vm3700, %v3698, -inf
      %3702 = vmax.xlane.f32.xlu0 %v3701
      %v3703 = vpop.xlane.xlu0 %3702
      %v3704 = vsub.f32 %v3698, %v3703
      %v3705 = vmul.f32 %v3704, 1.442695
      %v3706 = vpow.pop %v3705
      %v3707 = vsel %vm3700, %v3706, 0.0
      %3708 = vadd.xlane.f32.xlu0 %v3707
      %v3709 = vpop.xlane.xlu0 %3708
      %v3710 = vlog2.pop %v3709
      %v3711 = vmul.f32 %v3710, 0.6931472
      %v3712 = vsub.f32 %v3704, %v3711
      %3713 = vst.msk [vmem:[%s222] sm:$0xff] %vm3700, %v3712
      %p3714 = scmp.lt.s32.totalorder %s16, 1
      %s3715 = scalar_select %p3714, %s16, 1
      %s3716 = smul.addr %s3715, 8
      %s3717 = scalar_lea.vmem %s5, %s3716
      // Predicated region
      $region41: #{convnet_forward.1} parent=39 // pred_check
        %p3718 = pneg %p144
      $region42: #{convnet_forward.1} parent=39 // pred_check_branch
        %3720 = sbr.rel (%p3718) target = $region44
      $region43: #{convnet_forward.1} parent=39 // pred_region
        _
      $region44: #{convnet_forward.1} parent=39 // pred_fallthru
        _
    $region40: #{convnet_forward.1} parent=5 // pred_fallthru
      _
    %p3721 = scmp.le.s32.totalorder 2, %s11
    // Predicated region
    $region45: #{convnet_forward.1} parent=5 // pred_check
      %p3722 = pneg %p3721
    $region46: #{convnet_forward.1} parent=5 // pred_check_branch
      %3724 = sbr.rel (%p3722) target = $region48
    $region47: #{convnet_forward.1} parent=5 // pred_region
      %s3725 = ssub.s32 %s11, 2
      // Predicated region
      $region49: #{convnet_forward.1} parent=47 // pred_check
        %p3726 = pneg %p150
      $region50: #{convnet_forward.1} parent=47 // pred_check_branch
        %3728 = sbr.rel (%p3726) target = $region52
      $region51: #{convnet_forward.1} parent=47 // pred_region
        %p3729 = scmp.lt.s32.totalorder %s17, 1
        %s3730 = scalar_select %p3729, %s17, 1
        %s3731 = smul.addr %s3730, 8
        %s3732 = scalar_lea.vmem %s5, %s3731
      $region52: #{convnet_forward.1} parent=47 // pred_fallthru
        _
    $region48: #{convnet_forward.1} parent=5 // pred_fallthru
      _
  $region6: #{convnet_forward.1} parent=0 // loop_footer
    %s15 = sadd.s32 1, %s11
  $region7: #{convnet_forward.1} parent=0 // loop_footer_branch
    %10 = sbr.rel target = $region3
  $region8: #{convnet_forward.1} parent=0 // loop_exit
    _

</llo_original>
